<compile_context>
chip_gen: v5e
topology: v5e:2x2
jax: 0.10.0
libtpu: 0.0.40
codegen_flags: <defaults>
</compile_context>

<pallas_src>
import functools
import math

import numpy as np
import jax
import jax.numpy as jnp
from jax.experimental import pallas as pl
from jax.experimental.pallas import tpu as pltpu

BN_EPS = 1e-5  # PyTorch BatchNorm2d default eps


# --------------------------------------------------------------------------- #
# Static helpers mirroring the PyTorch module's __init__ arithmetic
# --------------------------------------------------------------------------- #
def get_kernel_num(C, gamma=2, b=1):
    t = math.log2(C) / gamma + b / gamma
    fl = math.floor(t)
    return fl + (1 - fl % 2)


def get_important_channel_num(C, lam=0.6):
    fl = math.floor(lam * C)
    return fl + fl % 2


# --------------------------------------------------------------------------- #
# Pallas kernel: block_b images of shape (C, H*W) per grid step
# --------------------------------------------------------------------------- #
def res_ham_kernel(params_ref, cc_ref, xmask_ref, x_ref, o_ref, pad_ref,
                   *, C_im, C_sub, H, W, pad_lead, use_roll):
    HW = H * W
    Bt = x_ref.shape[0]
    x = x_ref[...].astype(jnp.float32)                      # (Bt, C, HW)

    # ---- scalar parameters (SMEM), read once ----
    alpha = params_ref[0]
    beta = params_ref[1]
    cbias = params_ref[2]
    wa = [params_ref[3 + t] for t in range(49)]              # 7x7 taps, avg input channel
    wm = [params_ref[52 + t] for t in range(49)]             # 7x7 taps, max input channel

    # ---- small host-precomputed (C, C) constants (no per-step iota rebuilds) ----
    band = cc_ref[0]          # band[src, dst] = conv1d weight coupling src -> dst
    eye = cc_ref[1]           # identity (row -> column layout conversion)
    tri = cc_ref[2]           # tri[i, j] = 1.0 iff j < i (topk tie-break)

    # ================= ChannelAttention =================
    avg = jnp.mean(x, axis=2, keepdims=True)                 # AdaptiveAvgPool2d(1): (Bt,C,1)
    mx = jnp.max(x, axis=2, keepdims=True)                   # AdaptiveMaxPool2d(1): (Bt,C,1)
    f_add = 0.5 * (avg + mx) + alpha * avg + beta * mx       # (Bt, C, 1)

    # Conv1d over the channel axis as a precomputed band-matrix contraction.
    m_row = jax.nn.sigmoid(
        cbias + jnp.sum(band[None, :, :] * f_add, axis=1, keepdims=True))   # (Bt,1,C)
    # row -> column layout (m_col[b, c, 0] == m_row[b, 0, c])
    m_col = jnp.sum(eye[None, :, :] * m_row, axis=2, keepdims=True)         # (Bt,C,1)

    # ---- top-C_im ranking (torch.topk + scatter); gt[b,i,j]=1 iff ch j ranked ahead of i
    gt = jnp.where(m_row > m_col, 1.0,
                   jnp.where(m_row == m_col, tri[None, :, :], 0.0))         # (Bt,C,C)
    rank_col = jnp.sum(gt, axis=2, keepdims=True)            # (Bt,C,1) rank of channel i
    beat_row = jnp.sum(gt, axis=1, keepdims=True)            # (Bt,1,C) #channels j beats
    imp_col = (rank_col < C_im).astype(jnp.float32)          # (Bt,C,1) important mask
    imp_row = (beat_row >= C_sub).astype(jnp.float32)        # (Bt,1,C) same mask, row layout

    coef_im = imp_col * m_col                                # per-channel scale of F1 path
    coef_sub = m_col - coef_im                               # per-channel scale of F2 path

    # ================= SpatialAttention: pooled maps =================
    # Average pools on the MXU: rows [im_avg, sub_avg] = W2 @ x (contraction over channels).
    w2 = jnp.concatenate([imp_row * m_row * (1.0 / C_im),
                          (1.0 - imp_row) * m_row * (1.0 / C_sub)], axis=1)  # (Bt,2,C)
    avg_maps = jnp.einsum("bkc,bcp->bkp", w2, x,
                          preferred_element_type=jnp.float32,
                          precision=jax.lax.Precision.HIGHEST)               # (Bt,2,HW)
    # Max pools on the XLU (transient slabs, dead before the conv loop).
    im_max = jnp.max(coef_im * x, axis=1, keepdims=True)      # (Bt,1,HW)
    sub_max = jnp.max(coef_sub * x, axis=1, keepdims=True)    # (Bt,1,HW)
    stack4 = jnp.concatenate([avg_maps, im_max, sub_max], axis=1)            # (Bt,4,HW)

    # ========== 7x7 / pad-3 conv (shared weights, two 2-channel inputs) ==========
    # One merged zero-padded scratch, rows [im_avg, sub_avg, im_max, sub_max].
    L = pad_ref.shape[2]
    trail = L - (pad_lead + HW)
    pad_ref[:, :, 0:pad_lead] = jnp.zeros((Bt, 4, pad_lead), jnp.float32)    # pad strips only
    pad_ref[:, :, pad_lead + HW:L] = jnp.zeros((Bt, 4, trail), jnp.float32)
    pad_ref[:, :, pad_lead:pad_lead + HW] = stack4

    # per-tap sublane weight vector [wa, wa, wm, wm]
    avg_sel = (jax.lax.broadcasted_iota(jnp.int32, (1, 4, 1), 1) < 2).astype(jnp.float32)
    # lane masks for row-boundary wrap of the dx shifts (host precomputed, exact ints)
    xm_rows = {kx: xmask_ref[kx][None, :, :] for kx in range(7) if kx != 3}  # (1,1,HW) each

    acc4 = jnp.zeros((Bt, 4, HW), jnp.float32)
    for ky in range(7):
        dy = ky - 3
        base = pad_lead + dy * W
        if use_roll:
            row_win = pad_ref[:, :, base:base + HW]           # one (Bt,4,HW) load per dy
        for kx in range(7):
            dx = kx - 3
            t = ky * 7 + kx
            wvec = wm[t] + (wa[t] - wm[t]) * avg_sel          # (1,4,1): [wa,wa,wm,wm]
            if use_roll:
                shifted = row_win if dx == 0 else pltpu.roll(row_win, (-dx) % HW, 2)
            else:
                shifted = pad_ref[:, :, base + dx:base + dx + HW]
            tap = shifted * wvec
            if dx != 0:
                tap = tap * xm_rows[kx]
            acc4 = acc4 + tap

    # Combine avg/max halves, BatchNorm2d(1) (fresh-init inference stats), ReLU, Sigmoid.
    # TODO(synk): trained / batch-statistic BatchNorm is not modeled (running_mean=0,
    # running_var=1, weight=1, bias=0 are assumed).
    conv_both = acc4[:, 0:2, :] + acc4[:, 2:4, :]             # (Bt,2,HW): rows [im, sub]
    act = jax.nn.sigmoid(jnp.maximum(conv_both * (1.0 / math.sqrt(1.0 + BN_EPS)), 0.0))
    a1 = act[:, 0:1, :]                                       # A_S1 (Bt,1,HW)
    a2 = act[:, 1:2, :]                                       # A_S2 (Bt,1,HW)

    # ============ fused final combine:  relu(F1 + F2 + residual) ============
    out = jnp.maximum(x * (1.0 + coef_im * a1 + coef_sub * a2), 0.0)
    o_ref[...] = out.astype(o_ref.dtype)


# --------------------------------------------------------------------------- #
# batch-tile sizing
# --------------------------------------------------------------------------- #
def _pick_block_b(B, C, HW, L, budget_bytes=10 << 20):
    """Largest batch tile that keeps the per-step VMEM footprint under `budget_bytes`
    while leaving >= 2 grid steps (pipelining + megacore), preferring an even step count."""
    per_img = 4 * (4 * C * HW        # double-buffered input + output pipeline tiles
                   + 3 * C * HW      # in-register / spilled working slabs
                   + 4 * L           # merged zero-padded conv scratch
                   + 12 * HW)        # acc4 / pooled maps / attention maps / masks
    cand = []
    for d in range(1, B + 1):
        if B % d:
            continue
        steps = B // d
        if d * per_img > budget_bytes:
            continue
        if B >= 2 and steps < 2:
            continue
        cand.append(d)
    if not cand:
        return 1, per_img
    even = [d for d in cand if (B // d) % 2 == 0]
    return (max(even) if even else max(cand)), per_img


# --------------------------------------------------------------------------- #
# Wrapper: host-side constant prep + pallas_call
# --------------------------------------------------------------------------- #
def res_ham_forward(x, alpha, beta, w1d, b1d, w2d, *, C_im, block_b=None):
    B, C, H, W = x.shape
    HW = H * W
    K = int(w1d.shape[-1])
    C_sub = C - C_im
    if not (0 < C_im < C):
        raise ValueError(f"C_im={C_im} must lie strictly between 0 and C={C}")

    # ---- host-precomputed (C, C) constants ----
    src = np.arange(C)[:, None]
    dst = np.arange(C)[None, :]
    w1d_flat = jnp.reshape(jnp.asarray(w1d, jnp.float32), (-1,))
    band = jnp.zeros((C, C), jnp.float32)
    for j in range(K):
        sel = jnp.asarray(((src - dst) == (j - K // 2)).astype(np.float32))
        band = band + w1d_flat[j] * sel
    eye = jnp.asarray(np.eye(C, dtype=np.float32))
    tri = jnp.asarray((dst < src).astype(np.float32))        # tri[i, j] = 1 iff j < i
    cc_mats = jnp.stack([band, eye, tri], axis=0)            # (3, C, C)

    # exact integer lane masks for the 7 horizontal conv offsets
    xpos = np.arange(HW, dtype=np.int64) % W
    xmask = np.stack(
        [((xpos + (kx - 3) >= 0) & (xpos + (kx - 3) < W)).astype(np.float32)
         for kx in range(7)], axis=0).reshape(7, 1, HW)
    xmask = jnp.asarray(xmask)

    # scalar parameter vector: [alpha, beta, conv1d bias, 49 avg-channel taps, 49 max taps]
    w2d_f = jnp.asarray(w2d, jnp.float32)
    params = jnp.concatenate([
        jnp.reshape(jnp.asarray(alpha, jnp.float32), (1,)),
        jnp.reshape(jnp.asarray(beta, jnp.float32), (1,)),
        jnp.reshape(jnp.asarray(b1d, jnp.float32), (-1,)),
        jnp.reshape(w2d_f[0, 0], (-1,)),
        jnp.reshape(w2d_f[0, 1], (-1,)),
    ])                                                        # (101,)

    need_pad = 3 * W + 3
    pad_lead = ((need_pad + 127) // 128) * 128                # lane-aligned interior store
    L = pad_lead + HW + need_pad

    auto_b, per_img = _pick_block_b(B, C, HW, L)
    if block_b is None:
        block_b = auto_b
    if B % block_b != 0:
        raise ValueError("block_b must divide the batch size")
    vmem_limit = int(min(max(2 * block_b * per_img + (2 << 20), 16 << 20), 32 << 20))

    xr = x.reshape(B, C, HW)
    kern = functools.partial(res_ham_kernel, C_im=C_im, C_sub=C_sub, H=H, W=W,
                             pad_lead=pad_lead, use_roll=(HW % 128 == 0))
    out = pl.pallas_call(
        kern,
        out_shape=jax.ShapeDtypeStruct((B, C, HW), x.dtype),
        grid_spec=pltpu.PrefetchScalarGridSpec(
            num_scalar_prefetch=0,
            grid=(B // block_b,),
            in_specs=[
                pl.BlockSpec(memory_space=pltpu.MemorySpace.SMEM),      # scalar params
                pl.BlockSpec((3, C, C), lambda b: (0, 0, 0)),           # band / eye / tri
                pl.BlockSpec((7, 1, HW), lambda b: (0, 0, 0)),          # dx lane masks
                pl.BlockSpec((block_b, C, HW), lambda b: (b, 0, 0)),    # x tile
            ],
            out_specs=pl.BlockSpec((block_b, C, HW), lambda b: (b, 0, 0)),
            scratch_shapes=[
                pltpu.VMEM((block_b, 4, L), jnp.float32),   # merged zero-padded pooled maps
            ],
        ),
        compiler_params=pltpu.CompilerParams(
            dimension_semantics=("parallel",),
            vmem_limit_bytes=vmem_limit),
    )(params, cc_mats, xmask, xr)
    return out.reshape(B, C, H, W)


# --------------------------------------------------------------------------- #
# Pure-JAX reference for verification
# --------------------------------------------------------------------------- #
def res_ham_reference(x, alpha, beta, w1d, b1d, w2d, C_im):
    B, C, H, W = x.shape
    K = w1d.shape[2]
    avg = jnp.mean(x, axis=(2, 3), keepdims=True)
    mx = jnp.max(x, axis=(2, 3), keepdims=True)
    f_add = 0.5 * (avg + mx) + alpha * avg + beta * mx
    seq = f_add[:, :, 0, 0][:, None, :]                       # (B,1,C)
    conv1 = jax.lax.conv_general_dilated(
        seq, w1d, (1,), [(K // 2, K // 2)],
        dimension_numbers=("NCH", "OIH", "NCH"),
        precision=jax.lax.Precision.HIGHEST) + b1d[None, :, None]
    m = jax.nn.sigmoid(conv1)                                 # (B,1,C)
    m4 = jnp.transpose(m, (0, 2, 1))[:, :, :, None]           # (B,C,1,1)
    refined = m4 * x

    mflat = m4[:, :, 0, 0]
    _, idx = jax.lax.top_k(mflat, C_im)
    imp = jnp.zeros((B, C), x.dtype).at[jnp.arange(B)[:, None], idx].set(1.0)
    sub = 1.0 - imp
    imp4 = imp[:, :, None, None]
    sub4 = sub[:, :, None, None]
    im_feat = imp4 * refined
    sub_feat = sub4 * refined

    im_avg = jnp.mean(im_feat, axis=1, keepdims=True) * (C / C_im)
    im_max = jnp.max(im_feat, axis=1, keepdims=True)
    sub_avg = jnp.mean(sub_feat, axis=1, keepdims=True) * (C / (C - C_im))
    sub_max = jnp.max(sub_feat, axis=1, keepdims=True)
    im_x = jnp.concatenate([im_avg, im_max], axis=1)
    sub_x = jnp.concatenate([sub_avg, sub_max], axis=1)

    def conv_bn_act(z):
        c = jax.lax.conv_general_dilated(
            z, w2d, (1, 1), [(3, 3), (3, 3)],
            dimension_numbers=("NCHW", "OIHW", "NCHW"),
            precision=jax.lax.Precision.HIGHEST)
        bn = c / jnp.sqrt(1.0 + BN_EPS)
        return jax.nn.sigmoid(jnp.maximum(bn, 0.0))

    a1 = conv_bn_act(im_x)
    a2 = conv_bn_act(sub_x)
    return jnp.maximum(im_feat * a1 + sub_feat * a2 + x, 0.0)


# --------------------------------------------------------------------------- #
if __name__ == "__main__":
    B, C, H, W = 2, 8, 16, 16
    K = get_kernel_num(C)                        # 3 for C=8
    C_im = get_important_channel_num(C)          # 4 for C=8

    key = jax.random.PRNGKey(0)
    kxk, kw1, kb1, kw2 = jax.random.split(key, 4)
    x = jax.random.normal(kxk, (B, C, H, W), jnp.float32)

    # Deterministic parameter init (shapes from the module's __init__).
    alpha = 0.5
    beta = 0.5
    bound1 = 1.0 / math.sqrt(1 * K)
    w1d = jax.random.uniform(kw1, (1, 1, K), jnp.float32, -bound1, bound1)     # Conv1d weight
    b1d = jax.random.uniform(kb1, (1,), jnp.float32, -bound1, bound1)          # Conv1d bias
    bound2 = 1.0 / math.sqrt(2 * 7 * 7)
    w2d = jax.random.uniform(kw2, (1, 2, 7, 7), jnp.float32, -bound2, bound2)  # Conv2d weight

    out = res_ham_forward(x, alpha, beta, w1d, b1d, w2d, C_im=C_im)
    out = jax.block_until_ready(out)

    ref = jax.block_until_ready(res_ham_reference(x, alpha, beta, w1d, b1d, w2d, C_im))
    o_np = np.asarray(out)
    r_np = np.asarray(ref)
    if not np.allclose(o_np, r_np, atol=1e-3, rtol=1e-3):
        diff = float(np.max(np.abs(o_np - r_np)))
        raise AssertionError(f"Pallas kernel mismatch vs reference, max abs diff = {diff:e}")

    print("KERNEL_OK")
</pallas_src>

<mosaic_0001>
module attributes {stable_mosaic.version = 11 : i64} {
  func.func @res_ham_kernel(%arg0: i32, %arg1: memref<101xf32, #tpu.memory_space<smem>>, %arg2: memref<3x8x8xf32, #tpu.memory_space<vmem>>, %arg3: memref<7x1x256xf32, #tpu.memory_space<vmem>>, %arg4: memref<1x8x256xf32, #tpu.memory_space<vmem>>, %arg5: memref<1x8x256xf32, #tpu.memory_space<vmem>>, %arg6: memref<1x4x435xf32, #tpu.memory_space<vmem>>) attributes {dimension_semantics = [#tpu.dimension_semantics<parallel>], iteration_bounds = array<i64: 2>, scalar_prefetch = 0 : i64, scratch_operands = 1 : i64, tpu.core_type = #tpu.core_type<tc>, window_params = [{transform_indices = @transform_0, window_bounds = array<i64: 101>}, {pipeline_mode = #tpu.pipeline_mode<synchronous>, transform_indices = @transform_1, window_bounds = array<i64: 3, 8, 8>}, {pipeline_mode = #tpu.pipeline_mode<synchronous>, transform_indices = @transform_2, window_bounds = array<i64: 7, 1, 256>}, {transform_indices = @transform_3, window_bounds = array<i64: 1, 8, 256>}, {transform_indices = @transform_4, window_bounds = array<i64: 1, 8, 256>}]} {
    %c0 = arith.constant 0 : index
    %c0_0 = arith.constant 0 : index
    %c0_1 = arith.constant 0 : index
    %0 = vector.load %arg4[%c0, %c0_0, %c0_1] : memref<1x8x256xf32, #tpu.memory_space<vmem>>, vector<1x8x256xf32>
    %c0_2 = arith.constant 0 : index
    %1 = memref.load %arg1[%c0_2] : memref<101xf32, #tpu.memory_space<smem>>
    %c1 = arith.constant 1 : index
    %2 = memref.load %arg1[%c1] : memref<101xf32, #tpu.memory_space<smem>>
    %c2 = arith.constant 2 : index
    %3 = memref.load %arg1[%c2] : memref<101xf32, #tpu.memory_space<smem>>
    %c3 = arith.constant 3 : index
    %4 = memref.load %arg1[%c3] : memref<101xf32, #tpu.memory_space<smem>>
    %c4 = arith.constant 4 : index
    %5 = memref.load %arg1[%c4] : memref<101xf32, #tpu.memory_space<smem>>
    %c5 = arith.constant 5 : index
    %6 = memref.load %arg1[%c5] : memref<101xf32, #tpu.memory_space<smem>>
    %c6 = arith.constant 6 : index
    %7 = memref.load %arg1[%c6] : memref<101xf32, #tpu.memory_space<smem>>
    %c7 = arith.constant 7 : index
    %8 = memref.load %arg1[%c7] : memref<101xf32, #tpu.memory_space<smem>>
    %c8 = arith.constant 8 : index
    %9 = memref.load %arg1[%c8] : memref<101xf32, #tpu.memory_space<smem>>
    %c9 = arith.constant 9 : index
    %10 = memref.load %arg1[%c9] : memref<101xf32, #tpu.memory_space<smem>>
    %c10 = arith.constant 10 : index
    %11 = memref.load %arg1[%c10] : memref<101xf32, #tpu.memory_space<smem>>
    %c11 = arith.constant 11 : index
    %12 = memref.load %arg1[%c11] : memref<101xf32, #tpu.memory_space<smem>>
    %c12 = arith.constant 12 : index
    %13 = memref.load %arg1[%c12] : memref<101xf32, #tpu.memory_space<smem>>
    %c13 = arith.constant 13 : index
    %14 = memref.load %arg1[%c13] : memref<101xf32, #tpu.memory_space<smem>>
    %c14 = arith.constant 14 : index
    %15 = memref.load %arg1[%c14] : memref<101xf32, #tpu.memory_space<smem>>
    %c15 = arith.constant 15 : index
    %16 = memref.load %arg1[%c15] : memref<101xf32, #tpu.memory_space<smem>>
    %c16 = arith.constant 16 : index
    %17 = memref.load %arg1[%c16] : memref<101xf32, #tpu.memory_space<smem>>
    %c17 = arith.constant 17 : index
    %18 = memref.load %arg1[%c17] : memref<101xf32, #tpu.memory_space<smem>>
    %c18 = arith.constant 18 : index
    %19 = memref.load %arg1[%c18] : memref<101xf32, #tpu.memory_space<smem>>
    %c19 = arith.constant 19 : index
    %20 = memref.load %arg1[%c19] : memref<101xf32, #tpu.memory_space<smem>>
    %c20 = arith.constant 20 : index
    %21 = memref.load %arg1[%c20] : memref<101xf32, #tpu.memory_space<smem>>
    %c21 = arith.constant 21 : index
    %22 = memref.load %arg1[%c21] : memref<101xf32, #tpu.memory_space<smem>>
    %c22 = arith.constant 22 : index
    %23 = memref.load %arg1[%c22] : memref<101xf32, #tpu.memory_space<smem>>
    %c23 = arith.constant 23 : index
    %24 = memref.load %arg1[%c23] : memref<101xf32, #tpu.memory_space<smem>>
    %c24 = arith.constant 24 : index
    %25 = memref.load %arg1[%c24] : memref<101xf32, #tpu.memory_space<smem>>
    %c25 = arith.constant 25 : index
    %26 = memref.load %arg1[%c25] : memref<101xf32, #tpu.memory_space<smem>>
    %c26 = arith.constant 26 : index
    %27 = memref.load %arg1[%c26] : memref<101xf32, #tpu.memory_space<smem>>
    %c27 = arith.constant 27 : index
    %28 = memref.load %arg1[%c27] : memref<101xf32, #tpu.memory_space<smem>>
    %c28 = arith.constant 28 : index
    %29 = memref.load %arg1[%c28] : memref<101xf32, #tpu.memory_space<smem>>
    %c29 = arith.constant 29 : index
    %30 = memref.load %arg1[%c29] : memref<101xf32, #tpu.memory_space<smem>>
    %c30 = arith.constant 30 : index
    %31 = memref.load %arg1[%c30] : memref<101xf32, #tpu.memory_space<smem>>
    %c31 = arith.constant 31 : index
    %32 = memref.load %arg1[%c31] : memref<101xf32, #tpu.memory_space<smem>>
    %c32 = arith.constant 32 : index
    %33 = memref.load %arg1[%c32] : memref<101xf32, #tpu.memory_space<smem>>
    %c33 = arith.constant 33 : index
    %34 = memref.load %arg1[%c33] : memref<101xf32, #tpu.memory_space<smem>>
    %c34 = arith.constant 34 : index
    %35 = memref.load %arg1[%c34] : memref<101xf32, #tpu.memory_space<smem>>
    %c35 = arith.constant 35 : index
    %36 = memref.load %arg1[%c35] : memref<101xf32, #tpu.memory_space<smem>>
    %c36 = arith.constant 36 : index
    %37 = memref.load %arg1[%c36] : memref<101xf32, #tpu.memory_space<smem>>
    %c37 = arith.constant 37 : index
    %38 = memref.load %arg1[%c37] : memref<101xf32, #tpu.memory_space<smem>>
    %c38 = arith.constant 38 : index
    %39 = memref.load %arg1[%c38] : memref<101xf32, #tpu.memory_space<smem>>
    %c39 = arith.constant 39 : index
    %40 = memref.load %arg1[%c39] : memref<101xf32, #tpu.memory_space<smem>>
    %c40 = arith.constant 40 : index
    %41 = memref.load %arg1[%c40] : memref<101xf32, #tpu.memory_space<smem>>
    %c41 = arith.constant 41 : index
    %42 = memref.load %arg1[%c41] : memref<101xf32, #tpu.memory_space<smem>>
    %c42 = arith.constant 42 : index
    %43 = memref.load %arg1[%c42] : memref<101xf32, #tpu.memory_space<smem>>
    %c43 = arith.constant 43 : index
    %44 = memref.load %arg1[%c43] : memref<101xf32, #tpu.memory_space<smem>>
    %c44 = arith.constant 44 : index
    %45 = memref.load %arg1[%c44] : memref<101xf32, #tpu.memory_space<smem>>
    %c45 = arith.constant 45 : index
    %46 = memref.load %arg1[%c45] : memref<101xf32, #tpu.memory_space<smem>>
    %c46 = arith.constant 46 : index
    %47 = memref.load %arg1[%c46] : memref<101xf32, #tpu.memory_space<smem>>
    %c47 = arith.constant 47 : index
    %48 = memref.load %arg1[%c47] : memref<101xf32, #tpu.memory_space<smem>>
    %c48 = arith.constant 48 : index
    %49 = memref.load %arg1[%c48] : memref<101xf32, #tpu.memory_space<smem>>
    %c49 = arith.constant 49 : index
    %50 = memref.load %arg1[%c49] : memref<101xf32, #tpu.memory_space<smem>>
    %c50 = arith.constant 50 : index
    %51 = memref.load %arg1[%c50] : memref<101xf32, #tpu.memory_space<smem>>
    %c51 = arith.constant 51 : index
    %52 = memref.load %arg1[%c51] : memref<101xf32, #tpu.memory_space<smem>>
    %c52 = arith.constant 52 : index
    %53 = memref.load %arg1[%c52] : memref<101xf32, #tpu.memory_space<smem>>
    %c53 = arith.constant 53 : index
    %54 = memref.load %arg1[%c53] : memref<101xf32, #tpu.memory_space<smem>>
    %c54 = arith.constant 54 : index
    %55 = memref.load %arg1[%c54] : memref<101xf32, #tpu.memory_space<smem>>
    %c55 = arith.constant 55 : index
    %56 = memref.load %arg1[%c55] : memref<101xf32, #tpu.memory_space<smem>>
    %c56 = arith.constant 56 : index
    %57 = memref.load %arg1[%c56] : memref<101xf32, #tpu.memory_space<smem>>
    %c57 = arith.constant 57 : index
    %58 = memref.load %arg1[%c57] : memref<101xf32, #tpu.memory_space<smem>>
    %c58 = arith.constant 58 : index
    %59 = memref.load %arg1[%c58] : memref<101xf32, #tpu.memory_space<smem>>
    %c59 = arith.constant 59 : index
    %60 = memref.load %arg1[%c59] : memref<101xf32, #tpu.memory_space<smem>>
    %c60 = arith.constant 60 : index
    %61 = memref.load %arg1[%c60] : memref<101xf32, #tpu.memory_space<smem>>
    %c61 = arith.constant 61 : index
    %62 = memref.load %arg1[%c61] : memref<101xf32, #tpu.memory_space<smem>>
    %c62 = arith.constant 62 : index
    %63 = memref.load %arg1[%c62] : memref<101xf32, #tpu.memory_space<smem>>
    %c63 = arith.constant 63 : index
    %64 = memref.load %arg1[%c63] : memref<101xf32, #tpu.memory_space<smem>>
    %c64 = arith.constant 64 : index
    %65 = memref.load %arg1[%c64] : memref<101xf32, #tpu.memory_space<smem>>
    %c65 = arith.constant 65 : index
    %66 = memref.load %arg1[%c65] : memref<101xf32, #tpu.memory_space<smem>>
    %c66 = arith.constant 66 : index
    %67 = memref.load %arg1[%c66] : memref<101xf32, #tpu.memory_space<smem>>
    %c67 = arith.constant 67 : index
    %68 = memref.load %arg1[%c67] : memref<101xf32, #tpu.memory_space<smem>>
    %c68 = arith.constant 68 : index
    %69 = memref.load %arg1[%c68] : memref<101xf32, #tpu.memory_space<smem>>
    %c69 = arith.constant 69 : index
    %70 = memref.load %arg1[%c69] : memref<101xf32, #tpu.memory_space<smem>>
    %c70 = arith.constant 70 : index
    %71 = memref.load %arg1[%c70] : memref<101xf32, #tpu.memory_space<smem>>
    %c71 = arith.constant 71 : index
    %72 = memref.load %arg1[%c71] : memref<101xf32, #tpu.memory_space<smem>>
    %c72 = arith.constant 72 : index
    %73 = memref.load %arg1[%c72] : memref<101xf32, #tpu.memory_space<smem>>
    %c73 = arith.constant 73 : index
    %74 = memref.load %arg1[%c73] : memref<101xf32, #tpu.memory_space<smem>>
    %c74 = arith.constant 74 : index
    %75 = memref.load %arg1[%c74] : memref<101xf32, #tpu.memory_space<smem>>
    %c75 = arith.constant 75 : index
    %76 = memref.load %arg1[%c75] : memref<101xf32, #tpu.memory_space<smem>>
    %c76 = arith.constant 76 : index
    %77 = memref.load %arg1[%c76] : memref<101xf32, #tpu.memory_space<smem>>
    %c77 = arith.constant 77 : index
    %78 = memref.load %arg1[%c77] : memref<101xf32, #tpu.memory_space<smem>>
    %c78 = arith.constant 78 : index
    %79 = memref.load %arg1[%c78] : memref<101xf32, #tpu.memory_space<smem>>
    %c79 = arith.constant 79 : index
    %80 = memref.load %arg1[%c79] : memref<101xf32, #tpu.memory_space<smem>>
    %c80 = arith.constant 80 : index
    %81 = memref.load %arg1[%c80] : memref<101xf32, #tpu.memory_space<smem>>
    %c81 = arith.constant 81 : index
    %82 = memref.load %arg1[%c81] : memref<101xf32, #tpu.memory_space<smem>>
    %c82 = arith.constant 82 : index
    %83 = memref.load %arg1[%c82] : memref<101xf32, #tpu.memory_space<smem>>
    %c83 = arith.constant 83 : index
    %84 = memref.load %arg1[%c83] : memref<101xf32, #tpu.memory_space<smem>>
    %c84 = arith.constant 84 : index
    %85 = memref.load %arg1[%c84] : memref<101xf32, #tpu.memory_space<smem>>
    %c85 = arith.constant 85 : index
    %86 = memref.load %arg1[%c85] : memref<101xf32, #tpu.memory_space<smem>>
    %c86 = arith.constant 86 : index
    %87 = memref.load %arg1[%c86] : memref<101xf32, #tpu.memory_space<smem>>
    %c87 = arith.constant 87 : index
    %88 = memref.load %arg1[%c87] : memref<101xf32, #tpu.memory_space<smem>>
    %c88 = arith.constant 88 : index
    %89 = memref.load %arg1[%c88] : memref<101xf32, #tpu.memory_space<smem>>
    %c89 = arith.constant 89 : index
    %90 = memref.load %arg1[%c89] : memref<101xf32, #tpu.memory_space<smem>>
    %c90 = arith.constant 90 : index
    %91 = memref.load %arg1[%c90] : memref<101xf32, #tpu.memory_space<smem>>
    %c91 = arith.constant 91 : index
    %92 = memref.load %arg1[%c91] : memref<101xf32, #tpu.memory_space<smem>>
    %c92 = arith.constant 92 : index
    %93 = memref.load %arg1[%c92] : memref<101xf32, #tpu.memory_space<smem>>
    %c93 = arith.constant 93 : index
    %94 = memref.load %arg1[%c93] : memref<101xf32, #tpu.memory_space<smem>>
    %c94 = arith.constant 94 : index
    %95 = memref.load %arg1[%c94] : memref<101xf32, #tpu.memory_space<smem>>
    %c95 = arith.constant 95 : index
    %96 = memref.load %arg1[%c95] : memref<101xf32, #tpu.memory_space<smem>>
    %c96 = arith.constant 96 : index
    %97 = memref.load %arg1[%c96] : memref<101xf32, #tpu.memory_space<smem>>
    %c97 = arith.constant 97 : index
    %98 = memref.load %arg1[%c97] : memref<101xf32, #tpu.memory_space<smem>>
    %c98 = arith.constant 98 : index
    %99 = memref.load %arg1[%c98] : memref<101xf32, #tpu.memory_space<smem>>
    %c99 = arith.constant 99 : index
    %100 = memref.load %arg1[%c99] : memref<101xf32, #tpu.memory_space<smem>>
    %c100 = arith.constant 100 : index
    %101 = memref.load %arg1[%c100] : memref<101xf32, #tpu.memory_space<smem>>
    %c0_3 = arith.constant 0 : index
    %c0_4 = arith.constant 0 : index
    %c0_5 = arith.constant 0 : index
    %102 = vector.load %arg2[%c0_3, %c0_4, %c0_5] : memref<3x8x8xf32, #tpu.memory_space<vmem>>, vector<1x8x8xf32>
    %103 = vector.shape_cast %102 : vector<1x8x8xf32> to vector<8x8xf32>
    %c1_6 = arith.constant 1 : index
    %c0_7 = arith.constant 0 : index
    %c0_8 = arith.constant 0 : index
    %104 = vector.load %arg2[%c1_6, %c0_7, %c0_8] : memref<3x8x8xf32, #tpu.memory_space<vmem>>, vector<1x8x8xf32>
    %105 = vector.shape_cast %104 : vector<1x8x8xf32> to vector<8x8xf32>
    %c2_9 = arith.constant 2 : index
    %c0_10 = arith.constant 0 : index
    %c0_11 = arith.constant 0 : index
    %106 = vector.load %arg2[%c2_9, %c0_10, %c0_11] : memref<3x8x8xf32, #tpu.memory_space<vmem>>, vector<1x8x8xf32>
    %107 = vector.shape_cast %106 : vector<1x8x8xf32> to vector<8x8xf32>
    %cst = arith.constant dense<0.000000e+00> : vector<1x8xf32>
    %108 = vector.multi_reduction <add>, %0, %cst [2] : vector<1x8x256xf32> to vector<1x8xf32>
    %109 = vector.shape_cast %108 : vector<1x8xf32> to vector<1x8x1xf32>
    %cst_12 = arith.constant 2.560000e+02 : f32
    %110 = vector.broadcast %cst_12 : f32 to vector<1x8x1xf32>
    %111 = arith.divf %109, %110 : vector<1x8x1xf32>
    %cst_13 = arith.constant dense<0xFF800000> : vector<1x8xf32>
    %112 = vector.multi_reduction <maximumf>, %0, %cst_13 [2] : vector<1x8x256xf32> to vector<1x8xf32>
    %113 = vector.shape_cast %112 : vector<1x8xf32> to vector<1x8x1xf32>
    %114 = arith.addf %111, %113 : vector<1x8x1xf32>
    %cst_14 = arith.constant 5.000000e-01 : f32
    %115 = vector.broadcast %cst_14 : f32 to vector<1x8x1xf32>
    %116 = arith.mulf %115, %114 : vector<1x8x1xf32>
    %117 = vector.broadcast %1 : f32 to vector<1x8x1xf32>
    %118 = arith.mulf %117, %111 : vector<1x8x1xf32>
    %119 = arith.addf %116, %118 : vector<1x8x1xf32>
    %120 = vector.broadcast %2 : f32 to vector<1x8x1xf32>
    %121 = arith.mulf %120, %113 : vector<1x8x1xf32>
    %122 = arith.addf %119, %121 : vector<1x8x1xf32>
    %123 = vector.shape_cast %103 : vector<8x8xf32> to vector<1x8x8xf32>
    %124 = vector.broadcast %122 : vector<1x8x1xf32> to vector<1x8x8xf32>
    %125 = arith.mulf %123, %124 : vector<1x8x8xf32>
    %cst_15 = arith.constant dense<0.000000e+00> : vector<1x8xf32>
    %126 = vector.multi_reduction <add>, %125, %cst_15 [1] : vector<1x8x8xf32> to vector<1x8xf32>
    %127 = vector.shape_cast %126 : vector<1x8xf32> to vector<1x1x8xf32>
    %128 = vector.broadcast %3 : f32 to vector<1x1x8xf32>
    %129 = arith.addf %128, %127 : vector<1x1x8xf32>
    %130 = arith.negf %129 : vector<1x1x8xf32>
    %131 = math.exp %130 : vector<1x1x8xf32>
    %cst_16 = arith.constant 1.000000e+00 : f32
    %132 = vector.broadcast %cst_16 : f32 to vector<1x1x8xf32>
    %133 = arith.addf %132, %131 : vector<1x1x8xf32>
    %134 = arith.divf %132, %133 : vector<1x1x8xf32>
    %135 = vector.shape_cast %105 : vector<8x8xf32> to vector<1x8x8xf32>
    %136 = vector.broadcast %134 : vector<1x1x8xf32> to vector<1x8x8xf32>
    %137 = arith.mulf %135, %136 : vector<1x8x8xf32>
    %cst_17 = arith.constant dense<0.000000e+00> : vector<1x8xf32>
    %138 = vector.multi_reduction <add>, %137, %cst_17 [2] : vector<1x8x8xf32> to vector<1x8xf32>
    %139 = vector.shape_cast %138 : vector<1x8xf32> to vector<1x8x1xf32>
    %140 = vector.broadcast %134 : vector<1x1x8xf32> to vector<1x8x8xf32>
    %141 = vector.broadcast %139 : vector<1x8x1xf32> to vector<1x8x8xf32>
    %142 = arith.cmpf ogt, %140, %141 : vector<1x8x8xf32>
    %143 = vector.broadcast %134 : vector<1x1x8xf32> to vector<1x8x8xf32>
    %144 = vector.broadcast %139 : vector<1x8x1xf32> to vector<1x8x8xf32>
    %145 = arith.cmpf oeq, %143, %144 : vector<1x8x8xf32>
    %146 = vector.shape_cast %107 : vector<8x8xf32> to vector<1x8x8xf32>
    %cst_18 = arith.constant 0.000000e+00 : f32
    %147 = vector.broadcast %cst_18 : f32 to vector<1x8x8xf32>
    %148 = arith.select %145, %146, %147 : vector<1x8x8xi1>, vector<1x8x8xf32>
    %cst_19 = arith.constant 1.000000e+00 : f32
    %149 = vector.broadcast %cst_19 : f32 to vector<1x8x8xf32>
    %150 = arith.select %142, %149, %148 : vector<1x8x8xi1>, vector<1x8x8xf32>
    %cst_20 = arith.constant dense<0.000000e+00> : vector<1x8xf32>
    %151 = vector.multi_reduction <add>, %150, %cst_20 [2] : vector<1x8x8xf32> to vector<1x8xf32>
    %152 = vector.shape_cast %151 : vector<1x8xf32> to vector<1x8x1xf32>
    %cst_21 = arith.constant dense<0.000000e+00> : vector<1x8xf32>
    %153 = vector.multi_reduction <add>, %150, %cst_21 [1] : vector<1x8x8xf32> to vector<1x8xf32>
    %154 = vector.shape_cast %153 : vector<1x8xf32> to vector<1x1x8xf32>
    %cst_22 = arith.constant 4.000000e+00 : f32
    %155 = vector.broadcast %cst_22 : f32 to vector<1x8x1xf32>
    %156 = arith.cmpf olt, %152, %155 : vector<1x8x1xf32>
    %157 = arith.extui %156 : vector<1x8x1xi1> to vector<1x8x1xi32>
    %158 = arith.sitofp %157 : vector<1x8x1xi32> to vector<1x8x1xf32>
    %cst_23 = arith.constant 4.000000e+00 : f32
    %159 = vector.broadcast %cst_23 : f32 to vector<1x1x8xf32>
    %160 = arith.cmpf oge, %154, %159 : vector<1x1x8xf32>
    %161 = arith.extui %160 : vector<1x1x8xi1> to vector<1x1x8xi32>
    %162 = arith.sitofp %161 : vector<1x1x8xi32> to vector<1x1x8xf32>
    %163 = arith.mulf %158, %139 : vector<1x8x1xf32>
    %164 = arith.subf %139, %163 : vector<1x8x1xf32>
    %165 = arith.mulf %162, %134 : vector<1x1x8xf32>
    %cst_24 = arith.constant 2.500000e-01 : f32
    %166 = vector.broadcast %cst_24 : f32 to vector<1x1x8xf32>
    %167 = arith.mulf %165, %166 : vector<1x1x8xf32>
    %cst_25 = arith.constant 1.000000e+00 : f32
    %168 = vector.broadcast %cst_25 : f32 to vector<1x1x8xf32>
    %169 = arith.subf %168, %162 : vector<1x1x8xf32>
    %170 = arith.mulf %169, %134 : vector<1x1x8xf32>
    %cst_26 = arith.constant 2.500000e-01 : f32
    %171 = vector.broadcast %cst_26 : f32 to vector<1x1x8xf32>
    %172 = arith.mulf %170, %171 : vector<1x1x8xf32>
    %173 = tpu.concatenate %167, %172 in 1 : vector<1x1x8xf32>, vector<1x1x8xf32> -> vector<1x2x8xf32>
    "tpu.trace_start"() <{level = 10 : i32, message = "bkc,bcp->bkp"}> : () -> ()
    %cst_27 = arith.constant dense<0.000000e+00> : vector<1x2x256xf32>
    %174 = tpu.matmul %173, %0, %cst_27 {dimension_numbers = #tpu.dot_dimension_numbers<[2], [1], [1], [2], [0, 0, 0, 1, 1, 2], [0], [0]>, precision = #tpu.contract_precision<fp32>} : vector<1x2x8xf32>, vector<1x8x256xf32>, vector<1x2x256xf32> -> vector<1x2x256xf32>
    "tpu.trace_stop"() : () -> ()
    %175 = vector.broadcast %163 : vector<1x8x1xf32> to vector<1x8x256xf32>
    %176 = arith.mulf %175, %0 : vector<1x8x256xf32>
    %cst_28 = arith.constant dense<0xFF800000> : vector<1x256xf32>
    %177 = vector.multi_reduction <maximumf>, %176, %cst_28 [1] : vector<1x8x256xf32> to vector<1x256xf32>
    %178 = vector.shape_cast %177 : vector<1x256xf32> to vector<1x1x256xf32>
    %179 = vector.broadcast %164 : vector<1x8x1xf32> to vector<1x8x256xf32>
    %180 = arith.mulf %179, %0 : vector<1x8x256xf32>
    %cst_29 = arith.constant dense<0xFF800000> : vector<1x256xf32>
    %181 = vector.multi_reduction <maximumf>, %180, %cst_29 [1] : vector<1x8x256xf32> to vector<1x256xf32>
    %182 = vector.shape_cast %181 : vector<1x256xf32> to vector<1x1x256xf32>
    %183 = tpu.concatenate %174, %178, %182 in 1 : vector<1x2x256xf32>, vector<1x1x256xf32>, vector<1x1x256xf32> -> vector<1x4x256xf32>
    %cst_30 = arith.constant 0.000000e+00 : f32
    %184 = vector.broadcast %cst_30 : f32 to vector<1x4x128xf32>
    %c0_31 = arith.constant 0 : index
    %c0_32 = arith.constant 0 : index
    %c0_33 = arith.constant 0 : index
    %185 = vector.load %arg6[%c0_31, %c0_32, %c0_33] : memref<1x4x435xf32, #tpu.memory_space<vmem>>, vector<1x4x128xf32>
    tpu.vector_store %arg6[%c0_31, %c0_32, %c0_33], %184 {strides = array<i32>} : memref<1x4x435xf32, #tpu.memory_space<vmem>>, vector<1x4x128xf32>,
    %cst_34 = arith.constant 0.000000e+00 : f32
    %186 = vector.broadcast %cst_34 : f32 to vector<1x4x51xf32>
    %c0_35 = arith.constant 0 : index
    %c0_36 = arith.constant 0 : index
    %c384 = arith.constant 384 : index
    %187 = vector.load %arg6[%c0_35, %c0_36, %c384] : memref<1x4x435xf32, #tpu.memory_space<vmem>>, vector<1x4x51xf32>
    tpu.vector_store %arg6[%c0_35, %c0_36, %c384], %186 {strides = array<i32>} : memref<1x4x435xf32, #tpu.memory_space<vmem>>, vector<1x4x51xf32>,
    %c0_37 = arith.constant 0 : index
    %c0_38 = arith.constant 0 : index
    %c128 = arith.constant 128 : index
    %188 = vector.load %arg6[%c0_37, %c0_38, %c128] : memref<1x4x435xf32, #tpu.memory_space<vmem>>, vector<1x4x256xf32>
    tpu.vector_store %arg6[%c0_37, %c0_38, %c128], %183 {strides = array<i32>} : memref<1x4x435xf32, #tpu.memory_space<vmem>>, vector<1x4x256xf32>,
    %189 = tpu.iota {dimensions = array<i32: 1>} : vector<1x4x1xi32>
    %c2_i32 = arith.constant 2 : i32
    %190 = vector.broadcast %c2_i32 : i32 to vector<1x4x1xi32>
    %191 = arith.cmpi slt, %189, %190 : vector<1x4x1xi32>
    %192 = arith.extui %191 : vector<1x4x1xi1> to vector<1x4x1xi32>
    %193 = arith.sitofp %192 : vector<1x4x1xi32> to vector<1x4x1xf32>
    %c0_39 = arith.constant 0 : index
    %c0_40 = arith.constant 0 : index
    %c0_41 = arith.constant 0 : index
    %194 = vector.load %arg3[%c0_39, %c0_40, %c0_41] : memref<7x1x256xf32, #tpu.memory_space<vmem>>, vector<1x1x256xf32>
    %195 = vector.shape_cast %194 : vector<1x1x256xf32> to vector<1x256xf32>
    %196 = vector.shape_cast %195 : vector<1x256xf32> to vector<1x1x256xf32>
    %c1_42 = arith.constant 1 : index
    %c0_43 = arith.constant 0 : index
    %c0_44 = arith.constant 0 : index
    %197 = vector.load %arg3[%c1_42, %c0_43, %c0_44] : memref<7x1x256xf32, #tpu.memory_space<vmem>>, vector<1x1x256xf32>
    %198 = vector.shape_cast %197 : vector<1x1x256xf32> to vector<1x256xf32>
    %199 = vector.shape_cast %198 : vector<1x256xf32> to vector<1x1x256xf32>
    %c2_45 = arith.constant 2 : index
    %c0_46 = arith.constant 0 : index
    %c0_47 = arith.constant 0 : index
    %200 = vector.load %arg3[%c2_45, %c0_46, %c0_47] : memref<7x1x256xf32, #tpu.memory_space<vmem>>, vector<1x1x256xf32>
    %201 = vector.shape_cast %200 : vector<1x1x256xf32> to vector<1x256xf32>
    %202 = vector.shape_cast %201 : vector<1x256xf32> to vector<1x1x256xf32>
    %c4_48 = arith.constant 4 : index
    %c0_49 = arith.constant 0 : index
    %c0_50 = arith.constant 0 : index
    %203 = vector.load %arg3[%c4_48, %c0_49, %c0_50] : memref<7x1x256xf32, #tpu.memory_space<vmem>>, vector<1x1x256xf32>
    %204 = vector.shape_cast %203 : vector<1x1x256xf32> to vector<1x256xf32>
    %205 = vector.shape_cast %204 : vector<1x256xf32> to vector<1x1x256xf32>
    %c5_51 = arith.constant 5 : index
    %c0_52 = arith.constant 0 : index
    %c0_53 = arith.constant 0 : index
    %206 = vector.load %arg3[%c5_51, %c0_52, %c0_53] : memref<7x1x256xf32, #tpu.memory_space<vmem>>, vector<1x1x256xf32>
    %207 = vector.shape_cast %206 : vector<1x1x256xf32> to vector<1x256xf32>
    %208 = vector.shape_cast %207 : vector<1x256xf32> to vector<1x1x256xf32>
    %c6_54 = arith.constant 6 : index
    %c0_55 = arith.constant 0 : index
    %c0_56 = arith.constant 0 : index
    %209 = vector.load %arg3[%c6_54, %c0_55, %c0_56] : memref<7x1x256xf32, #tpu.memory_space<vmem>>, vector<1x1x256xf32>
    %210 = vector.shape_cast %209 : vector<1x1x256xf32> to vector<1x256xf32>
    %211 = vector.shape_cast %210 : vector<1x256xf32> to vector<1x1x256xf32>
    %cst_57 = arith.constant 0.000000e+00 : f32
    %212 = vector.broadcast %cst_57 : f32 to vector<1x4x256xf32>
    %c0_58 = arith.constant 0 : index
    %c0_59 = arith.constant 0 : index
    %c80_60 = arith.constant 80 : index
    %213 = vector.load %arg6[%c0_58, %c0_59, %c80_60] : memref<1x4x435xf32, #tpu.memory_space<vmem>>, vector<1x4x256xf32>
    %214 = arith.subf %4, %53 : f32
    %215 = vector.broadcast %214 : f32 to vector<1x4x1xf32>
    %216 = arith.mulf %215, %193 : vector<1x4x1xf32>
    %217 = vector.broadcast %53 : f32 to vector<1x4x1xf32>
    %218 = arith.addf %217, %216 : vector<1x4x1xf32>
    %c3_i32 = arith.constant 3 : i32
    %219 = tpu.dynamic_rotate %213 by %c3_i32 dim 2 : vector<1x4x256xf32>, i32 -> vector<1x4x256xf32>
    %220 = vector.broadcast %218 : vector<1x4x1xf32> to vector<1x4x256xf32>
    %221 = arith.mulf %219, %220 : vector<1x4x256xf32>
    %222 = vector.broadcast %196 : vector<1x1x256xf32> to vector<1x4x256xf32>
    %223 = arith.mulf %221, %222 : vector<1x4x256xf32>
    %224 = arith.addf %212, %223 : vector<1x4x256xf32>
    %225 = arith.subf %5, %54 : f32
    %226 = vector.broadcast %225 : f32 to vector<1x4x1xf32>
    %227 = arith.mulf %226, %193 : vector<1x4x1xf32>
    %228 = vector.broadcast %54 : f32 to vector<1x4x1xf32>
    %229 = arith.addf %228, %227 : vector<1x4x1xf32>
    %c2_i32_61 = arith.constant 2 : i32
    %230 = tpu.dynamic_rotate %213 by %c2_i32_61 dim 2 : vector<1x4x256xf32>, i32 -> vector<1x4x256xf32>
    %231 = vector.broadcast %229 : vector<1x4x1xf32> to vector<1x4x256xf32>
    %232 = arith.mulf %230, %231 : vector<1x4x256xf32>
    %233 = vector.broadcast %199 : vector<1x1x256xf32> to vector<1x4x256xf32>
    %234 = arith.mulf %232, %233 : vector<1x4x256xf32>
    %235 = arith.addf %224, %234 : vector<1x4x256xf32>
    %236 = arith.subf %6, %55 : f32
    %237 = vector.broadcast %236 : f32 to vector<1x4x1xf32>
    %238 = arith.mulf %237, %193 : vector<1x4x1xf32>
    %239 = vector.broadcast %55 : f32 to vector<1x4x1xf32>
    %240 = arith.addf %239, %238 : vector<1x4x1xf32>
    %c1_i32 = arith.constant 1 : i32
    %241 = tpu.dynamic_rotate %213 by %c1_i32 dim 2 : vector<1x4x256xf32>, i32 -> vector<1x4x256xf32>
    %242 = vector.broadcast %240 : vector<1x4x1xf32> to vector<1x4x256xf32>
    %243 = arith.mulf %241, %242 : vector<1x4x256xf32>
    %244 = vector.broadcast %202 : vector<1x1x256xf32> to vector<1x4x256xf32>
    %245 = arith.mulf %243, %244 : vector<1x4x256xf32>
    %246 = arith.addf %235, %245 : vector<1x4x256xf32>
    %247 = arith.subf %7, %56 : f32
    %248 = vector.broadcast %247 : f32 to vector<1x4x1xf32>
    %249 = arith.mulf %248, %193 : vector<1x4x1xf32>
    %250 = vector.broadcast %56 : f32 to vector<1x4x1xf32>
    %251 = arith.addf %250, %249 : vector<1x4x1xf32>
    %252 = vector.broadcast %251 : vector<1x4x1xf32> to vector<1x4x256xf32>
    %253 = arith.mulf %213, %252 : vector<1x4x256xf32>
    %254 = arith.addf %246, %253 : vector<1x4x256xf32>
    %255 = arith.subf %8, %57 : f32
    %256 = vector.broadcast %255 : f32 to vector<1x4x1xf32>
    %257 = arith.mulf %256, %193 : vector<1x4x1xf32>
    %258 = vector.broadcast %57 : f32 to vector<1x4x1xf32>
    %259 = arith.addf %258, %257 : vector<1x4x1xf32>
    %c255_i32 = arith.constant 255 : i32
    %260 = tpu.dynamic_rotate %213 by %c255_i32 dim 2 : vector<1x4x256xf32>, i32 -> vector<1x4x256xf32>
    %261 = vector.broadcast %259 : vector<1x4x1xf32> to vector<1x4x256xf32>
    %262 = arith.mulf %260, %261 : vector<1x4x256xf32>
    %263 = vector.broadcast %205 : vector<1x1x256xf32> to vector<1x4x256xf32>
    %264 = arith.mulf %262, %263 : vector<1x4x256xf32>
    %265 = arith.addf %254, %264 : vector<1x4x256xf32>
    %266 = arith.subf %9, %58 : f32
    %267 = vector.broadcast %266 : f32 to vector<1x4x1xf32>
    %268 = arith.mulf %267, %193 : vector<1x4x1xf32>
    %269 = vector.broadcast %58 : f32 to vector<1x4x1xf32>
    %270 = arith.addf %269, %268 : vector<1x4x1xf32>
    %c254_i32 = arith.constant 254 : i32
    %271 = tpu.dynamic_rotate %213 by %c254_i32 dim 2 : vector<1x4x256xf32>, i32 -> vector<1x4x256xf32>
    %272 = vector.broadcast %270 : vector<1x4x1xf32> to vector<1x4x256xf32>
    %273 = arith.mulf %271, %272 : vector<1x4x256xf32>
    %274 = vector.broadcast %208 : vector<1x1x256xf32> to vector<1x4x256xf32>
    %275 = arith.mulf %273, %274 : vector<1x4x256xf32>
    %276 = arith.addf %265, %275 : vector<1x4x256xf32>
    %277 = arith.subf %10, %59 : f32
    %278 = vector.broadcast %277 : f32 to vector<1x4x1xf32>
    %279 = arith.mulf %278, %193 : vector<1x4x1xf32>
    %280 = vector.broadcast %59 : f32 to vector<1x4x1xf32>
    %281 = arith.addf %280, %279 : vector<1x4x1xf32>
    %c253_i32 = arith.constant 253 : i32
    %282 = tpu.dynamic_rotate %213 by %c253_i32 dim 2 : vector<1x4x256xf32>, i32 -> vector<1x4x256xf32>
    %283 = vector.broadcast %281 : vector<1x4x1xf32> to vector<1x4x256xf32>
    %284 = arith.mulf %282, %283 : vector<1x4x256xf32>
    %285 = vector.broadcast %211 : vector<1x1x256xf32> to vector<1x4x256xf32>
    %286 = arith.mulf %284, %285 : vector<1x4x256xf32>
    %287 = arith.addf %276, %286 : vector<1x4x256xf32>
    %c0_62 = arith.constant 0 : index
    %c0_63 = arith.constant 0 : index
    %c96_64 = arith.constant 96 : index
    %288 = vector.load %arg6[%c0_62, %c0_63, %c96_64] : memref<1x4x435xf32, #tpu.memory_space<vmem>>, vector<1x4x256xf32>
    %289 = arith.subf %11, %60 : f32
    %290 = vector.broadcast %289 : f32 to vector<1x4x1xf32>
    %291 = arith.mulf %290, %193 : vector<1x4x1xf32>
    %292 = vector.broadcast %60 : f32 to vector<1x4x1xf32>
    %293 = arith.addf %292, %291 : vector<1x4x1xf32>
    %c3_i32_65 = arith.constant 3 : i32
    %294 = tpu.dynamic_rotate %288 by %c3_i32_65 dim 2 : vector<1x4x256xf32>, i32 -> vector<1x4x256xf32>
    %295 = vector.broadcast %293 : vector<1x4x1xf32> to vector<1x4x256xf32>
    %296 = arith.mulf %294, %295 : vector<1x4x256xf32>
    %297 = vector.broadcast %196 : vector<1x1x256xf32> to vector<1x4x256xf32>
    %298 = arith.mulf %296, %297 : vector<1x4x256xf32>
    %299 = arith.addf %287, %298 : vector<1x4x256xf32>
    %300 = arith.subf %12, %61 : f32
    %301 = vector.broadcast %300 : f32 to vector<1x4x1xf32>
    %302 = arith.mulf %301, %193 : vector<1x4x1xf32>
    %303 = vector.broadcast %61 : f32 to vector<1x4x1xf32>
    %304 = arith.addf %303, %302 : vector<1x4x1xf32>
    %c2_i32_66 = arith.constant 2 : i32
    %305 = tpu.dynamic_rotate %288 by %c2_i32_66 dim 2 : vector<1x4x256xf32>, i32 -> vector<1x4x256xf32>
    %306 = vector.broadcast %304 : vector<1x4x1xf32> to vector<1x4x256xf32>
    %307 = arith.mulf %305, %306 : vector<1x4x256xf32>
    %308 = vector.broadcast %199 : vector<1x1x256xf32> to vector<1x4x256xf32>
    %309 = arith.mulf %307, %308 : vector<1x4x256xf32>
    %310 = arith.addf %299, %309 : vector<1x4x256xf32>
    %311 = arith.subf %13, %62 : f32
    %312 = vector.broadcast %311 : f32 to vector<1x4x1xf32>
    %313 = arith.mulf %312, %193 : vector<1x4x1xf32>
    %314 = vector.broadcast %62 : f32 to vector<1x4x1xf32>
    %315 = arith.addf %314, %313 : vector<1x4x1xf32>
    %c1_i32_67 = arith.constant 1 : i32
    %316 = tpu.dynamic_rotate %288 by %c1_i32_67 dim 2 : vector<1x4x256xf32>, i32 -> vector<1x4x256xf32>
    %317 = vector.broadcast %315 : vector<1x4x1xf32> to vector<1x4x256xf32>
    %318 = arith.mulf %316, %317 : vector<1x4x256xf32>
    %319 = vector.broadcast %202 : vector<1x1x256xf32> to vector<1x4x256xf32>
    %320 = arith.mulf %318, %319 : vector<1x4x256xf32>
    %321 = arith.addf %310, %320 : vector<1x4x256xf32>
    %322 = arith.subf %14, %63 : f32
    %323 = vector.broadcast %322 : f32 to vector<1x4x1xf32>
    %324 = arith.mulf %323, %193 : vector<1x4x1xf32>
    %325 = vector.broadcast %63 : f32 to vector<1x4x1xf32>
    %326 = arith.addf %325, %324 : vector<1x4x1xf32>
    %327 = vector.broadcast %326 : vector<1x4x1xf32> to vector<1x4x256xf32>
    %328 = arith.mulf %288, %327 : vector<1x4x256xf32>
    %329 = arith.addf %321, %328 : vector<1x4x256xf32>
    %330 = arith.subf %15, %64 : f32
    %331 = vector.broadcast %330 : f32 to vector<1x4x1xf32>
    %332 = arith.mulf %331, %193 : vector<1x4x1xf32>
    %333 = vector.broadcast %64 : f32 to vector<1x4x1xf32>
    %334 = arith.addf %333, %332 : vector<1x4x1xf32>
    %c255_i32_68 = arith.constant 255 : i32
    %335 = tpu.dynamic_rotate %288 by %c255_i32_68 dim 2 : vector<1x4x256xf32>, i32 -> vector<1x4x256xf32>
    %336 = vector.broadcast %334 : vector<1x4x1xf32> to vector<1x4x256xf32>
    %337 = arith.mulf %335, %336 : vector<1x4x256xf32>
    %338 = vector.broadcast %205 : vector<1x1x256xf32> to vector<1x4x256xf32>
    %339 = arith.mulf %337, %338 : vector<1x4x256xf32>
    %340 = arith.addf %329, %339 : vector<1x4x256xf32>
    %341 = arith.subf %16, %65 : f32
    %342 = vector.broadcast %341 : f32 to vector<1x4x1xf32>
    %343 = arith.mulf %342, %193 : vector<1x4x1xf32>
    %344 = vector.broadcast %65 : f32 to vector<1x4x1xf32>
    %345 = arith.addf %344, %343 : vector<1x4x1xf32>
    %c254_i32_69 = arith.constant 254 : i32
    %346 = tpu.dynamic_rotate %288 by %c254_i32_69 dim 2 : vector<1x4x256xf32>, i32 -> vector<1x4x256xf32>
    %347 = vector.broadcast %345 : vector<1x4x1xf32> to vector<1x4x256xf32>
    %348 = arith.mulf %346, %347 : vector<1x4x256xf32>
    %349 = vector.broadcast %208 : vector<1x1x256xf32> to vector<1x4x256xf32>
    %350 = arith.mulf %348, %349 : vector<1x4x256xf32>
    %351 = arith.addf %340, %350 : vector<1x4x256xf32>
    %352 = arith.subf %17, %66 : f32
    %353 = vector.broadcast %352 : f32 to vector<1x4x1xf32>
    %354 = arith.mulf %353, %193 : vector<1x4x1xf32>
    %355 = vector.broadcast %66 : f32 to vector<1x4x1xf32>
    %356 = arith.addf %355, %354 : vector<1x4x1xf32>
    %c253_i32_70 = arith.constant 253 : i32
    %357 = tpu.dynamic_rotate %288 by %c253_i32_70 dim 2 : vector<1x4x256xf32>, i32 -> vector<1x4x256xf32>
    %358 = vector.broadcast %356 : vector<1x4x1xf32> to vector<1x4x256xf32>
    %359 = arith.mulf %357, %358 : vector<1x4x256xf32>
    %360 = vector.broadcast %211 : vector<1x1x256xf32> to vector<1x4x256xf32>
    %361 = arith.mulf %359, %360 : vector<1x4x256xf32>
    %362 = arith.addf %351, %361 : vector<1x4x256xf32>
    %c0_71 = arith.constant 0 : index
    %c0_72 = arith.constant 0 : index
    %c112 = arith.constant 112 : index
    %363 = vector.load %arg6[%c0_71, %c0_72, %c112] : memref<1x4x435xf32, #tpu.memory_space<vmem>>, vector<1x4x256xf32>
    %364 = arith.subf %18, %67 : f32
    %365 = vector.broadcast %364 : f32 to vector<1x4x1xf32>
    %366 = arith.mulf %365, %193 : vector<1x4x1xf32>
    %367 = vector.broadcast %67 : f32 to vector<1x4x1xf32>
    %368 = arith.addf %367, %366 : vector<1x4x1xf32>
    %c3_i32_73 = arith.constant 3 : i32
    %369 = tpu.dynamic_rotate %363 by %c3_i32_73 dim 2 : vector<1x4x256xf32>, i32 -> vector<1x4x256xf32>
    %370 = vector.broadcast %368 : vector<1x4x1xf32> to vector<1x4x256xf32>
    %371 = arith.mulf %369, %370 : vector<1x4x256xf32>
    %372 = vector.broadcast %196 : vector<1x1x256xf32> to vector<1x4x256xf32>
    %373 = arith.mulf %371, %372 : vector<1x4x256xf32>
    %374 = arith.addf %362, %373 : vector<1x4x256xf32>
    %375 = arith.subf %19, %68 : f32
    %376 = vector.broadcast %375 : f32 to vector<1x4x1xf32>
    %377 = arith.mulf %376, %193 : vector<1x4x1xf32>
    %378 = vector.broadcast %68 : f32 to vector<1x4x1xf32>
    %379 = arith.addf %378, %377 : vector<1x4x1xf32>
    %c2_i32_74 = arith.constant 2 : i32
    %380 = tpu.dynamic_rotate %363 by %c2_i32_74 dim 2 : vector<1x4x256xf32>, i32 -> vector<1x4x256xf32>
    %381 = vector.broadcast %379 : vector<1x4x1xf32> to vector<1x4x256xf32>
    %382 = arith.mulf %380, %381 : vector<1x4x256xf32>
    %383 = vector.broadcast %199 : vector<1x1x256xf32> to vector<1x4x256xf32>
    %384 = arith.mulf %382, %383 : vector<1x4x256xf32>
    %385 = arith.addf %374, %384 : vector<1x4x256xf32>
    %386 = arith.subf %20, %69 : f32
    %387 = vector.broadcast %386 : f32 to vector<1x4x1xf32>
    %388 = arith.mulf %387, %193 : vector<1x4x1xf32>
    %389 = vector.broadcast %69 : f32 to vector<1x4x1xf32>
    %390 = arith.addf %389, %388 : vector<1x4x1xf32>
    %c1_i32_75 = arith.constant 1 : i32
    %391 = tpu.dynamic_rotate %363 by %c1_i32_75 dim 2 : vector<1x4x256xf32>, i32 -> vector<1x4x256xf32>
    %392 = vector.broadcast %390 : vector<1x4x1xf32> to vector<1x4x256xf32>
    %393 = arith.mulf %391, %392 : vector<1x4x256xf32>
    %394 = vector.broadcast %202 : vector<1x1x256xf32> to vector<1x4x256xf32>
    %395 = arith.mulf %393, %394 : vector<1x4x256xf32>
    %396 = arith.addf %385, %395 : vector<1x4x256xf32>
    %397 = arith.subf %21, %70 : f32
    %398 = vector.broadcast %397 : f32 to vector<1x4x1xf32>
    %399 = arith.mulf %398, %193 : vector<1x4x1xf32>
    %400 = vector.broadcast %70 : f32 to vector<1x4x1xf32>
    %401 = arith.addf %400, %399 : vector<1x4x1xf32>
    %402 = vector.broadcast %401 : vector<1x4x1xf32> to vector<1x4x256xf32>
    %403 = arith.mulf %363, %402 : vector<1x4x256xf32>
    %404 = arith.addf %396, %403 : vector<1x4x256xf32>
    %405 = arith.subf %22, %71 : f32
    %406 = vector.broadcast %405 : f32 to vector<1x4x1xf32>
    %407 = arith.mulf %406, %193 : vector<1x4x1xf32>
    %408 = vector.broadcast %71 : f32 to vector<1x4x1xf32>
    %409 = arith.addf %408, %407 : vector<1x4x1xf32>
    %c255_i32_76 = arith.constant 255 : i32
    %410 = tpu.dynamic_rotate %363 by %c255_i32_76 dim 2 : vector<1x4x256xf32>, i32 -> vector<1x4x256xf32>
    %411 = vector.broadcast %409 : vector<1x4x1xf32> to vector<1x4x256xf32>
    %412 = arith.mulf %410, %411 : vector<1x4x256xf32>
    %413 = vector.broadcast %205 : vector<1x1x256xf32> to vector<1x4x256xf32>
    %414 = arith.mulf %412, %413 : vector<1x4x256xf32>
    %415 = arith.addf %404, %414 : vector<1x4x256xf32>
    %416 = arith.subf %23, %72 : f32
    %417 = vector.broadcast %416 : f32 to vector<1x4x1xf32>
    %418 = arith.mulf %417, %193 : vector<1x4x1xf32>
    %419 = vector.broadcast %72 : f32 to vector<1x4x1xf32>
    %420 = arith.addf %419, %418 : vector<1x4x1xf32>
    %c254_i32_77 = arith.constant 254 : i32
    %421 = tpu.dynamic_rotate %363 by %c254_i32_77 dim 2 : vector<1x4x256xf32>, i32 -> vector<1x4x256xf32>
    %422 = vector.broadcast %420 : vector<1x4x1xf32> to vector<1x4x256xf32>
    %423 = arith.mulf %421, %422 : vector<1x4x256xf32>
    %424 = vector.broadcast %208 : vector<1x1x256xf32> to vector<1x4x256xf32>
    %425 = arith.mulf %423, %424 : vector<1x4x256xf32>
    %426 = arith.addf %415, %425 : vector<1x4x256xf32>
    %427 = arith.subf %24, %73 : f32
    %428 = vector.broadcast %427 : f32 to vector<1x4x1xf32>
    %429 = arith.mulf %428, %193 : vector<1x4x1xf32>
    %430 = vector.broadcast %73 : f32 to vector<1x4x1xf32>
    %431 = arith.addf %430, %429 : vector<1x4x1xf32>
    %c253_i32_78 = arith.constant 253 : i32
    %432 = tpu.dynamic_rotate %363 by %c253_i32_78 dim 2 : vector<1x4x256xf32>, i32 -> vector<1x4x256xf32>
    %433 = vector.broadcast %431 : vector<1x4x1xf32> to vector<1x4x256xf32>
    %434 = arith.mulf %432, %433 : vector<1x4x256xf32>
    %435 = vector.broadcast %211 : vector<1x1x256xf32> to vector<1x4x256xf32>
    %436 = arith.mulf %434, %435 : vector<1x4x256xf32>
    %437 = arith.addf %426, %436 : vector<1x4x256xf32>
    %c0_79 = arith.constant 0 : index
    %c0_80 = arith.constant 0 : index
    %c128_81 = arith.constant 128 : index
    %438 = vector.load %arg6[%c0_79, %c0_80, %c128_81] : memref<1x4x435xf32, #tpu.memory_space<vmem>>, vector<1x4x256xf32>
    %439 = arith.subf %25, %74 : f32
    %440 = vector.broadcast %439 : f32 to vector<1x4x1xf32>
    %441 = arith.mulf %440, %193 : vector<1x4x1xf32>
    %442 = vector.broadcast %74 : f32 to vector<1x4x1xf32>
    %443 = arith.addf %442, %441 : vector<1x4x1xf32>
    %c3_i32_82 = arith.constant 3 : i32
    %444 = tpu.dynamic_rotate %438 by %c3_i32_82 dim 2 : vector<1x4x256xf32>, i32 -> vector<1x4x256xf32>
    %445 = vector.broadcast %443 : vector<1x4x1xf32> to vector<1x4x256xf32>
    %446 = arith.mulf %444, %445 : vector<1x4x256xf32>
    %447 = vector.broadcast %196 : vector<1x1x256xf32> to vector<1x4x256xf32>
    %448 = arith.mulf %446, %447 : vector<1x4x256xf32>
    %449 = arith.addf %437, %448 : vector<1x4x256xf32>
    %450 = arith.subf %26, %75 : f32
    %451 = vector.broadcast %450 : f32 to vector<1x4x1xf32>
    %452 = arith.mulf %451, %193 : vector<1x4x1xf32>
    %453 = vector.broadcast %75 : f32 to vector<1x4x1xf32>
    %454 = arith.addf %453, %452 : vector<1x4x1xf32>
    %c2_i32_83 = arith.constant 2 : i32
    %455 = tpu.dynamic_rotate %438 by %c2_i32_83 dim 2 : vector<1x4x256xf32>, i32 -> vector<1x4x256xf32>
    %456 = vector.broadcast %454 : vector<1x4x1xf32> to vector<1x4x256xf32>
    %457 = arith.mulf %455, %456 : vector<1x4x256xf32>
    %458 = vector.broadcast %199 : vector<1x1x256xf32> to vector<1x4x256xf32>
    %459 = arith.mulf %457, %458 : vector<1x4x256xf32>
    %460 = arith.addf %449, %459 : vector<1x4x256xf32>
    %461 = arith.subf %27, %76 : f32
    %462 = vector.broadcast %461 : f32 to vector<1x4x1xf32>
    %463 = arith.mulf %462, %193 : vector<1x4x1xf32>
    %464 = vector.broadcast %76 : f32 to vector<1x4x1xf32>
    %465 = arith.addf %464, %463 : vector<1x4x1xf32>
    %c1_i32_84 = arith.constant 1 : i32
    %466 = tpu.dynamic_rotate %438 by %c1_i32_84 dim 2 : vector<1x4x256xf32>, i32 -> vector<1x4x256xf32>
    %467 = vector.broadcast %465 : vector<1x4x1xf32> to vector<1x4x256xf32>
    %468 = arith.mulf %466, %467 : vector<1x4x256xf32>
    %469 = vector.broadcast %202 : vector<1x1x256xf32> to vector<1x4x256xf32>
    %470 = arith.mulf %468, %469 : vector<1x4x256xf32>
    %471 = arith.addf %460, %470 : vector<1x4x256xf32>
    %472 = arith.subf %28, %77 : f32
    %473 = vector.broadcast %472 : f32 to vector<1x4x1xf32>
    %474 = arith.mulf %473, %193 : vector<1x4x1xf32>
    %475 = vector.broadcast %77 : f32 to vector<1x4x1xf32>
    %476 = arith.addf %475, %474 : vector<1x4x1xf32>
    %477 = vector.broadcast %476 : vector<1x4x1xf32> to vector<1x4x256xf32>
    %478 = arith.mulf %438, %477 : vector<1x4x256xf32>
    %479 = arith.addf %471, %478 : vector<1x4x256xf32>
    %480 = arith.subf %29, %78 : f32
    %481 = vector.broadcast %480 : f32 to vector<1x4x1xf32>
    %482 = arith.mulf %481, %193 : vector<1x4x1xf32>
    %483 = vector.broadcast %78 : f32 to vector<1x4x1xf32>
    %484 = arith.addf %483, %482 : vector<1x4x1xf32>
    %c255_i32_85 = arith.constant 255 : i32
    %485 = tpu.dynamic_rotate %438 by %c255_i32_85 dim 2 : vector<1x4x256xf32>, i32 -> vector<1x4x256xf32>
    %486 = vector.broadcast %484 : vector<1x4x1xf32> to vector<1x4x256xf32>
    %487 = arith.mulf %485, %486 : vector<1x4x256xf32>
    %488 = vector.broadcast %205 : vector<1x1x256xf32> to vector<1x4x256xf32>
    %489 = arith.mulf %487, %488 : vector<1x4x256xf32>
    %490 = arith.addf %479, %489 : vector<1x4x256xf32>
    %491 = arith.subf %30, %79 : f32
    %492 = vector.broadcast %491 : f32 to vector<1x4x1xf32>
    %493 = arith.mulf %492, %193 : vector<1x4x1xf32>
    %494 = vector.broadcast %79 : f32 to vector<1x4x1xf32>
    %495 = arith.addf %494, %493 : vector<1x4x1xf32>
    %c254_i32_86 = arith.constant 254 : i32
    %496 = tpu.dynamic_rotate %438 by %c254_i32_86 dim 2 : vector<1x4x256xf32>, i32 -> vector<1x4x256xf32>
    %497 = vector.broadcast %495 : vector<1x4x1xf32> to vector<1x4x256xf32>
    %498 = arith.mulf %496, %497 : vector<1x4x256xf32>
    %499 = vector.broadcast %208 : vector<1x1x256xf32> to vector<1x4x256xf32>
    %500 = arith.mulf %498, %499 : vector<1x4x256xf32>
    %501 = arith.addf %490, %500 : vector<1x4x256xf32>
    %502 = arith.subf %31, %80 : f32
    %503 = vector.broadcast %502 : f32 to vector<1x4x1xf32>
    %504 = arith.mulf %503, %193 : vector<1x4x1xf32>
    %505 = vector.broadcast %80 : f32 to vector<1x4x1xf32>
    %506 = arith.addf %505, %504 : vector<1x4x1xf32>
    %c253_i32_87 = arith.constant 253 : i32
    %507 = tpu.dynamic_rotate %438 by %c253_i32_87 dim 2 : vector<1x4x256xf32>, i32 -> vector<1x4x256xf32>
    %508 = vector.broadcast %506 : vector<1x4x1xf32> to vector<1x4x256xf32>
    %509 = arith.mulf %507, %508 : vector<1x4x256xf32>
    %510 = vector.broadcast %211 : vector<1x1x256xf32> to vector<1x4x256xf32>
    %511 = arith.mulf %509, %510 : vector<1x4x256xf32>
    %512 = arith.addf %501, %511 : vector<1x4x256xf32>
    %c0_88 = arith.constant 0 : index
    %c0_89 = arith.constant 0 : index
    %c144 = arith.constant 144 : index
    %513 = vector.load %arg6[%c0_88, %c0_89, %c144] : memref<1x4x435xf32, #tpu.memory_space<vmem>>, vector<1x4x256xf32>
    %514 = arith.subf %32, %81 : f32
    %515 = vector.broadcast %514 : f32 to vector<1x4x1xf32>
    %516 = arith.mulf %515, %193 : vector<1x4x1xf32>
    %517 = vector.broadcast %81 : f32 to vector<1x4x1xf32>
    %518 = arith.addf %517, %516 : vector<1x4x1xf32>
    %c3_i32_90 = arith.constant 3 : i32
    %519 = tpu.dynamic_rotate %513 by %c3_i32_90 dim 2 : vector<1x4x256xf32>, i32 -> vector<1x4x256xf32>
    %520 = vector.broadcast %518 : vector<1x4x1xf32> to vector<1x4x256xf32>
    %521 = arith.mulf %519, %520 : vector<1x4x256xf32>
    %522 = vector.broadcast %196 : vector<1x1x256xf32> to vector<1x4x256xf32>
    %523 = arith.mulf %521, %522 : vector<1x4x256xf32>
    %524 = arith.addf %512, %523 : vector<1x4x256xf32>
    %525 = arith.subf %33, %82 : f32
    %526 = vector.broadcast %525 : f32 to vector<1x4x1xf32>
    %527 = arith.mulf %526, %193 : vector<1x4x1xf32>
    %528 = vector.broadcast %82 : f32 to vector<1x4x1xf32>
    %529 = arith.addf %528, %527 : vector<1x4x1xf32>
    %c2_i32_91 = arith.constant 2 : i32
    %530 = tpu.dynamic_rotate %513 by %c2_i32_91 dim 2 : vector<1x4x256xf32>, i32 -> vector<1x4x256xf32>
    %531 = vector.broadcast %529 : vector<1x4x1xf32> to vector<1x4x256xf32>
    %532 = arith.mulf %530, %531 : vector<1x4x256xf32>
    %533 = vector.broadcast %199 : vector<1x1x256xf32> to vector<1x4x256xf32>
    %534 = arith.mulf %532, %533 : vector<1x4x256xf32>
    %535 = arith.addf %524, %534 : vector<1x4x256xf32>
    %536 = arith.subf %34, %83 : f32
    %537 = vector.broadcast %536 : f32 to vector<1x4x1xf32>
    %538 = arith.mulf %537, %193 : vector<1x4x1xf32>
    %539 = vector.broadcast %83 : f32 to vector<1x4x1xf32>
    %540 = arith.addf %539, %538 : vector<1x4x1xf32>
    %c1_i32_92 = arith.constant 1 : i32
    %541 = tpu.dynamic_rotate %513 by %c1_i32_92 dim 2 : vector<1x4x256xf32>, i32 -> vector<1x4x256xf32>
    %542 = vector.broadcast %540 : vector<1x4x1xf32> to vector<1x4x256xf32>
    %543 = arith.mulf %541, %542 : vector<1x4x256xf32>
    %544 = vector.broadcast %202 : vector<1x1x256xf32> to vector<1x4x256xf32>
    %545 = arith.mulf %543, %544 : vector<1x4x256xf32>
    %546 = arith.addf %535, %545 : vector<1x4x256xf32>
    %547 = arith.subf %35, %84 : f32
    %548 = vector.broadcast %547 : f32 to vector<1x4x1xf32>
    %549 = arith.mulf %548, %193 : vector<1x4x1xf32>
    %550 = vector.broadcast %84 : f32 to vector<1x4x1xf32>
    %551 = arith.addf %550, %549 : vector<1x4x1xf32>
    %552 = vector.broadcast %551 : vector<1x4x1xf32> to vector<1x4x256xf32>
    %553 = arith.mulf %513, %552 : vector<1x4x256xf32>
    %554 = arith.addf %546, %553 : vector<1x4x256xf32>
    %555 = arith.subf %36, %85 : f32
    %556 = vector.broadcast %555 : f32 to vector<1x4x1xf32>
    %557 = arith.mulf %556, %193 : vector<1x4x1xf32>
    %558 = vector.broadcast %85 : f32 to vector<1x4x1xf32>
    %559 = arith.addf %558, %557 : vector<1x4x1xf32>
    %c255_i32_93 = arith.constant 255 : i32
    %560 = tpu.dynamic_rotate %513 by %c255_i32_93 dim 2 : vector<1x4x256xf32>, i32 -> vector<1x4x256xf32>
    %561 = vector.broadcast %559 : vector<1x4x1xf32> to vector<1x4x256xf32>
    %562 = arith.mulf %560, %561 : vector<1x4x256xf32>
    %563 = vector.broadcast %205 : vector<1x1x256xf32> to vector<1x4x256xf32>
    %564 = arith.mulf %562, %563 : vector<1x4x256xf32>
    %565 = arith.addf %554, %564 : vector<1x4x256xf32>
    %566 = arith.subf %37, %86 : f32
    %567 = vector.broadcast %566 : f32 to vector<1x4x1xf32>
    %568 = arith.mulf %567, %193 : vector<1x4x1xf32>
    %569 = vector.broadcast %86 : f32 to vector<1x4x1xf32>
    %570 = arith.addf %569, %568 : vector<1x4x1xf32>
    %c254_i32_94 = arith.constant 254 : i32
    %571 = tpu.dynamic_rotate %513 by %c254_i32_94 dim 2 : vector<1x4x256xf32>, i32 -> vector<1x4x256xf32>
    %572 = vector.broadcast %570 : vector<1x4x1xf32> to vector<1x4x256xf32>
    %573 = arith.mulf %571, %572 : vector<1x4x256xf32>
    %574 = vector.broadcast %208 : vector<1x1x256xf32> to vector<1x4x256xf32>
    %575 = arith.mulf %573, %574 : vector<1x4x256xf32>
    %576 = arith.addf %565, %575 : vector<1x4x256xf32>
    %577 = arith.subf %38, %87 : f32
    %578 = vector.broadcast %577 : f32 to vector<1x4x1xf32>
    %579 = arith.mulf %578, %193 : vector<1x4x1xf32>
    %580 = vector.broadcast %87 : f32 to vector<1x4x1xf32>
    %581 = arith.addf %580, %579 : vector<1x4x1xf32>
    %c253_i32_95 = arith.constant 253 : i32
    %582 = tpu.dynamic_rotate %513 by %c253_i32_95 dim 2 : vector<1x4x256xf32>, i32 -> vector<1x4x256xf32>
    %583 = vector.broadcast %581 : vector<1x4x1xf32> to vector<1x4x256xf32>
    %584 = arith.mulf %582, %583 : vector<1x4x256xf32>
    %585 = vector.broadcast %211 : vector<1x1x256xf32> to vector<1x4x256xf32>
    %586 = arith.mulf %584, %585 : vector<1x4x256xf32>
    %587 = arith.addf %576, %586 : vector<1x4x256xf32>
    %c0_96 = arith.constant 0 : index
    %c0_97 = arith.constant 0 : index
    %c160 = arith.constant 160 : index
    %588 = vector.load %arg6[%c0_96, %c0_97, %c160] : memref<1x4x435xf32, #tpu.memory_space<vmem>>, vector<1x4x256xf32>
    %589 = arith.subf %39, %88 : f32
    %590 = vector.broadcast %589 : f32 to vector<1x4x1xf32>
    %591 = arith.mulf %590, %193 : vector<1x4x1xf32>
    %592 = vector.broadcast %88 : f32 to vector<1x4x1xf32>
    %593 = arith.addf %592, %591 : vector<1x4x1xf32>
    %c3_i32_98 = arith.constant 3 : i32
    %594 = tpu.dynamic_rotate %588 by %c3_i32_98 dim 2 : vector<1x4x256xf32>, i32 -> vector<1x4x256xf32>
    %595 = vector.broadcast %593 : vector<1x4x1xf32> to vector<1x4x256xf32>
    %596 = arith.mulf %594, %595 : vector<1x4x256xf32>
    %597 = vector.broadcast %196 : vector<1x1x256xf32> to vector<1x4x256xf32>
    %598 = arith.mulf %596, %597 : vector<1x4x256xf32>
    %599 = arith.addf %587, %598 : vector<1x4x256xf32>
    %600 = arith.subf %40, %89 : f32
    %601 = vector.broadcast %600 : f32 to vector<1x4x1xf32>
    %602 = arith.mulf %601, %193 : vector<1x4x1xf32>
    %603 = vector.broadcast %89 : f32 to vector<1x4x1xf32>
    %604 = arith.addf %603, %602 : vector<1x4x1xf32>
    %c2_i32_99 = arith.constant 2 : i32
    %605 = tpu.dynamic_rotate %588 by %c2_i32_99 dim 2 : vector<1x4x256xf32>, i32 -> vector<1x4x256xf32>
    %606 = vector.broadcast %604 : vector<1x4x1xf32> to vector<1x4x256xf32>
    %607 = arith.mulf %605, %606 : vector<1x4x256xf32>
    %608 = vector.broadcast %199 : vector<1x1x256xf32> to vector<1x4x256xf32>
    %609 = arith.mulf %607, %608 : vector<1x4x256xf32>
    %610 = arith.addf %599, %609 : vector<1x4x256xf32>
    %611 = arith.subf %41, %90 : f32
    %612 = vector.broadcast %611 : f32 to vector<1x4x1xf32>
    %613 = arith.mulf %612, %193 : vector<1x4x1xf32>
    %614 = vector.broadcast %90 : f32 to vector<1x4x1xf32>
    %615 = arith.addf %614, %613 : vector<1x4x1xf32>
    %c1_i32_100 = arith.constant 1 : i32
    %616 = tpu.dynamic_rotate %588 by %c1_i32_100 dim 2 : vector<1x4x256xf32>, i32 -> vector<1x4x256xf32>
    %617 = vector.broadcast %615 : vector<1x4x1xf32> to vector<1x4x256xf32>
    %618 = arith.mulf %616, %617 : vector<1x4x256xf32>
    %619 = vector.broadcast %202 : vector<1x1x256xf32> to vector<1x4x256xf32>
    %620 = arith.mulf %618, %619 : vector<1x4x256xf32>
    %621 = arith.addf %610, %620 : vector<1x4x256xf32>
    %622 = arith.subf %42, %91 : f32
    %623 = vector.broadcast %622 : f32 to vector<1x4x1xf32>
    %624 = arith.mulf %623, %193 : vector<1x4x1xf32>
    %625 = vector.broadcast %91 : f32 to vector<1x4x1xf32>
    %626 = arith.addf %625, %624 : vector<1x4x1xf32>
    %627 = vector.broadcast %626 : vector<1x4x1xf32> to vector<1x4x256xf32>
    %628 = arith.mulf %588, %627 : vector<1x4x256xf32>
    %629 = arith.addf %621, %628 : vector<1x4x256xf32>
    %630 = arith.subf %43, %92 : f32
    %631 = vector.broadcast %630 : f32 to vector<1x4x1xf32>
    %632 = arith.mulf %631, %193 : vector<1x4x1xf32>
    %633 = vector.broadcast %92 : f32 to vector<1x4x1xf32>
    %634 = arith.addf %633, %632 : vector<1x4x1xf32>
    %c255_i32_101 = arith.constant 255 : i32
    %635 = tpu.dynamic_rotate %588 by %c255_i32_101 dim 2 : vector<1x4x256xf32>, i32 -> vector<1x4x256xf32>
    %636 = vector.broadcast %634 : vector<1x4x1xf32> to vector<1x4x256xf32>
    %637 = arith.mulf %635, %636 : vector<1x4x256xf32>
    %638 = vector.broadcast %205 : vector<1x1x256xf32> to vector<1x4x256xf32>
    %639 = arith.mulf %637, %638 : vector<1x4x256xf32>
    %640 = arith.addf %629, %639 : vector<1x4x256xf32>
    %641 = arith.subf %44, %93 : f32
    %642 = vector.broadcast %641 : f32 to vector<1x4x1xf32>
    %643 = arith.mulf %642, %193 : vector<1x4x1xf32>
    %644 = vector.broadcast %93 : f32 to vector<1x4x1xf32>
    %645 = arith.addf %644, %643 : vector<1x4x1xf32>
    %c254_i32_102 = arith.constant 254 : i32
    %646 = tpu.dynamic_rotate %588 by %c254_i32_102 dim 2 : vector<1x4x256xf32>, i32 -> vector<1x4x256xf32>
    %647 = vector.broadcast %645 : vector<1x4x1xf32> to vector<1x4x256xf32>
    %648 = arith.mulf %646, %647 : vector<1x4x256xf32>
    %649 = vector.broadcast %208 : vector<1x1x256xf32> to vector<1x4x256xf32>
    %650 = arith.mulf %648, %649 : vector<1x4x256xf32>
    %651 = arith.addf %640, %650 : vector<1x4x256xf32>
    %652 = arith.subf %45, %94 : f32
    %653 = vector.broadcast %652 : f32 to vector<1x4x1xf32>
    %654 = arith.mulf %653, %193 : vector<1x4x1xf32>
    %655 = vector.broadcast %94 : f32 to vector<1x4x1xf32>
    %656 = arith.addf %655, %654 : vector<1x4x1xf32>
    %c253_i32_103 = arith.constant 253 : i32
    %657 = tpu.dynamic_rotate %588 by %c253_i32_103 dim 2 : vector<1x4x256xf32>, i32 -> vector<1x4x256xf32>
    %658 = vector.broadcast %656 : vector<1x4x1xf32> to vector<1x4x256xf32>
    %659 = arith.mulf %657, %658 : vector<1x4x256xf32>
    %660 = vector.broadcast %211 : vector<1x1x256xf32> to vector<1x4x256xf32>
    %661 = arith.mulf %659, %660 : vector<1x4x256xf32>
    %662 = arith.addf %651, %661 : vector<1x4x256xf32>
    %c0_104 = arith.constant 0 : index
    %c0_105 = arith.constant 0 : index
    %c176 = arith.constant 176 : index
    %663 = vector.load %arg6[%c0_104, %c0_105, %c176] : memref<1x4x435xf32, #tpu.memory_space<vmem>>, vector<1x4x256xf32>
    %664 = arith.subf %46, %95 : f32
    %665 = vector.broadcast %664 : f32 to vector<1x4x1xf32>
    %666 = arith.mulf %665, %193 : vector<1x4x1xf32>
    %667 = vector.broadcast %95 : f32 to vector<1x4x1xf32>
    %668 = arith.addf %667, %666 : vector<1x4x1xf32>
    %c3_i32_106 = arith.constant 3 : i32
    %669 = tpu.dynamic_rotate %663 by %c3_i32_106 dim 2 : vector<1x4x256xf32>, i32 -> vector<1x4x256xf32>
    %670 = vector.broadcast %668 : vector<1x4x1xf32> to vector<1x4x256xf32>
    %671 = arith.mulf %669, %670 : vector<1x4x256xf32>
    %672 = vector.broadcast %196 : vector<1x1x256xf32> to vector<1x4x256xf32>
    %673 = arith.mulf %671, %672 : vector<1x4x256xf32>
    %674 = arith.addf %662, %673 : vector<1x4x256xf32>
    %675 = arith.subf %47, %96 : f32
    %676 = vector.broadcast %675 : f32 to vector<1x4x1xf32>
    %677 = arith.mulf %676, %193 : vector<1x4x1xf32>
    %678 = vector.broadcast %96 : f32 to vector<1x4x1xf32>
    %679 = arith.addf %678, %677 : vector<1x4x1xf32>
    %c2_i32_107 = arith.constant 2 : i32
    %680 = tpu.dynamic_rotate %663 by %c2_i32_107 dim 2 : vector<1x4x256xf32>, i32 -> vector<1x4x256xf32>
    %681 = vector.broadcast %679 : vector<1x4x1xf32> to vector<1x4x256xf32>
    %682 = arith.mulf %680, %681 : vector<1x4x256xf32>
    %683 = vector.broadcast %199 : vector<1x1x256xf32> to vector<1x4x256xf32>
    %684 = arith.mulf %682, %683 : vector<1x4x256xf32>
    %685 = arith.addf %674, %684 : vector<1x4x256xf32>
    %686 = arith.subf %48, %97 : f32
    %687 = vector.broadcast %686 : f32 to vector<1x4x1xf32>
    %688 = arith.mulf %687, %193 : vector<1x4x1xf32>
    %689 = vector.broadcast %97 : f32 to vector<1x4x1xf32>
    %690 = arith.addf %689, %688 : vector<1x4x1xf32>
    %c1_i32_108 = arith.constant 1 : i32
    %691 = tpu.dynamic_rotate %663 by %c1_i32_108 dim 2 : vector<1x4x256xf32>, i32 -> vector<1x4x256xf32>
    %692 = vector.broadcast %690 : vector<1x4x1xf32> to vector<1x4x256xf32>
    %693 = arith.mulf %691, %692 : vector<1x4x256xf32>
    %694 = vector.broadcast %202 : vector<1x1x256xf32> to vector<1x4x256xf32>
    %695 = arith.mulf %693, %694 : vector<1x4x256xf32>
    %696 = arith.addf %685, %695 : vector<1x4x256xf32>
    %697 = arith.subf %49, %98 : f32
    %698 = vector.broadcast %697 : f32 to vector<1x4x1xf32>
    %699 = arith.mulf %698, %193 : vector<1x4x1xf32>
    %700 = vector.broadcast %98 : f32 to vector<1x4x1xf32>
    %701 = arith.addf %700, %699 : vector<1x4x1xf32>
    %702 = vector.broadcast %701 : vector<1x4x1xf32> to vector<1x4x256xf32>
    %703 = arith.mulf %663, %702 : vector<1x4x256xf32>
    %704 = arith.addf %696, %703 : vector<1x4x256xf32>
    %705 = arith.subf %50, %99 : f32
    %706 = vector.broadcast %705 : f32 to vector<1x4x1xf32>
    %707 = arith.mulf %706, %193 : vector<1x4x1xf32>
    %708 = vector.broadcast %99 : f32 to vector<1x4x1xf32>
    %709 = arith.addf %708, %707 : vector<1x4x1xf32>
    %c255_i32_109 = arith.constant 255 : i32
    %710 = tpu.dynamic_rotate %663 by %c255_i32_109 dim 2 : vector<1x4x256xf32>, i32 -> vector<1x4x256xf32>
    %711 = vector.broadcast %709 : vector<1x4x1xf32> to vector<1x4x256xf32>
    %712 = arith.mulf %710, %711 : vector<1x4x256xf32>
    %713 = vector.broadcast %205 : vector<1x1x256xf32> to vector<1x4x256xf32>
    %714 = arith.mulf %712, %713 : vector<1x4x256xf32>
    %715 = arith.addf %704, %714 : vector<1x4x256xf32>
    %716 = arith.subf %51, %100 : f32
    %717 = vector.broadcast %716 : f32 to vector<1x4x1xf32>
    %718 = arith.mulf %717, %193 : vector<1x4x1xf32>
    %719 = vector.broadcast %100 : f32 to vector<1x4x1xf32>
    %720 = arith.addf %719, %718 : vector<1x4x1xf32>
    %c254_i32_110 = arith.constant 254 : i32
    %721 = tpu.dynamic_rotate %663 by %c254_i32_110 dim 2 : vector<1x4x256xf32>, i32 -> vector<1x4x256xf32>
    %722 = vector.broadcast %720 : vector<1x4x1xf32> to vector<1x4x256xf32>
    %723 = arith.mulf %721, %722 : vector<1x4x256xf32>
    %724 = vector.broadcast %208 : vector<1x1x256xf32> to vector<1x4x256xf32>
    %725 = arith.mulf %723, %724 : vector<1x4x256xf32>
    %726 = arith.addf %715, %725 : vector<1x4x256xf32>
    %727 = arith.subf %52, %101 : f32
    %728 = vector.broadcast %727 : f32 to vector<1x4x1xf32>
    %729 = arith.mulf %728, %193 : vector<1x4x1xf32>
    %730 = vector.broadcast %101 : f32 to vector<1x4x1xf32>
    %731 = arith.addf %730, %729 : vector<1x4x1xf32>
    %c253_i32_111 = arith.constant 253 : i32
    %732 = tpu.dynamic_rotate %663 by %c253_i32_111 dim 2 : vector<1x4x256xf32>, i32 -> vector<1x4x256xf32>
    %733 = vector.broadcast %731 : vector<1x4x1xf32> to vector<1x4x256xf32>
    %734 = arith.mulf %732, %733 : vector<1x4x256xf32>
    %735 = vector.broadcast %211 : vector<1x1x256xf32> to vector<1x4x256xf32>
    %736 = arith.mulf %734, %735 : vector<1x4x256xf32>
    %737 = arith.addf %726, %736 : vector<1x4x256xf32>
    %738 = vector.extract_strided_slice %737 {offsets = [0, 0, 0], sizes = [1, 2, 256], strides = [1, 1, 1]} : vector<1x4x256xf32> to vector<1x2x256xf32>
    %739 = vector.extract_strided_slice %737 {offsets = [0, 2, 0], sizes = [1, 2, 256], strides = [1, 1, 1]} : vector<1x4x256xf32> to vector<1x2x256xf32>
    %740 = arith.addf %738, %739 : vector<1x2x256xf32>
    %cst_112 = arith.constant 0.999994993 : f32
    %741 = vector.broadcast %cst_112 : f32 to vector<1x2x256xf32>
    %742 = arith.mulf %740, %741 : vector<1x2x256xf32>
    %cst_113 = arith.constant 0.000000e+00 : f32
    %743 = vector.broadcast %cst_113 : f32 to vector<1x2x256xf32>
    %744 = arith.maximumf %742, %743 : vector<1x2x256xf32>
    %745 = arith.negf %744 : vector<1x2x256xf32>
    %746 = math.exp %745 : vector<1x2x256xf32>
    %cst_114 = arith.constant 1.000000e+00 : f32
    %747 = vector.broadcast %cst_114 : f32 to vector<1x2x256xf32>
    %748 = arith.addf %747, %746 : vector<1x2x256xf32>
    %749 = arith.divf %747, %748 : vector<1x2x256xf32>
    %750 = vector.extract_strided_slice %749 {offsets = [0, 0, 0], sizes = [1, 1, 256], strides = [1, 1, 1]} : vector<1x2x256xf32> to vector<1x1x256xf32>
    %751 = vector.extract_strided_slice %749 {offsets = [0, 1, 0], sizes = [1, 1, 256], strides = [1, 1, 1]} : vector<1x2x256xf32> to vector<1x1x256xf32>
    %752 = vector.broadcast %163 : vector<1x8x1xf32> to vector<1x8x256xf32>
    %753 = vector.broadcast %750 : vector<1x1x256xf32> to vector<1x8x256xf32>
    %754 = arith.mulf %752, %753 : vector<1x8x256xf32>
    %cst_115 = arith.constant 1.000000e+00 : f32
    %755 = vector.broadcast %cst_115 : f32 to vector<1x8x256xf32>
    %756 = arith.addf %755, %754 : vector<1x8x256xf32>
    %757 = vector.broadcast %164 : vector<1x8x1xf32> to vector<1x8x256xf32>
    %758 = vector.broadcast %751 : vector<1x1x256xf32> to vector<1x8x256xf32>
    %759 = arith.mulf %757, %758 : vector<1x8x256xf32>
    %760 = arith.addf %756, %759 : vector<1x8x256xf32>
    %761 = arith.mulf %0, %760 : vector<1x8x256xf32>
    %cst_116 = arith.constant 0.000000e+00 : f32
    %762 = vector.broadcast %cst_116 : f32 to vector<1x8x256xf32>
    %763 = arith.maximumf %761, %762 : vector<1x8x256xf32>
    %c0_117 = arith.constant 0 : index
    %c0_118 = arith.constant 0 : index
    %c0_119 = arith.constant 0 : index
    %764 = vector.load %arg5[%c0_117, %c0_118, %c0_119] : memref<1x8x256xf32, #tpu.memory_space<vmem>>, vector<1x8x256xf32>
    tpu.vector_store %arg5[%c0_117, %c0_118, %c0_119], %763 {strides = array<i32>} : memref<1x8x256xf32, #tpu.memory_space<vmem>>, vector<1x8x256xf32>,
    return
  }
  func.func @transform_0(%arg0: i32) -> i32 {
    %c0_i32 = arith.constant 0 : i32
    %c0_i32_0 = arith.constant 0 : i32
    return %c0_i32 : i32
  }
  func.func @transform_1(%arg0: i32) -> (i32, i32, i32) {
    %c0_i32 = arith.constant 0 : i32
    %c0_i32_0 = arith.constant 0 : i32
    %c0_i32_1 = arith.constant 0 : i32
    %c0_i32_2 = arith.constant 0 : i32
    return %c0_i32, %c0_i32_0, %c0_i32_1 : i32, i32, i32
  }
  func.func @transform_2(%arg0: i32) -> (i32, i32, i32) {
    %c0_i32 = arith.constant 0 : i32
    %c0_i32_0 = arith.constant 0 : i32
    %c0_i32_1 = arith.constant 0 : i32
    %c0_i32_2 = arith.constant 0 : i32
    return %c0_i32, %c0_i32_0, %c0_i32_1 : i32, i32, i32
  }
  func.func @transform_3(%arg0: i32) -> (i32, i32, i32) {
    %c0_i32 = arith.constant 0 : i32
    %c0_i32_0 = arith.constant 0 : i32
    %c0_i32_1 = arith.constant 0 : i32
    return %arg0, %c0_i32, %c0_i32_0 : i32, i32, i32
  }
  func.func @transform_4(%arg0: i32) -> (i32, i32, i32) {
    %c0_i32 = arith.constant 0 : i32
    %c0_i32_0 = arith.constant 0 : i32
    %c0_i32_1 = arith.constant 0 : i32
    return %arg0, %c0_i32, %c0_i32_0 : i32, i32, i32
  }
}

</mosaic_0001>

<llo_original>
// kernel: tpu_custom_call.1
$region0: #{tpu_custom_call.1}
  #allocation0 [shape = 'u32[]', space=smem, size = 0x4, offset = 0x4, fixed_abs, tag = 'smem constant byte address 0x4 - core index']
  #allocation1 [shape = 'u32[72,128]{1,0:T(1,128)}', space=vmem, size = 0x9000, scoped, tag = 'internal scratch']
  #allocation2 [shape = 'f32[1,4,435]{2,1,0:T(4,128)}', space=vmem, size = 0x2000, scoped, tag = 'scratch operand']
  %s0 = inlined_call_operand.hbm [shape: f32[101], index: 0, kind: input, shape index: {}]
  %s1 = inlined_call_operand.hbm [shape: f32[3,8,8], index: 1, kind: input, shape index: {}]
  %s2 = inlined_call_operand.hbm [shape: f32[7,1,256], index: 2, kind: input, shape index: {}]
  %s3 = inlined_call_operand.hbm [shape: f32[2,8,256], index: 3, kind: input, shape index: {}]
  %s4 = inlined_call_operand.hbm [shape: f32[2,8,256], index: 4, kind: output, shape index: {}]
  %s5 = sld [smem:[#allocation0]]
  $region65: #{tpu_custom_call.1} parent=0
    _
  %s7 = ssub.s32 1, %s5
  %s8 = scalar_select 0, %s7, %s5
  $region1: #{tpu_custom_call.1} parent=0
    #allocation3 [shape = 'u8[512]{0}', space=smem, size = 0x200, scoped, tag = 'input window, operand 0, single buffered']
    #allocation4 [shape = 's32[2]{0}', space=sflag, size = 0x8, scoped, tag = 'scoped memory for tpu_custom_call.1']
    #allocation5 [shape = 's32[2]{0}', space=sflag, size = 0x8, scoped, tag = 'scoped memory for tpu_custom_call.1']
    #allocation6 [shape = 's32[2]{0}', space=sflag, size = 0x8, scoped, tag = 'scoped memory for tpu_custom_call.1']
    #allocation7 [shape = 'u8[12288]{0}', space=vmem, size = 0x3000, scoped, tag = 'input window, operand 1, single buffered']
    #allocation8 [shape = 'u8[7168]{0}', space=vmem, size = 0x1c00, scoped, tag = 'input window, operand 2, single buffered']
    #allocation9 [shape = 's32[1]{0}', space=sflag, size = 0x4, scoped, tag = 'scoped memory for tpu_custom_call.1']
    #allocation10 [shape = 'u8[16384]{0}', space=vmem, size = 0x4000, scoped, tag = 'input window, operand 3']
    #allocation11 [shape = 'u8[16384]{0}', space=vmem, size = 0x4000, scoped, tag = 'output window, operand 0']
    %9 = vsyncpa [#allocation6], 0
    %10 = vsyncpa [#allocation4], 0
    %11 = vsyncpa [#allocation9], 0
    %12 = vsyncpa [#allocation5], 0
    %s13 = scalar_lea.sflag [#allocation5], 1
    %14 = vsyncpa %s13, 0
    loop: start=0, step=1, limit=4
    $region2: #{tpu_custom_call.1} parent=1 // loop_pre_header
      _
    $region3: #{tpu_custom_call.1} parent=1 // loop_header
      %s16 = sphi 0, %s20
      %p17 = scmp.ge.s32.totalorder %s16, 4
      %s24 = sphi 0, %s24
      %s26 = sphi 0, %s24
      %s27 = sphi 0, %s26
      %s41 = sphi 0, %s27
      %s45 = sphi 0, %s45
      %s47 = sphi 0, %s45
      %s48 = sphi 0, %s47
      %s62 = sphi 0, %s48
      %s66 = sphi 0, %s66
      %s68 = sphi 0, %s66
      %s69 = sphi 0, %s68
      %s83 = sphi 0, %s69
      %s89 = sphi 0, %s91
      %s92 = sphi 0, %s89
      %s93 = sphi 0, %s92
      %s109 = sphi 0, %s93
      %s115 = sphi 0, %s117
      %s118 = sphi 0, %s115
      %s119 = sphi 0, %s118
      %s135 = sphi 0, %s119
    $region4: #{tpu_custom_call.1} parent=1 // loop_header_branch
      %19 = sbr.rel (%p17) target = $region8
    $region5: #{tpu_custom_call.1} parent=1 // loop_body
      %s21 = ssub.s32 %s16, 1
      %s22 = ssub.s32 %s16, 2
      %s23 = sadd.s32 %s16, 1
      %s25 = sadd.s32 %s24, 1
      %p28 = scmp.eq.s32.totalorder %s16, 1
      %p29 = scmp.ne.s32.totalorder %s24, %s26
      %p30 = scmp.eq.s32.totalorder %s16, 0
      %p31 = por %p29, %p30
      %p32 = scmp.ne.s32.totalorder %s24, %s26
      %p33 = scmp.eq.s32.totalorder %s21, 1
      %p34 = por %p32, %p33
      %p35 = scmp.ne.s32.totalorder %s26, %s27
      %p36 = scmp.eq.s32.totalorder %s21, 0
      %p37 = por %p35, %p36
      %p38 = scmp.ne.s32.totalorder %s26, %s27
      %p39 = scmp.eq.s32.totalorder %s22, 1
      %p40 = por %p38, %p39
      %p42 = scmp.ne.s32.totalorder %s27, %s41
      %p43 = scmp.eq.s32.totalorder %s22, 0
      %p44 = por %p42, %p43
      %s46 = sadd.s32 %s45, 1
      %p49 = scmp.eq.s32.totalorder %s16, 1
      %p50 = scmp.ne.s32.totalorder %s45, %s47
      %p51 = scmp.eq.s32.totalorder %s16, 0
      %p52 = por %p50, %p51
      %p53 = scmp.ne.s32.totalorder %s45, %s47
      %p54 = scmp.eq.s32.totalorder %s21, 1
      %p55 = por %p53, %p54
      %p56 = scmp.ne.s32.totalorder %s47, %s48
      %p57 = scmp.eq.s32.totalorder %s21, 0
      %p58 = por %p56, %p57
      %p59 = scmp.ne.s32.totalorder %s47, %s48
      %p60 = scmp.eq.s32.totalorder %s22, 1
      %p61 = por %p59, %p60
      %p63 = scmp.ne.s32.totalorder %s48, %s62
      %p64 = scmp.eq.s32.totalorder %s22, 0
      %p65 = por %p63, %p64
      %s67 = sadd.s32 %s66, 1
      %p70 = scmp.eq.s32.totalorder %s16, 1
      %p71 = scmp.ne.s32.totalorder %s66, %s68
      %p72 = scmp.eq.s32.totalorder %s16, 0
      %p73 = por %p71, %p72
      %p74 = scmp.ne.s32.totalorder %s66, %s68
      %p75 = scmp.eq.s32.totalorder %s21, 1
      %p76 = por %p74, %p75
      %p77 = scmp.ne.s32.totalorder %s68, %s69
      %p78 = scmp.eq.s32.totalorder %s21, 0
      %p79 = por %p77, %p78
      %p80 = scmp.ne.s32.totalorder %s68, %s69
      %p81 = scmp.eq.s32.totalorder %s22, 1
      %p82 = por %p80, %p81
      %p84 = scmp.ne.s32.totalorder %s69, %s83
      %p85 = scmp.eq.s32.totalorder %s22, 0
      %p86 = por %p84, %p85
      %s87 = ssub.s32 %s16, %s23
      %p88 = scmp.eq.s32.totalorder %s87, 0
      %s90 = sadd.s32 %s89, 1
      %s91 = scalar_select %p88, %s89, %s90
      %p94 = pneg %p88
      %p95 = scmp.eq.s32.totalorder %s16, 1
      %p96 = por %p94, %p95
      %p97 = scmp.ne.s32.totalorder %s89, %s92
      %p98 = scmp.eq.s32.totalorder %s16, 0
      %p99 = por %p97, %p98
      %p100 = scmp.ne.s32.totalorder %s89, %s92
      %p101 = scmp.eq.s32.totalorder %s21, 1
      %p102 = por %p100, %p101
      %p103 = scmp.ne.s32.totalorder %s92, %s93
      %p104 = scmp.eq.s32.totalorder %s21, 0
      %p105 = por %p103, %p104
      %p106 = scmp.ne.s32.totalorder %s92, %s93
      %p107 = scmp.eq.s32.totalorder %s22, 1
      %p108 = por %p106, %p107
      %p110 = scmp.ne.s32.totalorder %s93, %s109
      %p111 = scmp.eq.s32.totalorder %s22, 0
      %p112 = por %p110, %p111
      %s113 = ssub.s32 %s16, %s23
      %p114 = scmp.eq.s32.totalorder %s113, 0
      %s116 = sadd.s32 %s115, 1
      %s117 = scalar_select %p114, %s115, %s116
      %p120 = pneg %p114
      %p121 = scmp.eq.s32.totalorder %s16, 1
      %p122 = por %p120, %p121
      %p123 = scmp.ne.s32.totalorder %s115, %s118
      %p124 = scmp.eq.s32.totalorder %s16, 0
      %p125 = por %p123, %p124
      %p126 = scmp.ne.s32.totalorder %s115, %s118
      %p127 = scmp.eq.s32.totalorder %s21, 1
      %p128 = por %p126, %p127
      %p129 = scmp.ne.s32.totalorder %s118, %s119
      %p130 = scmp.eq.s32.totalorder %s21, 0
      %p131 = por %p129, %p130
      %p132 = scmp.ne.s32.totalorder %s118, %s119
      %p133 = scmp.eq.s32.totalorder %s22, 1
      %p134 = por %p132, %p133
      %p136 = scmp.ne.s32.totalorder %s119, %s135
      %p137 = scmp.eq.s32.totalorder %s22, 0
      %p138 = por %p136, %p137
      %p139 = scmp.le.s32.totalorder 1, %s16
      %p140 = scmp.lt.s32.totalorder %s16, 3
      %p141 = pnand %p139, %p140
      %p142 = pneg %p141
      // Predicated region
      $region9: #{tpu_custom_call.1} parent=5 // pred_check
        _
      $region10: #{tpu_custom_call.1} parent=5 // pred_check_branch
        %144 = sbr.rel (%p141) target = $region12
      $region11: #{tpu_custom_call.1} parent=5 // pred_region
        %s145 = ssub.s32 %s16, 1
        // Predicated region
        $region13: #{tpu_custom_call.1} parent=11 // pred_check
          %p146 = pneg %p37
        $region14: #{tpu_custom_call.1} parent=11 // pred_check_branch
          %148 = sbr.rel (%p146) target = $region16
        $region15: #{tpu_custom_call.1} parent=11 // pred_region
          %150 = vsyncadd [#allocation6], 0
          %s152 = sshll.u32 %s0, 4
          %s153 = int_to_ptr.hbm [resolvable:$true] %s152
          %155 = dma.hbm_to_smem %s153, 16, [#allocation3], [#allocation6]
        $region16: #{tpu_custom_call.1} parent=11 // pred_fallthru
          _
        // Predicated region
        $region17: #{tpu_custom_call.1} parent=11 // pred_check
          %p156 = pneg %p58
        $region18: #{tpu_custom_call.1} parent=11 // pred_check_branch
          %158 = sbr.rel (%p156) target = $region20
        $region19: #{tpu_custom_call.1} parent=11 // pred_region
          %160 = vsyncadd [#allocation4], 0
          %s161 = sshll.u32 %s1, 4
          %s162 = int_to_ptr.hbm [resolvable:$true] %s161
          %s163 = sshll.u32 [#allocation7], 4
          %s164 = int_to_ptr.vmem [resolvable:$true] %s163
          %169 = dma.hbm_to_vmem [thread:$0]  %s162, 384, %s164, [#allocation4], 128, 128, 8
        $region20: #{tpu_custom_call.1} parent=11 // pred_fallthru
          _
        // Predicated region
        $region21: #{tpu_custom_call.1} parent=11 // pred_check
          %p170 = pneg %p79
        $region22: #{tpu_custom_call.1} parent=11 // pred_check_branch
          %172 = sbr.rel (%p170) target = $region24
        $region23: #{tpu_custom_call.1} parent=11 // pred_region
          %174 = vsyncadd [#allocation9], 0
          %s175 = sshll.u32 %s2, 4
          %s176 = int_to_ptr.hbm [resolvable:$true] %s175
          %s177 = sshll.u32 [#allocation8], 4
          %s178 = int_to_ptr.vmem [resolvable:$true] %s177
          %183 = dma.hbm_to_vmem [thread:$0]  %s176, 224, %s178, [#allocation9], 32, 32, 2
        $region24: #{tpu_custom_call.1} parent=11 // pred_fallthru
          _
      $region12: #{tpu_custom_call.1} parent=5 // pred_fallthru
        _
      %p184 = scmp.lt.s32.totalorder %s16, 2
      // Predicated region
      $region25: #{tpu_custom_call.1} parent=5 // pred_check
        %p185 = pneg %p184
      $region26: #{tpu_custom_call.1} parent=5 // pred_check_branch
        %187 = sbr.rel (%p185) target = $region28
      $region27: #{tpu_custom_call.1} parent=5 // pred_region
        // Predicated region
        $region29: #{tpu_custom_call.1} parent=27 // pred_check
          %p188 = pneg %p99
        $region30: #{tpu_custom_call.1} parent=27 // pred_check_branch
          %190 = sbr.rel (%p188) target = $region32
        $region31: #{tpu_custom_call.1} parent=27 // pred_region
          %s191 = sand.u32 %s16, 1
          %s192 = scalar_lea.sflag [#allocation4], %s191
          %s193 = sand.u32 %s89, 1
          %s194 = smul.addr %s193, 16
          %s195 = scalar_lea.vmem [#allocation10], %s194
          %197 = vsyncadd %s192, 0
          %s198 = smul.addr %s16, 2
          %s199 = smul.addr %s198, 8
          %s200 = scalar_lea.hbm %s3, %s199
          %s202 = sshll.u32 %s200, 4
          %s203 = int_to_ptr.hbm [resolvable:$true] %s202
          %s204 = sshll.u32 %s195, 4
          %s205 = int_to_ptr.vmem [resolvable:$true] %s204
          %207 = dma.hbm_to_vmem [thread:$0]  %s203, 256, %s205, %s192
        $region32: #{tpu_custom_call.1} parent=27 // pred_fallthru
          _
      $region28: #{tpu_custom_call.1} parent=5 // pred_fallthru
        _
      %p208 = scmp.le.s32.totalorder 1, %s16
      %p209 = scmp.lt.s32.totalorder %s16, 3
      %p210 = pnand %p208, %p209
      %p211 = pneg %p210
      // Predicated region
      $region33: #{tpu_custom_call.1} parent=5 // pred_check
        _
      $region34: #{tpu_custom_call.1} parent=5 // pred_check_branch
        %213 = sbr.rel (%p210) target = $region36
      $region35: #{tpu_custom_call.1} parent=5 // pred_region
        %s214 = ssub.s32 %s16, 1
        // Predicated region
        $region37: #{tpu_custom_call.1} parent=35 // pred_check
          %p215 = pneg %p37
        $region38: #{tpu_custom_call.1} parent=35 // pred_check_branch
          %217 = sbr.rel (%p215) target = $region40
        $region39: #{tpu_custom_call.1} parent=35 // pred_region
          %219 = dma.done [#allocation6], 16
        $region40: #{tpu_custom_call.1} parent=35 // pred_fallthru
          _
        // Predicated region
        $region41: #{tpu_custom_call.1} parent=35 // pred_check
          %p220 = pneg %p58
        $region42: #{tpu_custom_call.1} parent=35 // pred_check_branch
          %222 = sbr.rel (%p220) target = $region44
        $region43: #{tpu_custom_call.1} parent=35 // pred_region
          %224 = dma.done [#allocation4], 384
        $region44: #{tpu_custom_call.1} parent=35 // pred_fallthru
          _
        // Predicated region
        $region45: #{tpu_custom_call.1} parent=35 // pred_check
          %p225 = pneg %p79
        $region46: #{tpu_custom_call.1} parent=35 // pred_check_branch
          %227 = sbr.rel (%p225) target = $region48
        $region47: #{tpu_custom_call.1} parent=35 // pred_region
          %229 = dma.done [#allocation9], 224
        $region48: #{tpu_custom_call.1} parent=35 // pred_fallthru
          _
        %s230 = sand.u32 %s21, 1
        %s231 = scalar_lea.sflag [#allocation4], %s230
        %s232 = sand.u32 %s92, 1
        %s233 = smul.addr %s232, 16
        %s234 = scalar_lea.vmem [#allocation10], %s233
        // Predicated region
        $region49: #{tpu_custom_call.1} parent=35 // pred_check
          %p235 = pneg %p105
        $region50: #{tpu_custom_call.1} parent=35 // pred_check_branch
          %237 = sbr.rel (%p235) target = $region52
        $region51: #{tpu_custom_call.1} parent=35 // pred_region
          %239 = dma.done %s231, 256
        $region52: #{tpu_custom_call.1} parent=35 // pred_fallthru
          _
        %240 = sfence
        %p241 = pneg %p37
        %p242 = pneg %p34
        %p243 = pneg %p58
        %p244 = pneg %p55
        %p245 = pneg %p79
        %p246 = pneg %p76
        %s247 = sand.u32 %s21, 1
        %s248 = scalar_lea.sflag [#allocation4], %s247
        %s249 = sand.u32 %s92, 1
        %s250 = smul.addr %s249, 16
        %s251 = scalar_lea.vmem [#allocation10], %s250
        %p252 = pneg %p105
        %p253 = pneg %p102
        %p254 = pneg %p131
        %p255 = pneg %p128
        %s256 = sand.u32 %s118, 1
        %s257 = scalar_lea.sflag [#allocation5], %s256
        %s258 = sand.u32 %s118, 1
        %s259 = smul.addr %s258, 16
        %s260 = scalar_lea.vmem [#allocation11], %s259
        %v261 = vld [vmem:[%s234] sm:$0xff]
        %v262 = vld [vmem:[%s234 + $0x8] sm:$0xff]
        %s263 = sld [smem:[#allocation3]]
        %s264 = sld [smem:[#allocation3 + $0x1]]
        %s265 = sld [smem:[#allocation3 + $0x2]]
        %s266 = sld [smem:[#allocation3 + $0x3]]
        %s267 = sld [smem:[#allocation3 + $0x4]]
        %s268 = sld [smem:[#allocation3 + $0x5]]
        %s269 = sld [smem:[#allocation3 + $0x6]]
        %s270 = sld [smem:[#allocation3 + $0x7]]
        %s271 = sld [smem:[#allocation3 + $0x8]]
        %s272 = sld [smem:[#allocation3 + $0x9]]
        %s273 = sld [smem:[#allocation3 + $0xa]]
        %s274 = sld [smem:[#allocation3 + $0xb]]
        %s275 = sld [smem:[#allocation3 + $0xc]]
        %s276 = sld [smem:[#allocation3 + $0xd]]
        %s277 = sld [smem:[#allocation3 + $0xe]]
        %s278 = sld [smem:[#allocation3 + $0xf]]
        %s279 = sld [smem:[#allocation3 + $0x10]]
        %s280 = sld [smem:[#allocation3 + $0x11]]
        %s281 = sld [smem:[#allocation3 + $0x12]]
        %s282 = sld [smem:[#allocation3 + $0x13]]
        %s283 = sld [smem:[#allocation3 + $0x14]]
        %s284 = sld [smem:[#allocation3 + $0x15]]
        %s285 = sld [smem:[#allocation3 + $0x16]]
        %s286 = sld [smem:[#allocation3 + $0x17]]
        %s287 = sld [smem:[#allocation3 + $0x18]]
        %s288 = sld [smem:[#allocation3 + $0x19]]
        %s289 = sld [smem:[#allocation3 + $0x1a]]
        %s290 = sld [smem:[#allocation3 + $0x1b]]
        %s291 = sld [smem:[#allocation3 + $0x1c]]
        %s292 = sld [smem:[#allocation3 + $0x1d]]
        %s293 = sld [smem:[#allocation3 + $0x1e]]
        %s294 = sld [smem:[#allocation3 + $0x1f]]
        %s295 = sld [smem:[#allocation3 + $0x20]]
        %s296 = sld [smem:[#allocation3 + $0x21]]
        %s297 = sld [smem:[#allocation3 + $0x22]]
        %s298 = sld [smem:[#allocation3 + $0x23]]
        %s299 = sld [smem:[#allocation3 + $0x24]]
        %s300 = sld [smem:[#allocation3 + $0x25]]
        %s301 = sld [smem:[#allocation3 + $0x26]]
        %s302 = sld [smem:[#allocation3 + $0x27]]
        %s303 = sld [smem:[#allocation3 + $0x28]]
        %s304 = sld [smem:[#allocation3 + $0x29]]
        %s305 = sld [smem:[#allocation3 + $0x2a]]
        %s306 = sld [smem:[#allocation3 + $0x2b]]
        %s307 = sld [smem:[#allocation3 + $0x2c]]
        %s308 = sld [smem:[#allocation3 + $0x2d]]
        %s309 = sld [smem:[#allocation3 + $0x2e]]
        %s310 = sld [smem:[#allocation3 + $0x2f]]
        %s311 = sld [smem:[#allocation3 + $0x30]]
        %s312 = sld [smem:[#allocation3 + $0x31]]
        %s313 = sld [smem:[#allocation3 + $0x32]]
        %s314 = sld [smem:[#allocation3 + $0x33]]
        %s315 = sld [smem:[#allocation3 + $0x34]]
        %s316 = sld [smem:[#allocation3 + $0x35]]
        %s317 = sld [smem:[#allocation3 + $0x36]]
        %s318 = sld [smem:[#allocation3 + $0x37]]
        %s319 = sld [smem:[#allocation3 + $0x38]]
        %s320 = sld [smem:[#allocation3 + $0x39]]
        %s321 = sld [smem:[#allocation3 + $0x3a]]
        %s322 = sld [smem:[#allocation3 + $0x3b]]
        %s323 = sld [smem:[#allocation3 + $0x3c]]
        %s324 = sld [smem:[#allocation3 + $0x3d]]
        %s325 = sld [smem:[#allocation3 + $0x3e]]
        %s326 = sld [smem:[#allocation3 + $0x3f]]
        %s327 = sld [smem:[#allocation3 + $0x40]]
        %s328 = sld [smem:[#allocation3 + $0x41]]
        %s329 = sld [smem:[#allocation3 + $0x42]]
        %s330 = sld [smem:[#allocation3 + $0x43]]
        %s331 = sld [smem:[#allocation3 + $0x44]]
        %s332 = sld [smem:[#allocation3 + $0x45]]
        %s333 = sld [smem:[#allocation3 + $0x46]]
        %s334 = sld [smem:[#allocation3 + $0x47]]
        %s335 = sld [smem:[#allocation3 + $0x48]]
        %s336 = sld [smem:[#allocation3 + $0x49]]
        %s337 = sld [smem:[#allocation3 + $0x4a]]
        %s338 = sld [smem:[#allocation3 + $0x4b]]
        %s339 = sld [smem:[#allocation3 + $0x4c]]
        %s340 = sld [smem:[#allocation3 + $0x4d]]
        %s341 = sld [smem:[#allocation3 + $0x4e]]
        %s342 = sld [smem:[#allocation3 + $0x4f]]
        %s343 = sld [smem:[#allocation3 + $0x50]]
        %s344 = sld [smem:[#allocation3 + $0x51]]
        %s345 = sld [smem:[#allocation3 + $0x52]]
        %s346 = sld [smem:[#allocation3 + $0x53]]
        %s347 = sld [smem:[#allocation3 + $0x54]]
        %s348 = sld [smem:[#allocation3 + $0x55]]
        %s349 = sld [smem:[#allocation3 + $0x56]]
        %s350 = sld [smem:[#allocation3 + $0x57]]
        %s351 = sld [smem:[#allocation3 + $0x58]]
        %s352 = sld [smem:[#allocation3 + $0x59]]
        %s353 = sld [smem:[#allocation3 + $0x5a]]
        %s354 = sld [smem:[#allocation3 + $0x5b]]
        %s355 = sld [smem:[#allocation3 + $0x5c]]
        %s356 = sld [smem:[#allocation3 + $0x5d]]
        %s357 = sld [smem:[#allocation3 + $0x5e]]
        %s358 = sld [smem:[#allocation3 + $0x5f]]
        %s359 = sld [smem:[#allocation3 + $0x60]]
        %s360 = sld [smem:[#allocation3 + $0x61]]
        %s361 = sld [smem:[#allocation3 + $0x62]]
        %s362 = sld [smem:[#allocation3 + $0x63]]
        %s363 = sld [smem:[#allocation3 + $0x64]]
        %v364 = vld [vmem:[#allocation7] sm:$0xff]
        %s365 = scalar_lea.vmem [#allocation7], 8
        %v366 = vld [vmem:[%s365] sm:$0xff]
        %s367 = scalar_lea.vmem [#allocation7], 16
        %v368 = vld [vmem:[%s367] sm:$0xff]
        %v369 = vadd.f32 %v261, %v262
        %370 = vadd.xlane.f32.xlu0 %v369
        %v371 = vpop.xlane.xlu0 %370
        %v372 = vrcp.pop 256.0
        %v373 = vmul.f32 256.0, %v372
        %v374 = vsub.f32 1.0, %v373
        %v375 = vmul.f32 %v372, %v374
        %v376 = vadd.f32 %v372, %v375
        %vm377 = vweird.f32 %v372
        %v378 = vsel %vm377, %v372, %v376
        %v379 = vmul.f32 %v371, %v378
        %v380 = vmax.f32 %v261, %v262
        %381 = vmax.xlane.f32.xlu0 %v380
        %v382 = vpop.xlane.xlu0 %381
        %v383 = vadd.f32 %v379, %v382
        %v384 = vmul.f32 %v383, 0.5
        %v385 = vstv %s263
        %v386 = vmul.f32 %v385, %v379
        %v387 = vadd.f32 %v384, %v386
        %v388 = vstv %s264
        %v389 = vmul.f32 %v388, %v382
        %v390 = vadd.f32 %v387, %v389
        %v391 = vmul.f32 %v364, %v390
        %vm392 = vcmask 64512
        %v393 = vsel %vm392, %v391, 0.0
        %v394 = vrot.slane %v393, 4
        %v395 = vadd.f32 %v393, %v394
        %v396 = vrot.slane %v395, 2
        %v397 = vadd.f32 %v395, %v396
        %v398 = vrot.slane %v397, 1
        %v399 = vadd.f32 %v397, %v398
        %v400 = vstv %s265
        %v401 = vadd.f32 %v400, %v399
        %v402 = vxor.u32 %v401, 2147483648
        %v403 = vmul.f32 %v402, 1.442695
        %v404 = vpow.pop %v403
        %v405 = vadd.f32 %v404, 1.0
        %v406 = vrcp.pop %v405
        %v407 = vmul.f32 %v405, %v406
        %v408 = vsub.f32 1.0, %v407
        %v409 = vmul.f32 %v406, %v408
        %v410 = vadd.f32 %v406, %v409
        %vm411 = vweird.f32 %v405
        %vm412 = vweird.f32 %v406
        %vm413 = vmor %vm411, %vm412
        %v414 = vsel %vm413, %v406, %v410
        %v415 = vand.u32 2147483647, %v405
        %vm416 = vcmp.eq.f32.partialorder %v415, 8.507059e+37
        %v417 = vand.u32 %v405, 2147483648
        %v418 = vor.u32 1.1754944e-38, %v417
        %v419 = vsel %vm416, %v418, %v414
        %v420 = vmul.f32 1.0, %v419
        %v421 = vmul.f32 %v366, %v420
        %v422 = vsel %vm392, %v421, 0.0
        %423 = vadd.xlane.f32.xlu0 %v422
        %v424 = vpop.xlane.xlu0 %423
        %vm425 = vcmp.gt.f32.partialorder %v420, %v424
        %vm426 = vcmp.eq.f32.partialorder %v420, %v424
        %v427 = vsel %vm426, %v368, 0.0
        %v428 = vsel %vm425, 1.0, %v427
        %v429 = vsel %vm392, %v428, 0.0
        %430 = vadd.xlane.f32.xlu0 %v429
        %v431 = vpop.xlane.xlu0 %430
        %v432 = vrot.slane %v429, 4
        %v433 = vadd.f32 %v429, %v432
        %v434 = vrot.slane %v433, 2
        %v435 = vadd.f32 %v433, %v434
        %v436 = vrot.slane %v435, 1
        %v437 = vadd.f32 %v435, %v436
        %vm438 = vcmp.lt.f32.partialorder %v431, 4.0
        %v439 = vsel %vm438, 1, 0
        %v440 = vcvt.s32.f32 %v439
        %vm441 = vcmp.ge.f32.partialorder %v437, 4.0
        %v442 = vsel %vm441, 1, 0
        %v443 = vcvt.s32.f32 %v442
        %v444 = vmul.f32 %v440, %v424
        %v445 = vsub.f32 %v424, %v444
        %v446 = vmul.f32 %v443, %v420
        %v447 = vmul.f32 %v446, 0.25
        %v448 = vsub.f32 1.0, %v443
        %v449 = vmul.f32 %v448, %v420
        %v450 = vmul.f32 %v449, 0.25
        %vm451 = vcmask 1040384
        %v452 = vsel %vm451, %v447, %v450
        %v454 = vsel %vm392, %v452, 0
        %456 = vmatpush.msra.mxu0 0.0
        %457 = vmatpush.msra.mxu0 0.0
        %458 = vmatpush.msra.mxu0 0.0
        %459 = vmatpush.msra.mxu0 0.0
        %460 = vmatpush.msra.mxu0 0.0
        %461 = vmatpush.msra.mxu0 0.0
        %462 = vmatpush.msra.mxu0 0.0
        %463 = vmatpush.msra.mxu0 0.0
        %464 = vmatpush.msra.mxu0 0.0
        %465 = vmatpush.msra.mxu0 0.0
        %466 = vmatpush.msra.mxu0 0.0
        %467 = vmatpush.msra.mxu0 0.0
        %468 = vmatpush.msra.mxu0 0.0
        %469 = vmatpush.msra.mxu0 0.0
        %470 = vmatpush.msra.mxu0 0.0
        %v471 = vand.u32 %v261, 4294901760
        %472 = vmatpush.msra.mxu0 %v471
        %v473 = vand.u32 %v454, 4294901760
        %v474 = vsub.f32 %v454, %v473
        %v475 = vand.u32 %v474, 4294901760
        %v476 = vsub.f32 %v474, %v475
        %v477 = vand.u32 %v476, 4294901760
        %478 = vmatmul.f32.gmra.mxu0 %v477
        %v479 = vpop.f32.mrf.mxu0
        %v480 = vadd.f32 0.0, %v479
        %481 = vdwg.mxu0
        %482 = vmatpush.msra.mxu0 0.0
        %483 = vmatpush.msra.mxu0 0.0
        %484 = vmatpush.msra.mxu0 0.0
        %485 = vmatpush.msra.mxu0 0.0
        %486 = vmatpush.msra.mxu0 0.0
        %487 = vmatpush.msra.mxu0 0.0
        %488 = vmatpush.msra.mxu0 0.0
        %489 = vmatpush.msra.mxu0 0.0
        %490 = vmatpush.msra.mxu0 0.0
        %491 = vmatpush.msra.mxu0 0.0
        %492 = vmatpush.msra.mxu0 0.0
        %493 = vmatpush.msra.mxu0 0.0
        %494 = vmatpush.msra.mxu0 0.0
        %495 = vmatpush.msra.mxu0 0.0
        %496 = vmatpush.msra.mxu0 0.0
        %v497 = vand.u32 %v261, 4294901760
        %v498 = vsub.f32 %v261, %v497
        %v499 = vand.u32 %v498, 4294901760
        %v500 = vsub.f32 %v498, %v499
        %v501 = vand.u32 %v500, 4294901760
        %502 = vmatpush.msra.mxu0 %v501
        %v503 = vand.u32 %v454, 4294901760
        %504 = vmatmul.f32.gmra.mxu0 %v503
        %v505 = vpop.f32.mrf.mxu0
        %v506 = vadd.f32 %v480, %v505
        %507 = vdwg.mxu0
        %508 = vmatpush.msra.mxu0 0.0
        %509 = vmatpush.msra.mxu0 0.0
        %510 = vmatpush.msra.mxu0 0.0
        %511 = vmatpush.msra.mxu0 0.0
        %512 = vmatpush.msra.mxu0 0.0
        %513 = vmatpush.msra.mxu0 0.0
        %514 = vmatpush.msra.mxu0 0.0
        %515 = vmatpush.msra.mxu0 0.0
        %516 = vmatpush.msra.mxu0 0.0
        %517 = vmatpush.msra.mxu0 0.0
        %518 = vmatpush.msra.mxu0 0.0
        %519 = vmatpush.msra.mxu0 0.0
        %520 = vmatpush.msra.mxu0 0.0
        %521 = vmatpush.msra.mxu0 0.0
        %522 = vmatpush.msra.mxu0 0.0
        %v523 = vand.u32 %v261, 4294901760
        %v524 = vsub.f32 %v261, %v523
        %525 = vmatpush.msra.mxu0 %v524
        %v526 = vand.u32 %v454, 4294901760
        %v527 = vsub.f32 %v454, %v526
        %528 = vmatmul.f32.gmra.mxu0 %v527
        %v529 = vpop.f32.mrf.mxu0
        %v530 = vadd.f32 %v506, %v529
        %531 = vdwg.mxu0
        %532 = vmatpush.msra.mxu0 0.0
        %533 = vmatpush.msra.mxu0 0.0
        %534 = vmatpush.msra.mxu0 0.0
        %535 = vmatpush.msra.mxu0 0.0
        %536 = vmatpush.msra.mxu0 0.0
        %537 = vmatpush.msra.mxu0 0.0
        %538 = vmatpush.msra.mxu0 0.0
        %539 = vmatpush.msra.mxu0 0.0
        %540 = vmatpush.msra.mxu0 0.0
        %541 = vmatpush.msra.mxu0 0.0
        %542 = vmatpush.msra.mxu0 0.0
        %543 = vmatpush.msra.mxu0 0.0
        %544 = vmatpush.msra.mxu0 0.0
        %545 = vmatpush.msra.mxu0 0.0
        %546 = vmatpush.msra.mxu0 0.0
        %v547 = vand.u32 %v261, 4294901760
        %548 = vmatpush.msra.mxu0 %v547
        %v549 = vand.u32 %v454, 4294901760
        %v550 = vsub.f32 %v454, %v549
        %v551 = vand.u32 %v550, 4294901760
        %552 = vmatmul.f32.gmra.mxu0 %v551
        %v553 = vpop.f32.mrf.mxu0
        %v554 = vadd.f32 %v530, %v553
        %555 = vdwg.mxu0
        %556 = vmatpush.msra.mxu0 0.0
        %557 = vmatpush.msra.mxu0 0.0
        %558 = vmatpush.msra.mxu0 0.0
        %559 = vmatpush.msra.mxu0 0.0
        %560 = vmatpush.msra.mxu0 0.0
        %561 = vmatpush.msra.mxu0 0.0
        %562 = vmatpush.msra.mxu0 0.0
        %563 = vmatpush.msra.mxu0 0.0
        %564 = vmatpush.msra.mxu0 0.0
        %565 = vmatpush.msra.mxu0 0.0
        %566 = vmatpush.msra.mxu0 0.0
        %567 = vmatpush.msra.mxu0 0.0
        %568 = vmatpush.msra.mxu0 0.0
        %569 = vmatpush.msra.mxu0 0.0
        %570 = vmatpush.msra.mxu0 0.0
        %v571 = vand.u32 %v261, 4294901760
        %v572 = vsub.f32 %v261, %v571
        %v573 = vand.u32 %v572, 4294901760
        %574 = vmatpush.msra.mxu0 %v573
        %v575 = vand.u32 %v454, 4294901760
        %576 = vmatmul.f32.gmra.mxu0 %v575
        %v577 = vpop.f32.mrf.mxu0
        %v578 = vadd.f32 %v554, %v577
        %579 = vdwg.mxu0
        %580 = vmatpush.msra.mxu0 0.0
        %581 = vmatpush.msra.mxu0 0.0
        %582 = vmatpush.msra.mxu0 0.0
        %583 = vmatpush.msra.mxu0 0.0
        %584 = vmatpush.msra.mxu0 0.0
        %585 = vmatpush.msra.mxu0 0.0
        %586 = vmatpush.msra.mxu0 0.0
        %587 = vmatpush.msra.mxu0 0.0
        %588 = vmatpush.msra.mxu0 0.0
        %589 = vmatpush.msra.mxu0 0.0
        %590 = vmatpush.msra.mxu0 0.0
        %591 = vmatpush.msra.mxu0 0.0
        %592 = vmatpush.msra.mxu0 0.0
        %593 = vmatpush.msra.mxu0 0.0
        %594 = vmatpush.msra.mxu0 0.0
        %v595 = vand.u32 %v261, 4294901760
        %596 = vmatpush.msra.mxu0 %v595
        %v597 = vand.u32 %v454, 4294901760
        %598 = vmatmul.f32.gmra.mxu0 %v597
        %v599 = vpop.f32.mrf.mxu0
        %v600 = vadd.f32 %v578, %v599
        %601 = vdwg.mxu0
        %602 = vmatpush.msra.mxu0 0.0
        %603 = vmatpush.msra.mxu0 0.0
        %604 = vmatpush.msra.mxu0 0.0
        %605 = vmatpush.msra.mxu0 0.0
        %606 = vmatpush.msra.mxu0 0.0
        %607 = vmatpush.msra.mxu0 0.0
        %608 = vmatpush.msra.mxu0 0.0
        %609 = vmatpush.msra.mxu0 0.0
        %610 = vmatpush.msra.mxu0 0.0
        %611 = vmatpush.msra.mxu0 0.0
        %612 = vmatpush.msra.mxu0 0.0
        %613 = vmatpush.msra.mxu0 0.0
        %614 = vmatpush.msra.mxu0 0.0
        %615 = vmatpush.msra.mxu0 0.0
        %616 = vmatpush.msra.mxu0 0.0
        %v617 = vand.u32 %v262, 4294901760
        %618 = vmatpush.msra.mxu0 %v617
        %v619 = vand.u32 %v454, 4294901760
        %v620 = vsub.f32 %v454, %v619
        %v621 = vand.u32 %v620, 4294901760
        %v622 = vsub.f32 %v620, %v621
        %v623 = vand.u32 %v622, 4294901760
        %624 = vmatmul.f32.gmra.mxu0 %v623
        %v625 = vpop.f32.mrf.mxu0
        %v626 = vadd.f32 0.0, %v625
        %627 = vdwg.mxu0
        %628 = vmatpush.msra.mxu0 0.0
        %629 = vmatpush.msra.mxu0 0.0
        %630 = vmatpush.msra.mxu0 0.0
        %631 = vmatpush.msra.mxu0 0.0
        %632 = vmatpush.msra.mxu0 0.0
        %633 = vmatpush.msra.mxu0 0.0
        %634 = vmatpush.msra.mxu0 0.0
        %635 = vmatpush.msra.mxu0 0.0
        %636 = vmatpush.msra.mxu0 0.0
        %637 = vmatpush.msra.mxu0 0.0
        %638 = vmatpush.msra.mxu0 0.0
        %639 = vmatpush.msra.mxu0 0.0
        %640 = vmatpush.msra.mxu0 0.0
        %641 = vmatpush.msra.mxu0 0.0
        %642 = vmatpush.msra.mxu0 0.0
        %v643 = vand.u32 %v262, 4294901760
        %v644 = vsub.f32 %v262, %v643
        %v645 = vand.u32 %v644, 4294901760
        %v646 = vsub.f32 %v644, %v645
        %v647 = vand.u32 %v646, 4294901760
        %648 = vmatpush.msra.mxu0 %v647
        %v649 = vand.u32 %v454, 4294901760
        %650 = vmatmul.f32.gmra.mxu0 %v649
        %v651 = vpop.f32.mrf.mxu0
        %v652 = vadd.f32 %v626, %v651
        %653 = vdwg.mxu0
        %654 = vmatpush.msra.mxu0 0.0
        %655 = vmatpush.msra.mxu0 0.0
        %656 = vmatpush.msra.mxu0 0.0
        %657 = vmatpush.msra.mxu0 0.0
        %658 = vmatpush.msra.mxu0 0.0
        %659 = vmatpush.msra.mxu0 0.0
        %660 = vmatpush.msra.mxu0 0.0
        %661 = vmatpush.msra.mxu0 0.0
        %662 = vmatpush.msra.mxu0 0.0
        %663 = vmatpush.msra.mxu0 0.0
        %664 = vmatpush.msra.mxu0 0.0
        %665 = vmatpush.msra.mxu0 0.0
        %666 = vmatpush.msra.mxu0 0.0
        %667 = vmatpush.msra.mxu0 0.0
        %668 = vmatpush.msra.mxu0 0.0
        %v669 = vand.u32 %v262, 4294901760
        %v670 = vsub.f32 %v262, %v669
        %671 = vmatpush.msra.mxu0 %v670
        %v672 = vand.u32 %v454, 4294901760
        %v673 = vsub.f32 %v454, %v672
        %674 = vmatmul.f32.gmra.mxu0 %v673
        %v675 = vpop.f32.mrf.mxu0
        %v676 = vadd.f32 %v652, %v675
        %677 = vdwg.mxu0
        %678 = vmatpush.msra.mxu0 0.0
        %679 = vmatpush.msra.mxu0 0.0
        %680 = vmatpush.msra.mxu0 0.0
        %681 = vmatpush.msra.mxu0 0.0
        %682 = vmatpush.msra.mxu0 0.0
        %683 = vmatpush.msra.mxu0 0.0
        %684 = vmatpush.msra.mxu0 0.0
        %685 = vmatpush.msra.mxu0 0.0
        %686 = vmatpush.msra.mxu0 0.0
        %687 = vmatpush.msra.mxu0 0.0
        %688 = vmatpush.msra.mxu0 0.0
        %689 = vmatpush.msra.mxu0 0.0
        %690 = vmatpush.msra.mxu0 0.0
        %691 = vmatpush.msra.mxu0 0.0
        %692 = vmatpush.msra.mxu0 0.0
        %v693 = vand.u32 %v262, 4294901760
        %694 = vmatpush.msra.mxu0 %v693
        %v695 = vand.u32 %v454, 4294901760
        %v696 = vsub.f32 %v454, %v695
        %v697 = vand.u32 %v696, 4294901760
        %698 = vmatmul.f32.gmra.mxu0 %v697
        %v699 = vpop.f32.mrf.mxu0
        %v700 = vadd.f32 %v676, %v699
        %701 = vdwg.mxu0
        %702 = vmatpush.msra.mxu0 0.0
        %703 = vmatpush.msra.mxu0 0.0
        %704 = vmatpush.msra.mxu0 0.0
        %705 = vmatpush.msra.mxu0 0.0
        %706 = vmatpush.msra.mxu0 0.0
        %707 = vmatpush.msra.mxu0 0.0
        %708 = vmatpush.msra.mxu0 0.0
        %709 = vmatpush.msra.mxu0 0.0
        %710 = vmatpush.msra.mxu0 0.0
        %711 = vmatpush.msra.mxu0 0.0
        %712 = vmatpush.msra.mxu0 0.0
        %713 = vmatpush.msra.mxu0 0.0
        %714 = vmatpush.msra.mxu0 0.0
        %715 = vmatpush.msra.mxu0 0.0
        %716 = vmatpush.msra.mxu0 0.0
        %v717 = vand.u32 %v262, 4294901760
        %v718 = vsub.f32 %v262, %v717
        %v719 = vand.u32 %v718, 4294901760
        %720 = vmatpush.msra.mxu0 %v719
        %v721 = vand.u32 %v454, 4294901760
        %722 = vmatmul.f32.gmra.mxu0 %v721
        %v723 = vpop.f32.mrf.mxu0
        %v724 = vadd.f32 %v700, %v723
        %725 = vdwg.mxu0
        %726 = vmatpush.msra.mxu0 0.0
        %727 = vmatpush.msra.mxu0 0.0
        %728 = vmatpush.msra.mxu0 0.0
        %729 = vmatpush.msra.mxu0 0.0
        %730 = vmatpush.msra.mxu0 0.0
        %731 = vmatpush.msra.mxu0 0.0
        %732 = vmatpush.msra.mxu0 0.0
        %733 = vmatpush.msra.mxu0 0.0
        %734 = vmatpush.msra.mxu0 0.0
        %735 = vmatpush.msra.mxu0 0.0
        %736 = vmatpush.msra.mxu0 0.0
        %737 = vmatpush.msra.mxu0 0.0
        %738 = vmatpush.msra.mxu0 0.0
        %739 = vmatpush.msra.mxu0 0.0
        %740 = vmatpush.msra.mxu0 0.0
        %v741 = vand.u32 %v262, 4294901760
        %742 = vmatpush.msra.mxu0 %v741
        %v743 = vand.u32 %v454, 4294901760
        %744 = vmatmul.f32.gmra.mxu0 %v743
        %v745 = vpop.f32.mrf.mxu0
        %v746 = vadd.f32 %v724, %v745
        %747 = vdwg.mxu0
        %v748 = vmul.f32 %v444, %v261
        %v749 = vmul.f32 %v444, %v262
        %v750 = vrot.slane %v748, 4
        %v751 = vmax.f32 %v748, %v750
        %v752 = vrot.slane %v751, 2
        %v753 = vmax.f32 %v751, %v752
        %v754 = vrot.slane %v753, 1
        %v755 = vmax.f32 %v753, %v754
        %v756 = vrot.slane %v749, 4
        %v757 = vmax.f32 %v749, %v756
        %v758 = vrot.slane %v757, 2
        %v759 = vmax.f32 %v757, %v758
        %v760 = vrot.slane %v759, 1
        %v761 = vmax.f32 %v759, %v760
        %v762 = vmul.f32 %v445, %v261
        %v763 = vmul.f32 %v445, %v262
        %v764 = vrot.slane %v762, 4
        %v765 = vmax.f32 %v762, %v764
        %v766 = vrot.slane %v765, 2
        %v767 = vmax.f32 %v765, %v766
        %v768 = vrot.slane %v767, 1
        %v769 = vmax.f32 %v767, %v768
        %v770 = vrot.slane %v763, 4
        %v771 = vmax.f32 %v763, %v770
        %v772 = vrot.slane %v771, 2
        %v773 = vmax.f32 %v771, %v772
        %v774 = vrot.slane %v773, 1
        %v775 = vmax.f32 %v773, %v774
        %vm776 = vcmask 1041408
        %v777 = vsel %vm776, %v600, %v755
        %v778 = vsel %vm776, %v746, %v761
        %vm779 = vcmask 1042432
        %v780 = vsel %vm779, %v777, %v769
        %v781 = vsel %vm779, %v778, %v775
        %782 = vst [vmem:[#allocation2] sm:$0xf] 0.0
        %vm783 = vcmask 412672
        %784 = vst.msk [vmem:[#allocation2 + $0xc] sm:$0xf] %vm783, 0.0
        %v787 = vrot.slane %v781, 4
        %vm788 = vcmask 1043456
        %v789 = vsel %vm788, %v780, %v787
        %791 = vst [vmem:[#allocation2 + $0x4] sm:$0xff] %v789
        %v792 = vlaneseq
        %v793 = vshrl.u32 %v792, 7
        %vm794 = vcmp.lt.s32.totalorder %v793, 2
        %v795 = vsel %vm794, 1, 0
        %v796 = vcvt.s32.f32 %v795
        %v797 = vld [vmem:[#allocation8] sm:$0x3]
        %s798 = scalar_lea.vmem [#allocation8], 2
        %v799 = vld [vmem:[%s798] sm:$0x3]
        %s800 = scalar_lea.vmem [#allocation8], 4
        %v801 = vld [vmem:[%s800] sm:$0x3]
        %s802 = scalar_lea.vmem [#allocation8], 8
        %v803 = vld [vmem:[%s802] sm:$0x3]
        %s804 = scalar_lea.vmem [#allocation8], 10
        %v805 = vld [vmem:[%s804] sm:$0x3]
        %s806 = scalar_lea.vmem [#allocation8], 12
        %v807 = vld [vmem:[%s806] sm:$0x3]
        %v808 = vld [vmem:[#allocation2] sm:$0xff]
        %v809 = vld [vmem:[#allocation2 + $0x8] sm:$0xf]
        %s810 = ssub.f32 %s266, %s315
        %v811 = vstv %s810
        %v812 = vmul.f32 %v811, %v796
        %v813 = vstv %s315
        %v814 = vadd.f32 %v813, %v812
        %817 = vst [vmem:[#allocation1] ss:$2 sm:$0xff] %v808
        %s818 = scalar_lea.vmem [#allocation1], 16
        %819 = vst [vmem:[%s818] ss:$2 sm:$0xff] %v809
        %v820 = vld.sshfl [vmem:[#allocation1] sm:$0xff pattern:$0x75316420]
        %v821 = vld.sshfl [vmem:[#allocation1 + $0x8] sm:$0xff pattern:$0x75316420]
        %v822 = vld.sshfl [vmem:[#allocation1 + $0x10] sm:$0xff pattern:$0x75316420]
        %823 = vrot.lane.b32.xlu0 %v820, 48
        %v824 = vpop.permute.xlu0 %823
        %825 = vrot.lane.b32.xlu0 %v821, 48
        %v826 = vpop.permute.xlu0 %825
        %827 = vrot.lane.b32.xlu0 %v822, 48
        %v828 = vpop.permute.xlu0 %827
        %vm829 = vcmask 392192
        %v830 = vsel %vm829, %v824, %v826
        %v831 = vsel %vm829, %v826, %v828
        %834 = vrot.lane.b32.xlu0 %v830, 3
        %v835 = vpop.permute.xlu0 %834
        %836 = vrot.lane.b32.xlu0 %v831, 3
        %v837 = vpop.permute.xlu0 %836
        %v838 = vlaneseq
        %v839 = vand.u32 %v838, 127
        %vm840 = vcmp.lt.s32.totalorder %v839, 3
        %v841 = vsel %vm840, %v835, %v837
        %v842 = vsel %vm840, %v837, %v835
        %v843 = vmul.f32 %v842, %v814
        %v844 = vmul.f32 %v841, %v814
        %v846 = vperm.slane %v797, 0
        %v847 = vperm.slane %v797, 1
        %v850 = vmul.f32 %v843, %v846
        %v851 = vmul.f32 %v844, %v847
        %v852 = vadd.f32 %v850, 0.0
        %v853 = vadd.f32 %v851, 0.0
        %s854 = ssub.f32 %s267, %s316
        %v855 = vstv %s854
        %v856 = vmul.f32 %v855, %v796
        %v857 = vstv %s316
        %v858 = vadd.f32 %v857, %v856
        %859 = vst [vmem:[#allocation1] ss:$2 sm:$0xff] %v808
        %s860 = scalar_lea.vmem [#allocation1], 16
        %861 = vst [vmem:[%s860] ss:$2 sm:$0xff] %v809
        %v862 = vld.sshfl [vmem:[#allocation1] sm:$0xff pattern:$0x75316420]
        %v863 = vld.sshfl [vmem:[#allocation1 + $0x8] sm:$0xff pattern:$0x75316420]
        %v864 = vld.sshfl [vmem:[#allocation1 + $0x10] sm:$0xff pattern:$0x75316420]
        %865 = vrot.lane.b32.xlu0 %v862, 48
        %v866 = vpop.permute.xlu0 %865
        %867 = vrot.lane.b32.xlu0 %v863, 48
        %v868 = vpop.permute.xlu0 %867
        %869 = vrot.lane.b32.xlu0 %v864, 48
        %v870 = vpop.permute.xlu0 %869
        %v871 = vsel %vm829, %v866, %v868
        %v872 = vsel %vm829, %v868, %v870
        %875 = vrot.lane.b32.xlu0 %v871, 2
        %v876 = vpop.permute.xlu0 %875
        %877 = vrot.lane.b32.xlu0 %v872, 2
        %v878 = vpop.permute.xlu0 %877
        %vm879 = vcmp.lt.s32.totalorder %v839, 2
        %v880 = vsel %vm879, %v876, %v878
        %v881 = vsel %vm879, %v878, %v876
        %v882 = vmul.f32 %v881, %v858
        %v883 = vmul.f32 %v880, %v858
        %v885 = vperm.slane %v799, 0
        %v886 = vperm.slane %v799, 1
        %v889 = vmul.f32 %v882, %v885
        %v890 = vmul.f32 %v883, %v886
        %v891 = vadd.f32 %v852, %v889
        %v892 = vadd.f32 %v853, %v890
        %s893 = ssub.f32 %s268, %s317
        %v894 = vstv %s893
        %v895 = vmul.f32 %v894, %v796
        %v896 = vstv %s317
        %v897 = vadd.f32 %v896, %v895
        %898 = vst [vmem:[#allocation1] ss:$2 sm:$0xff] %v808
        %s899 = scalar_lea.vmem [#allocation1], 16
        %900 = vst [vmem:[%s899] ss:$2 sm:$0xff] %v809
        %v901 = vld.sshfl [vmem:[#allocation1] sm:$0xff pattern:$0x75316420]
        %v902 = vld.sshfl [vmem:[#allocation1 + $0x8] sm:$0xff pattern:$0x75316420]
        %v903 = vld.sshfl [vmem:[#allocation1 + $0x10] sm:$0xff pattern:$0x75316420]
        %904 = vrot.lane.b32.xlu0 %v901, 48
        %v905 = vpop.permute.xlu0 %904
        %906 = vrot.lane.b32.xlu0 %v902, 48
        %v907 = vpop.permute.xlu0 %906
        %908 = vrot.lane.b32.xlu0 %v903, 48
        %v909 = vpop.permute.xlu0 %908
        %v910 = vsel %vm829, %v905, %v907
        %v911 = vsel %vm829, %v907, %v909
        %914 = vrot.lane.b32.xlu0 %v910, 1
        %v915 = vpop.permute.xlu0 %914
        %916 = vrot.lane.b32.xlu0 %v911, 1
        %v917 = vpop.permute.xlu0 %916
        %vm918 = vcmp.lt.s32.totalorder %v839, 1
        %v919 = vsel %vm918, %v915, %v917
        %v920 = vsel %vm918, %v917, %v915
        %v921 = vmul.f32 %v920, %v897
        %v922 = vmul.f32 %v919, %v897
        %v924 = vperm.slane %v801, 0
        %v925 = vperm.slane %v801, 1
        %v928 = vmul.f32 %v921, %v924
        %v929 = vmul.f32 %v922, %v925
        %v930 = vadd.f32 %v891, %v928
        %v931 = vadd.f32 %v892, %v929
        %s932 = ssub.f32 %s269, %s318
        %v933 = vstv %s932
        %v934 = vmul.f32 %v933, %v796
        %v935 = vstv %s318
        %v936 = vadd.f32 %v935, %v934
        %v939 = vunpack.c.l.s4 839922192
        %v940 = vunpack.c.0.s8 %v939
        %v941 = vperm.slane %v936, %v940
        %v943 = vmul.f32 %v808, %v941
        %v944 = vmul.f32 %v809, %v941
        %947 = vst [vmem:[#allocation1] ss:$2 sm:$0xff] %v943
        %s948 = scalar_lea.vmem [#allocation1], 16
        %949 = vst [vmem:[%s948] ss:$2 sm:$0xff] %v944
        %v950 = vld.sshfl [vmem:[#allocation1] sm:$0xff pattern:$0x75316420]
        %v951 = vld.sshfl [vmem:[#allocation1 + $0x8] sm:$0xff pattern:$0x75316420]
        %v952 = vld.sshfl [vmem:[#allocation1 + $0x10] sm:$0xff pattern:$0x75316420]
        %953 = vrot.lane.b32.xlu0 %v950, 48
        %v954 = vpop.permute.xlu0 %953
        %955 = vrot.lane.b32.xlu0 %v951, 48
        %v956 = vpop.permute.xlu0 %955
        %957 = vrot.lane.b32.xlu0 %v952, 48
        %v958 = vpop.permute.xlu0 %957
        %v959 = vsel %vm829, %v954, %v956
        %v960 = vsel %vm829, %v956, %v958
        %v963 = vadd.f32 %v930, %v959
        %v964 = vadd.f32 %v931, %v960
        %s965 = ssub.f32 %s270, %s319
        %v966 = vstv %s965
        %v967 = vmul.f32 %v966, %v796
        %v968 = vstv %s319
        %v969 = vadd.f32 %v968, %v967
        %970 = vst [vmem:[#allocation1] ss:$2 sm:$0xff] %v808
        %s971 = scalar_lea.vmem [#allocation1], 16
        %972 = vst [vmem:[%s971] ss:$2 sm:$0xff] %v809
        %v973 = vld.sshfl [vmem:[#allocation1] sm:$0xff pattern:$0x75316420]
        %v974 = vld.sshfl [vmem:[#allocation1 + $0x8] sm:$0xff pattern:$0x75316420]
        %v975 = vld.sshfl [vmem:[#allocation1 + $0x10] sm:$0xff pattern:$0x75316420]
        %976 = vrot.lane.b32.xlu0 %v973, 48
        %v977 = vpop.permute.xlu0 %976
        %978 = vrot.lane.b32.xlu0 %v974, 48
        %v979 = vpop.permute.xlu0 %978
        %980 = vrot.lane.b32.xlu0 %v975, 48
        %v981 = vpop.permute.xlu0 %980
        %v982 = vsel %vm829, %v977, %v979
        %v983 = vsel %vm829, %v979, %v981
        %986 = vrot.lane.b32.xlu0 %v982, 127
        %v987 = vpop.permute.xlu0 %986
        %988 = vrot.lane.b32.xlu0 %v983, 127
        %v989 = vpop.permute.xlu0 %988
        %vm990 = vcmp.lt.s32.totalorder %v839, 127
        %v991 = vsel %vm990, %v987, %v989
        %v992 = vsel %vm990, %v989, %v987
        %v993 = vmul.f32 %v991, %v969
        %v994 = vmul.f32 %v992, %v969
        %v996 = vperm.slane %v803, 0
        %v997 = vperm.slane %v803, 1
        %v1000 = vmul.f32 %v993, %v996
        %v1001 = vmul.f32 %v994, %v997
        %v1002 = vadd.f32 %v963, %v1000
        %v1003 = vadd.f32 %v964, %v1001
        %s1004 = ssub.f32 %s271, %s320
        %v1005 = vstv %s1004
        %v1006 = vmul.f32 %v1005, %v796
        %v1007 = vstv %s320
        %v1008 = vadd.f32 %v1007, %v1006
        %1009 = vst [vmem:[#allocation1] ss:$2 sm:$0xff] %v808
        %s1010 = scalar_lea.vmem [#allocation1], 16
        %1011 = vst [vmem:[%s1010] ss:$2 sm:$0xff] %v809
        %v1012 = vld.sshfl [vmem:[#allocation1] sm:$0xff pattern:$0x75316420]
        %v1013 = vld.sshfl [vmem:[#allocation1 + $0x8] sm:$0xff pattern:$0x75316420]
        %v1014 = vld.sshfl [vmem:[#allocation1 + $0x10] sm:$0xff pattern:$0x75316420]
        %1015 = vrot.lane.b32.xlu0 %v1012, 48
        %v1016 = vpop.permute.xlu0 %1015
        %1017 = vrot.lane.b32.xlu0 %v1013, 48
        %v1018 = vpop.permute.xlu0 %1017
        %1019 = vrot.lane.b32.xlu0 %v1014, 48
        %v1020 = vpop.permute.xlu0 %1019
        %v1021 = vsel %vm829, %v1016, %v1018
        %v1022 = vsel %vm829, %v1018, %v1020
        %1025 = vrot.lane.b32.xlu0 %v1021, 126
        %v1026 = vpop.permute.xlu0 %1025
        %1027 = vrot.lane.b32.xlu0 %v1022, 126
        %v1028 = vpop.permute.xlu0 %1027
        %vm1029 = vcmp.lt.s32.totalorder %v839, 126
        %v1030 = vsel %vm1029, %v1026, %v1028
        %v1031 = vsel %vm1029, %v1028, %v1026
        %v1032 = vmul.f32 %v1030, %v1008
        %v1033 = vmul.f32 %v1031, %v1008
        %v1035 = vperm.slane %v805, 0
        %v1036 = vperm.slane %v805, 1
        %v1039 = vmul.f32 %v1032, %v1035
        %v1040 = vmul.f32 %v1033, %v1036
        %v1041 = vadd.f32 %v1002, %v1039
        %v1042 = vadd.f32 %v1003, %v1040
        %s1043 = ssub.f32 %s272, %s321
        %v1044 = vstv %s1043
        %v1045 = vmul.f32 %v1044, %v796
        %v1046 = vstv %s321
        %v1047 = vadd.f32 %v1046, %v1045
        %1048 = vst [vmem:[#allocation1] ss:$2 sm:$0xff] %v808
        %s1049 = scalar_lea.vmem [#allocation1], 16
        %1050 = vst [vmem:[%s1049] ss:$2 sm:$0xff] %v809
        %v1051 = vld.sshfl [vmem:[#allocation1] sm:$0xff pattern:$0x75316420]
        %v1052 = vld.sshfl [vmem:[#allocation1 + $0x8] sm:$0xff pattern:$0x75316420]
        %v1053 = vld.sshfl [vmem:[#allocation1 + $0x10] sm:$0xff pattern:$0x75316420]
        %1054 = vrot.lane.b32.xlu0 %v1051, 48
        %v1055 = vpop.permute.xlu0 %1054
        %1056 = vrot.lane.b32.xlu0 %v1052, 48
        %v1057 = vpop.permute.xlu0 %1056
        %1058 = vrot.lane.b32.xlu0 %v1053, 48
        %v1059 = vpop.permute.xlu0 %1058
        %v1060 = vsel %vm829, %v1055, %v1057
        %v1061 = vsel %vm829, %v1057, %v1059
        %1064 = vrot.lane.b32.xlu0 %v1060, 125
        %v1065 = vpop.permute.xlu0 %1064
        %1066 = vrot.lane.b32.xlu0 %v1061, 125
        %v1067 = vpop.permute.xlu0 %1066
        %vm1068 = vcmp.lt.s32.totalorder %v839, 125
        %v1069 = vsel %vm1068, %v1065, %v1067
        %v1070 = vsel %vm1068, %v1067, %v1065
        %v1071 = vmul.f32 %v1069, %v1047
        %v1072 = vmul.f32 %v1070, %v1047
        %v1074 = vperm.slane %v807, 0
        %v1075 = vperm.slane %v807, 1
        %v1078 = vmul.f32 %v1071, %v1074
        %v1079 = vmul.f32 %v1072, %v1075
        %v1080 = vadd.f32 %v1041, %v1078
        %v1081 = vadd.f32 %v1042, %v1079
        %v1082 = vld [vmem:[#allocation2] sm:$0xff]
        %v1083 = vld [vmem:[#allocation2 + $0x8] sm:$0xf]
        %s1084 = ssub.f32 %s273, %s322
        %v1085 = vstv %s1084
        %v1086 = vmul.f32 %v1085, %v796
        %v1087 = vstv %s322
        %v1088 = vadd.f32 %v1087, %v1086
        %1091 = vst [vmem:[#allocation1] ss:$2 sm:$0xff] %v1082
        %s1092 = scalar_lea.vmem [#allocation1], 16
        %1093 = vst [vmem:[%s1092] ss:$2 sm:$0xff] %v1083
        %v1094 = vld.sshfl [vmem:[#allocation1] sm:$0xff pattern:$0x75316420]
        %v1095 = vld.sshfl [vmem:[#allocation1 + $0x8] sm:$0xff pattern:$0x75316420]
        %v1096 = vld.sshfl [vmem:[#allocation1 + $0x10] sm:$0xff pattern:$0x75316420]
        %1097 = vrot.lane.b32.xlu0 %v1094, 32
        %v1098 = vpop.permute.xlu0 %1097
        %1099 = vrot.lane.b32.xlu0 %v1095, 32
        %v1100 = vpop.permute.xlu0 %1099
        %1101 = vrot.lane.b32.xlu0 %v1096, 32
        %v1102 = vpop.permute.xlu0 %1101
        %vm1103 = vcmask 261120
        %v1104 = vsel %vm1103, %v1098, %v1100
        %v1105 = vsel %vm1103, %v1100, %v1102
        %1108 = vrot.lane.b32.xlu0 %v1104, 3
        %v1109 = vpop.permute.xlu0 %1108
        %1110 = vrot.lane.b32.xlu0 %v1105, 3
        %v1111 = vpop.permute.xlu0 %1110
        %v1112 = vsel %vm840, %v1109, %v1111
        %v1113 = vsel %vm840, %v1111, %v1109
        %v1114 = vmul.f32 %v1113, %v1088
        %v1115 = vmul.f32 %v1112, %v1088
        %v1116 = vmul.f32 %v1114, %v846
        %v1117 = vmul.f32 %v1115, %v847
        %v1118 = vadd.f32 %v1080, %v1116
        %v1119 = vadd.f32 %v1081, %v1117
        %s1120 = ssub.f32 %s274, %s323
        %v1121 = vstv %s1120
        %v1122 = vmul.f32 %v1121, %v796
        %v1123 = vstv %s323
        %v1124 = vadd.f32 %v1123, %v1122
        %1125 = vst [vmem:[#allocation1] ss:$2 sm:$0xff] %v1082
        %s1126 = scalar_lea.vmem [#allocation1], 16
        %1127 = vst [vmem:[%s1126] ss:$2 sm:$0xff] %v1083
        %v1128 = vld.sshfl [vmem:[#allocation1] sm:$0xff pattern:$0x75316420]
        %v1129 = vld.sshfl [vmem:[#allocation1 + $0x8] sm:$0xff pattern:$0x75316420]
        %v1130 = vld.sshfl [vmem:[#allocation1 + $0x10] sm:$0xff pattern:$0x75316420]
        %1131 = vrot.lane.b32.xlu0 %v1128, 32
        %v1132 = vpop.permute.xlu0 %1131
        %1133 = vrot.lane.b32.xlu0 %v1129, 32
        %v1134 = vpop.permute.xlu0 %1133
        %1135 = vrot.lane.b32.xlu0 %v1130, 32
        %v1136 = vpop.permute.xlu0 %1135
        %v1137 = vsel %vm1103, %v1132, %v1134
        %v1138 = vsel %vm1103, %v1134, %v1136
        %1141 = vrot.lane.b32.xlu0 %v1137, 2
        %v1142 = vpop.permute.xlu0 %1141
        %1143 = vrot.lane.b32.xlu0 %v1138, 2
        %v1144 = vpop.permute.xlu0 %1143
        %v1145 = vsel %vm879, %v1142, %v1144
        %v1146 = vsel %vm879, %v1144, %v1142
        %v1147 = vmul.f32 %v1146, %v1124
        %v1148 = vmul.f32 %v1145, %v1124
        %v1149 = vmul.f32 %v1147, %v885
        %v1150 = vmul.f32 %v1148, %v886
        %v1151 = vadd.f32 %v1118, %v1149
        %v1152 = vadd.f32 %v1119, %v1150
        %s1153 = ssub.f32 %s275, %s324
        %v1154 = vstv %s1153
        %v1155 = vmul.f32 %v1154, %v796
        %v1156 = vstv %s324
        %v1157 = vadd.f32 %v1156, %v1155
        %1158 = vst [vmem:[#allocation1] ss:$2 sm:$0xff] %v1082
        %s1159 = scalar_lea.vmem [#allocation1], 16
        %1160 = vst [vmem:[%s1159] ss:$2 sm:$0xff] %v1083
        %v1161 = vld.sshfl [vmem:[#allocation1] sm:$0xff pattern:$0x75316420]
        %v1162 = vld.sshfl [vmem:[#allocation1 + $0x8] sm:$0xff pattern:$0x75316420]
        %v1163 = vld.sshfl [vmem:[#allocation1 + $0x10] sm:$0xff pattern:$0x75316420]
        %1164 = vrot.lane.b32.xlu0 %v1161, 32
        %v1165 = vpop.permute.xlu0 %1164
        %1166 = vrot.lane.b32.xlu0 %v1162, 32
        %v1167 = vpop.permute.xlu0 %1166
        %1168 = vrot.lane.b32.xlu0 %v1163, 32
        %v1169 = vpop.permute.xlu0 %1168
        %v1170 = vsel %vm1103, %v1165, %v1167
        %v1171 = vsel %vm1103, %v1167, %v1169
        %1174 = vrot.lane.b32.xlu0 %v1170, 1
        %v1175 = vpop.permute.xlu0 %1174
        %1176 = vrot.lane.b32.xlu0 %v1171, 1
        %v1177 = vpop.permute.xlu0 %1176
        %v1178 = vsel %vm918, %v1175, %v1177
        %v1179 = vsel %vm918, %v1177, %v1175
        %v1180 = vmul.f32 %v1179, %v1157
        %v1181 = vmul.f32 %v1178, %v1157
        %v1182 = vmul.f32 %v1180, %v924
        %v1183 = vmul.f32 %v1181, %v925
        %v1184 = vadd.f32 %v1151, %v1182
        %v1185 = vadd.f32 %v1152, %v1183
        %s1186 = ssub.f32 %s276, %s325
        %v1187 = vstv %s1186
        %v1188 = vmul.f32 %v1187, %v796
        %v1189 = vstv %s325
        %v1190 = vadd.f32 %v1189, %v1188
        %v1193 = vunpack.c.l.s4 839922192
        %v1194 = vunpack.c.0.s8 %v1193
        %v1195 = vperm.slane %v1190, %v1194
        %v1197 = vmul.f32 %v1082, %v1195
        %v1198 = vmul.f32 %v1083, %v1195
        %1201 = vst [vmem:[#allocation1] ss:$2 sm:$0xff] %v1197
        %s1202 = scalar_lea.vmem [#allocation1], 16
        %1203 = vst [vmem:[%s1202] ss:$2 sm:$0xff] %v1198
        %v1204 = vld.sshfl [vmem:[#allocation1] sm:$0xff pattern:$0x75316420]
        %v1205 = vld.sshfl [vmem:[#allocation1 + $0x8] sm:$0xff pattern:$0x75316420]
        %v1206 = vld.sshfl [vmem:[#allocation1 + $0x10] sm:$0xff pattern:$0x75316420]
        %1207 = vrot.lane.b32.xlu0 %v1204, 32
        %v1208 = vpop.permute.xlu0 %1207
        %1209 = vrot.lane.b32.xlu0 %v1205, 32
        %v1210 = vpop.permute.xlu0 %1209
        %1211 = vrot.lane.b32.xlu0 %v1206, 32
        %v1212 = vpop.permute.xlu0 %1211
        %v1213 = vsel %vm1103, %v1208, %v1210
        %v1214 = vsel %vm1103, %v1210, %v1212
        %v1217 = vadd.f32 %v1184, %v1213
        %v1218 = vadd.f32 %v1185, %v1214
        %s1219 = ssub.f32 %s277, %s326
        %v1220 = vstv %s1219
        %v1221 = vmul.f32 %v1220, %v796
        %v1222 = vstv %s326
        %v1223 = vadd.f32 %v1222, %v1221
        %1224 = vst [vmem:[#allocation1] ss:$2 sm:$0xff] %v1082
        %s1225 = scalar_lea.vmem [#allocation1], 16
        %1226 = vst [vmem:[%s1225] ss:$2 sm:$0xff] %v1083
        %v1227 = vld.sshfl [vmem:[#allocation1] sm:$0xff pattern:$0x75316420]
        %v1228 = vld.sshfl [vmem:[#allocation1 + $0x8] sm:$0xff pattern:$0x75316420]
        %v1229 = vld.sshfl [vmem:[#allocation1 + $0x10] sm:$0xff pattern:$0x75316420]
        %1230 = vrot.lane.b32.xlu0 %v1227, 32
        %v1231 = vpop.permute.xlu0 %1230
        %1232 = vrot.lane.b32.xlu0 %v1228, 32
        %v1233 = vpop.permute.xlu0 %1232
        %1234 = vrot.lane.b32.xlu0 %v1229, 32
        %v1235 = vpop.permute.xlu0 %1234
        %v1236 = vsel %vm1103, %v1231, %v1233
        %v1237 = vsel %vm1103, %v1233, %v1235
        %1240 = vrot.lane.b32.xlu0 %v1236, 127
        %v1241 = vpop.permute.xlu0 %1240
        %1242 = vrot.lane.b32.xlu0 %v1237, 127
        %v1243 = vpop.permute.xlu0 %1242
        %v1244 = vsel %vm990, %v1241, %v1243
        %v1245 = vsel %vm990, %v1243, %v1241
        %v1246 = vmul.f32 %v1244, %v1223
        %v1247 = vmul.f32 %v1245, %v1223
        %v1248 = vmul.f32 %v1246, %v996
        %v1249 = vmul.f32 %v1247, %v997
        %v1250 = vadd.f32 %v1217, %v1248
        %v1251 = vadd.f32 %v1218, %v1249
        %s1252 = ssub.f32 %s278, %s327
        %v1253 = vstv %s1252
        %v1254 = vmul.f32 %v1253, %v796
        %v1255 = vstv %s327
        %v1256 = vadd.f32 %v1255, %v1254
        %1257 = vst [vmem:[#allocation1] ss:$2 sm:$0xff] %v1082
        %s1258 = scalar_lea.vmem [#allocation1], 16
        %1259 = vst [vmem:[%s1258] ss:$2 sm:$0xff] %v1083
        %v1260 = vld.sshfl [vmem:[#allocation1] sm:$0xff pattern:$0x75316420]
        %v1261 = vld.sshfl [vmem:[#allocation1 + $0x8] sm:$0xff pattern:$0x75316420]
        %v1262 = vld.sshfl [vmem:[#allocation1 + $0x10] sm:$0xff pattern:$0x75316420]
        %1263 = vrot.lane.b32.xlu0 %v1260, 32
        %v1264 = vpop.permute.xlu0 %1263
        %1265 = vrot.lane.b32.xlu0 %v1261, 32
        %v1266 = vpop.permute.xlu0 %1265
        %1267 = vrot.lane.b32.xlu0 %v1262, 32
        %v1268 = vpop.permute.xlu0 %1267
        %v1269 = vsel %vm1103, %v1264, %v1266
        %v1270 = vsel %vm1103, %v1266, %v1268
        %1273 = vrot.lane.b32.xlu0 %v1269, 126
        %v1274 = vpop.permute.xlu0 %1273
        %1275 = vrot.lane.b32.xlu0 %v1270, 126
        %v1276 = vpop.permute.xlu0 %1275
        %v1277 = vsel %vm1029, %v1274, %v1276
        %v1278 = vsel %vm1029, %v1276, %v1274
        %v1279 = vmul.f32 %v1277, %v1256
        %v1280 = vmul.f32 %v1278, %v1256
        %v1281 = vmul.f32 %v1279, %v1035
        %v1282 = vmul.f32 %v1280, %v1036
        %v1283 = vadd.f32 %v1250, %v1281
        %v1284 = vadd.f32 %v1251, %v1282
        %s1285 = ssub.f32 %s279, %s328
        %v1286 = vstv %s1285
        %v1287 = vmul.f32 %v1286, %v796
        %v1288 = vstv %s328
        %v1289 = vadd.f32 %v1288, %v1287
        %1290 = vst [vmem:[#allocation1] ss:$2 sm:$0xff] %v1082
        %s1291 = scalar_lea.vmem [#allocation1], 16
        %1292 = vst [vmem:[%s1291] ss:$2 sm:$0xff] %v1083
        %v1293 = vld.sshfl [vmem:[#allocation1] sm:$0xff pattern:$0x75316420]
        %v1294 = vld.sshfl [vmem:[#allocation1 + $0x8] sm:$0xff pattern:$0x75316420]
        %v1295 = vld.sshfl [vmem:[#allocation1 + $0x10] sm:$0xff pattern:$0x75316420]
        %1296 = vrot.lane.b32.xlu0 %v1293, 32
        %v1297 = vpop.permute.xlu0 %1296
        %1298 = vrot.lane.b32.xlu0 %v1294, 32
        %v1299 = vpop.permute.xlu0 %1298
        %1300 = vrot.lane.b32.xlu0 %v1295, 32
        %v1301 = vpop.permute.xlu0 %1300
        %v1302 = vsel %vm1103, %v1297, %v1299
        %v1303 = vsel %vm1103, %v1299, %v1301
        %1306 = vrot.lane.b32.xlu0 %v1302, 125
        %v1307 = vpop.permute.xlu0 %1306
        %1308 = vrot.lane.b32.xlu0 %v1303, 125
        %v1309 = vpop.permute.xlu0 %1308
        %v1310 = vsel %vm1068, %v1307, %v1309
        %v1311 = vsel %vm1068, %v1309, %v1307
        %v1312 = vmul.f32 %v1310, %v1289
        %v1313 = vmul.f32 %v1311, %v1289
        %v1314 = vmul.f32 %v1312, %v1074
        %v1315 = vmul.f32 %v1313, %v1075
        %v1316 = vadd.f32 %v1283, %v1314
        %v1317 = vadd.f32 %v1284, %v1315
        %v1318 = vld [vmem:[#allocation2] sm:$0xff]
        %v1319 = vld [vmem:[#allocation2 + $0x8] sm:$0xf]
        %s1320 = ssub.f32 %s280, %s329
        %v1321 = vstv %s1320
        %v1322 = vmul.f32 %v1321, %v796
        %v1323 = vstv %s329
        %v1324 = vadd.f32 %v1323, %v1322
        %1327 = vst [vmem:[#allocation1] ss:$2 sm:$0xff] %v1318
        %s1328 = scalar_lea.vmem [#allocation1], 16
        %1329 = vst [vmem:[%s1328] ss:$2 sm:$0xff] %v1319
        %v1330 = vld.sshfl [vmem:[#allocation1] sm:$0xff pattern:$0x75316420]
        %v1331 = vld.sshfl [vmem:[#allocation1 + $0x8] sm:$0xff pattern:$0x75316420]
        %v1332 = vld.sshfl [vmem:[#allocation1 + $0x10] sm:$0xff pattern:$0x75316420]
        %1333 = vrot.lane.b32.xlu0 %v1330, 16
        %v1334 = vpop.permute.xlu0 %1333
        %1335 = vrot.lane.b32.xlu0 %v1331, 16
        %v1336 = vpop.permute.xlu0 %1335
        %1337 = vrot.lane.b32.xlu0 %v1332, 16
        %v1338 = vpop.permute.xlu0 %1337
        %vm1339 = vcmask 130048
        %v1340 = vsel %vm1339, %v1334, %v1336
        %v1341 = vsel %vm1339, %v1336, %v1338
        %1344 = vrot.lane.b32.xlu0 %v1340, 3
        %v1345 = vpop.permute.xlu0 %1344
        %1346 = vrot.lane.b32.xlu0 %v1341, 3
        %v1347 = vpop.permute.xlu0 %1346
        %v1348 = vsel %vm840, %v1345, %v1347
        %v1349 = vsel %vm840, %v1347, %v1345
        %v1350 = vmul.f32 %v1349, %v1324
        %v1351 = vmul.f32 %v1348, %v1324
        %v1352 = vmul.f32 %v1350, %v846
        %v1353 = vmul.f32 %v1351, %v847
        %v1354 = vadd.f32 %v1316, %v1352
        %v1355 = vadd.f32 %v1317, %v1353
        %s1356 = ssub.f32 %s281, %s330
        %v1357 = vstv %s1356
        %v1358 = vmul.f32 %v1357, %v796
        %v1359 = vstv %s330
        %v1360 = vadd.f32 %v1359, %v1358
        %1361 = vst [vmem:[#allocation1] ss:$2 sm:$0xff] %v1318
        %s1362 = scalar_lea.vmem [#allocation1], 16
        %1363 = vst [vmem:[%s1362] ss:$2 sm:$0xff] %v1319
        %v1364 = vld.sshfl [vmem:[#allocation1] sm:$0xff pattern:$0x75316420]
        %v1365 = vld.sshfl [vmem:[#allocation1 + $0x8] sm:$0xff pattern:$0x75316420]
        %v1366 = vld.sshfl [vmem:[#allocation1 + $0x10] sm:$0xff pattern:$0x75316420]
        %1367 = vrot.lane.b32.xlu0 %v1364, 16
        %v1368 = vpop.permute.xlu0 %1367
        %1369 = vrot.lane.b32.xlu0 %v1365, 16
        %v1370 = vpop.permute.xlu0 %1369
        %1371 = vrot.lane.b32.xlu0 %v1366, 16
        %v1372 = vpop.permute.xlu0 %1371
        %v1373 = vsel %vm1339, %v1368, %v1370
        %v1374 = vsel %vm1339, %v1370, %v1372
        %1377 = vrot.lane.b32.xlu0 %v1373, 2
        %v1378 = vpop.permute.xlu0 %1377
        %1379 = vrot.lane.b32.xlu0 %v1374, 2
        %v1380 = vpop.permute.xlu0 %1379
        %v1381 = vsel %vm879, %v1378, %v1380
        %v1382 = vsel %vm879, %v1380, %v1378
        %v1383 = vmul.f32 %v1382, %v1360
        %v1384 = vmul.f32 %v1381, %v1360
        %v1385 = vmul.f32 %v1383, %v885
        %v1386 = vmul.f32 %v1384, %v886
        %v1387 = vadd.f32 %v1354, %v1385
        %v1388 = vadd.f32 %v1355, %v1386
        %s1389 = ssub.f32 %s282, %s331
        %v1390 = vstv %s1389
        %v1391 = vmul.f32 %v1390, %v796
        %v1392 = vstv %s331
        %v1393 = vadd.f32 %v1392, %v1391
        %1394 = vst [vmem:[#allocation1] ss:$2 sm:$0xff] %v1318
        %s1395 = scalar_lea.vmem [#allocation1], 16
        %1396 = vst [vmem:[%s1395] ss:$2 sm:$0xff] %v1319
        %v1397 = vld.sshfl [vmem:[#allocation1] sm:$0xff pattern:$0x75316420]
        %v1398 = vld.sshfl [vmem:[#allocation1 + $0x8] sm:$0xff pattern:$0x75316420]
        %v1399 = vld.sshfl [vmem:[#allocation1 + $0x10] sm:$0xff pattern:$0x75316420]
        %1400 = vrot.lane.b32.xlu0 %v1397, 16
        %v1401 = vpop.permute.xlu0 %1400
        %1402 = vrot.lane.b32.xlu0 %v1398, 16
        %v1403 = vpop.permute.xlu0 %1402
        %1404 = vrot.lane.b32.xlu0 %v1399, 16
        %v1405 = vpop.permute.xlu0 %1404
        %v1406 = vsel %vm1339, %v1401, %v1403
        %v1407 = vsel %vm1339, %v1403, %v1405
        %1410 = vrot.lane.b32.xlu0 %v1406, 1
        %v1411 = vpop.permute.xlu0 %1410
        %1412 = vrot.lane.b32.xlu0 %v1407, 1
        %v1413 = vpop.permute.xlu0 %1412
        %v1414 = vsel %vm918, %v1411, %v1413
        %v1415 = vsel %vm918, %v1413, %v1411
        %v1416 = vmul.f32 %v1415, %v1393
        %v1417 = vmul.f32 %v1414, %v1393
        %v1418 = vmul.f32 %v1416, %v924
        %v1419 = vmul.f32 %v1417, %v925
        %v1420 = vadd.f32 %v1387, %v1418
        %v1421 = vadd.f32 %v1388, %v1419
        %s1422 = ssub.f32 %s283, %s332
        %v1423 = vstv %s1422
        %v1424 = vmul.f32 %v1423, %v796
        %v1425 = vstv %s332
        %v1426 = vadd.f32 %v1425, %v1424
        %v1429 = vunpack.c.l.s4 839922192
        %v1430 = vunpack.c.0.s8 %v1429
        %v1431 = vperm.slane %v1426, %v1430
        %v1433 = vmul.f32 %v1318, %v1431
        %v1434 = vmul.f32 %v1319, %v1431
        %1437 = vst [vmem:[#allocation1] ss:$2 sm:$0xff] %v1433
        %s1438 = scalar_lea.vmem [#allocation1], 16
        %1439 = vst [vmem:[%s1438] ss:$2 sm:$0xff] %v1434
        %v1440 = vld.sshfl [vmem:[#allocation1] sm:$0xff pattern:$0x75316420]
        %v1441 = vld.sshfl [vmem:[#allocation1 + $0x8] sm:$0xff pattern:$0x75316420]
        %v1442 = vld.sshfl [vmem:[#allocation1 + $0x10] sm:$0xff pattern:$0x75316420]
        %1443 = vrot.lane.b32.xlu0 %v1440, 16
        %v1444 = vpop.permute.xlu0 %1443
        %1445 = vrot.lane.b32.xlu0 %v1441, 16
        %v1446 = vpop.permute.xlu0 %1445
        %1447 = vrot.lane.b32.xlu0 %v1442, 16
        %v1448 = vpop.permute.xlu0 %1447
        %v1449 = vsel %vm1339, %v1444, %v1446
        %v1450 = vsel %vm1339, %v1446, %v1448
        %v1453 = vadd.f32 %v1420, %v1449
        %v1454 = vadd.f32 %v1421, %v1450
        %s1455 = ssub.f32 %s284, %s333
        %v1456 = vstv %s1455
        %v1457 = vmul.f32 %v1456, %v796
        %v1458 = vstv %s333
        %v1459 = vadd.f32 %v1458, %v1457
        %1460 = vst [vmem:[#allocation1] ss:$2 sm:$0xff] %v1318
        %s1461 = scalar_lea.vmem [#allocation1], 16
        %1462 = vst [vmem:[%s1461] ss:$2 sm:$0xff] %v1319
        %v1463 = vld.sshfl [vmem:[#allocation1] sm:$0xff pattern:$0x75316420]
        %v1464 = vld.sshfl [vmem:[#allocation1 + $0x8] sm:$0xff pattern:$0x75316420]
        %v1465 = vld.sshfl [vmem:[#allocation1 + $0x10] sm:$0xff pattern:$0x75316420]
        %1466 = vrot.lane.b32.xlu0 %v1463, 16
        %v1467 = vpop.permute.xlu0 %1466
        %1468 = vrot.lane.b32.xlu0 %v1464, 16
        %v1469 = vpop.permute.xlu0 %1468
        %1470 = vrot.lane.b32.xlu0 %v1465, 16
        %v1471 = vpop.permute.xlu0 %1470
        %v1472 = vsel %vm1339, %v1467, %v1469
        %v1473 = vsel %vm1339, %v1469, %v1471
        %1476 = vrot.lane.b32.xlu0 %v1472, 127
        %v1477 = vpop.permute.xlu0 %1476
        %1478 = vrot.lane.b32.xlu0 %v1473, 127
        %v1479 = vpop.permute.xlu0 %1478
        %v1480 = vsel %vm990, %v1477, %v1479
        %v1481 = vsel %vm990, %v1479, %v1477
        %v1482 = vmul.f32 %v1480, %v1459
        %v1483 = vmul.f32 %v1481, %v1459
        %v1484 = vmul.f32 %v1482, %v996
        %v1485 = vmul.f32 %v1483, %v997
        %v1486 = vadd.f32 %v1453, %v1484
        %v1487 = vadd.f32 %v1454, %v1485
        %s1488 = ssub.f32 %s285, %s334
        %v1489 = vstv %s1488
        %v1490 = vmul.f32 %v1489, %v796
        %v1491 = vstv %s334
        %v1492 = vadd.f32 %v1491, %v1490
        %1493 = vst [vmem:[#allocation1] ss:$2 sm:$0xff] %v1318
        %s1494 = scalar_lea.vmem [#allocation1], 16
        %1495 = vst [vmem:[%s1494] ss:$2 sm:$0xff] %v1319
        %v1496 = vld.sshfl [vmem:[#allocation1] sm:$0xff pattern:$0x75316420]
        %v1497 = vld.sshfl [vmem:[#allocation1 + $0x8] sm:$0xff pattern:$0x75316420]
        %v1498 = vld.sshfl [vmem:[#allocation1 + $0x10] sm:$0xff pattern:$0x75316420]
        %1499 = vrot.lane.b32.xlu0 %v1496, 16
        %v1500 = vpop.permute.xlu0 %1499
        %1501 = vrot.lane.b32.xlu0 %v1497, 16
        %v1502 = vpop.permute.xlu0 %1501
        %1503 = vrot.lane.b32.xlu0 %v1498, 16
        %v1504 = vpop.permute.xlu0 %1503
        %v1505 = vsel %vm1339, %v1500, %v1502
        %v1506 = vsel %vm1339, %v1502, %v1504
        %1509 = vrot.lane.b32.xlu0 %v1505, 126
        %v1510 = vpop.permute.xlu0 %1509
        %1511 = vrot.lane.b32.xlu0 %v1506, 126
        %v1512 = vpop.permute.xlu0 %1511
        %v1513 = vsel %vm1029, %v1510, %v1512
        %v1514 = vsel %vm1029, %v1512, %v1510
        %v1515 = vmul.f32 %v1513, %v1492
        %v1516 = vmul.f32 %v1514, %v1492
        %v1517 = vmul.f32 %v1515, %v1035
        %v1518 = vmul.f32 %v1516, %v1036
        %v1519 = vadd.f32 %v1486, %v1517
        %v1520 = vadd.f32 %v1487, %v1518
        %s1521 = ssub.f32 %s286, %s335
        %v1522 = vstv %s1521
        %v1523 = vmul.f32 %v1522, %v796
        %v1524 = vstv %s335
        %v1525 = vadd.f32 %v1524, %v1523
        %1526 = vst [vmem:[#allocation1] ss:$2 sm:$0xff] %v1318
        %s1527 = scalar_lea.vmem [#allocation1], 16
        %1528 = vst [vmem:[%s1527] ss:$2 sm:$0xff] %v1319
        %v1529 = vld.sshfl [vmem:[#allocation1] sm:$0xff pattern:$0x75316420]
        %v1530 = vld.sshfl [vmem:[#allocation1 + $0x8] sm:$0xff pattern:$0x75316420]
        %v1531 = vld.sshfl [vmem:[#allocation1 + $0x10] sm:$0xff pattern:$0x75316420]
        %1532 = vrot.lane.b32.xlu0 %v1529, 16
        %v1533 = vpop.permute.xlu0 %1532
        %1534 = vrot.lane.b32.xlu0 %v1530, 16
        %v1535 = vpop.permute.xlu0 %1534
        %1536 = vrot.lane.b32.xlu0 %v1531, 16
        %v1537 = vpop.permute.xlu0 %1536
        %v1538 = vsel %vm1339, %v1533, %v1535
        %v1539 = vsel %vm1339, %v1535, %v1537
        %1542 = vrot.lane.b32.xlu0 %v1538, 125
        %v1543 = vpop.permute.xlu0 %1542
        %1544 = vrot.lane.b32.xlu0 %v1539, 125
        %v1545 = vpop.permute.xlu0 %1544
        %v1546 = vsel %vm1068, %v1543, %v1545
        %v1547 = vsel %vm1068, %v1545, %v1543
        %v1548 = vmul.f32 %v1546, %v1525
        %v1549 = vmul.f32 %v1547, %v1525
        %v1550 = vmul.f32 %v1548, %v1074
        %v1551 = vmul.f32 %v1549, %v1075
        %v1552 = vadd.f32 %v1519, %v1550
        %v1553 = vadd.f32 %v1520, %v1551
        %v1554 = vld [vmem:[#allocation2 + $0x4] sm:$0xff]
        %s1555 = ssub.f32 %s287, %s336
        %v1556 = vstv %s1555
        %v1557 = vmul.f32 %v1556, %v796
        %v1558 = vstv %s336
        %v1559 = vadd.f32 %v1558, %v1557
        %1561 = vst [vmem:[#allocation1] ss:$2 sm:$0xff] %v1554
        %v1562 = vld.sshfl [vmem:[#allocation1] sm:$0xff pattern:$0x75316420]
        %v1563 = vld.sshfl [vmem:[#allocation1 + $0x8] sm:$0xff pattern:$0x75316420]
        %1566 = vrot.lane.b32.xlu0 %v1562, 3
        %v1567 = vpop.permute.xlu0 %1566
        %1568 = vrot.lane.b32.xlu0 %v1563, 3
        %v1569 = vpop.permute.xlu0 %1568
        %v1570 = vsel %vm840, %v1567, %v1569
        %v1571 = vsel %vm840, %v1569, %v1567
        %v1572 = vmul.f32 %v1571, %v1559
        %v1573 = vmul.f32 %v1570, %v1559
        %v1574 = vmul.f32 %v1572, %v846
        %v1575 = vmul.f32 %v1573, %v847
        %v1576 = vadd.f32 %v1552, %v1574
        %v1577 = vadd.f32 %v1553, %v1575
        %s1578 = ssub.f32 %s288, %s337
        %v1579 = vstv %s1578
        %v1580 = vmul.f32 %v1579, %v796
        %v1581 = vstv %s337
        %v1582 = vadd.f32 %v1581, %v1580
        %1583 = vst [vmem:[#allocation1] ss:$2 sm:$0xff] %v1554
        %v1584 = vld.sshfl [vmem:[#allocation1] sm:$0xff pattern:$0x75316420]
        %v1585 = vld.sshfl [vmem:[#allocation1 + $0x8] sm:$0xff pattern:$0x75316420]
        %1588 = vrot.lane.b32.xlu0 %v1584, 2
        %v1589 = vpop.permute.xlu0 %1588
        %1590 = vrot.lane.b32.xlu0 %v1585, 2
        %v1591 = vpop.permute.xlu0 %1590
        %v1592 = vsel %vm879, %v1589, %v1591
        %v1593 = vsel %vm879, %v1591, %v1589
        %v1594 = vmul.f32 %v1593, %v1582
        %v1595 = vmul.f32 %v1592, %v1582
        %v1596 = vmul.f32 %v1594, %v885
        %v1597 = vmul.f32 %v1595, %v886
        %v1598 = vadd.f32 %v1576, %v1596
        %v1599 = vadd.f32 %v1577, %v1597
        %s1600 = ssub.f32 %s289, %s338
        %v1601 = vstv %s1600
        %v1602 = vmul.f32 %v1601, %v796
        %v1603 = vstv %s338
        %v1604 = vadd.f32 %v1603, %v1602
        %1605 = vst [vmem:[#allocation1] ss:$2 sm:$0xff] %v1554
        %v1606 = vld.sshfl [vmem:[#allocation1] sm:$0xff pattern:$0x75316420]
        %v1607 = vld.sshfl [vmem:[#allocation1 + $0x8] sm:$0xff pattern:$0x75316420]
        %1610 = vrot.lane.b32.xlu0 %v1606, 1
        %v1611 = vpop.permute.xlu0 %1610
        %1612 = vrot.lane.b32.xlu0 %v1607, 1
        %v1613 = vpop.permute.xlu0 %1612
        %v1614 = vsel %vm918, %v1611, %v1613
        %v1615 = vsel %vm918, %v1613, %v1611
        %v1616 = vmul.f32 %v1615, %v1604
        %v1617 = vmul.f32 %v1614, %v1604
        %v1618 = vmul.f32 %v1616, %v924
        %v1619 = vmul.f32 %v1617, %v925
        %v1620 = vadd.f32 %v1598, %v1618
        %v1621 = vadd.f32 %v1599, %v1619
        %s1622 = ssub.f32 %s290, %s339
        %v1623 = vstv %s1622
        %v1624 = vmul.f32 %v1623, %v796
        %v1625 = vstv %s339
        %v1626 = vadd.f32 %v1625, %v1624
        %v1629 = vunpack.c.l.s4 839922192
        %v1630 = vunpack.c.0.s8 %v1629
        %v1631 = vperm.slane %v1626, %v1630
        %v1633 = vmul.f32 %v1554, %v1631
        %1635 = vst [vmem:[#allocation1] ss:$2 sm:$0xff] %v1633
        %v1636 = vld.sshfl [vmem:[#allocation1] sm:$0xff pattern:$0x75316420]
        %v1637 = vld.sshfl [vmem:[#allocation1 + $0x8] sm:$0xff pattern:$0x75316420]
        %v1640 = vadd.f32 %v1620, %v1636
        %v1641 = vadd.f32 %v1621, %v1637
        %s1642 = ssub.f32 %s291, %s340
        %v1643 = vstv %s1642
        %v1644 = vmul.f32 %v1643, %v796
        %v1645 = vstv %s340
        %v1646 = vadd.f32 %v1645, %v1644
        %1647 = vst [vmem:[#allocation1] ss:$2 sm:$0xff] %v1554
        %v1648 = vld.sshfl [vmem:[#allocation1] sm:$0xff pattern:$0x75316420]
        %v1649 = vld.sshfl [vmem:[#allocation1 + $0x8] sm:$0xff pattern:$0x75316420]
        %1652 = vrot.lane.b32.xlu0 %v1648, 127
        %v1653 = vpop.permute.xlu0 %1652
        %1654 = vrot.lane.b32.xlu0 %v1649, 127
        %v1655 = vpop.permute.xlu0 %1654
        %v1656 = vsel %vm990, %v1653, %v1655
        %v1657 = vsel %vm990, %v1655, %v1653
        %v1658 = vmul.f32 %v1656, %v1646
        %v1659 = vmul.f32 %v1657, %v1646
        %v1660 = vmul.f32 %v1658, %v996
        %v1661 = vmul.f32 %v1659, %v997
        %v1662 = vadd.f32 %v1640, %v1660
        %v1663 = vadd.f32 %v1641, %v1661
        %s1664 = ssub.f32 %s292, %s341
        %v1665 = vstv %s1664
        %v1666 = vmul.f32 %v1665, %v796
        %v1667 = vstv %s341
        %v1668 = vadd.f32 %v1667, %v1666
        %1669 = vst [vmem:[#allocation1] ss:$2 sm:$0xff] %v1554
        %v1670 = vld.sshfl [vmem:[#allocation1] sm:$0xff pattern:$0x75316420]
        %v1671 = vld.sshfl [vmem:[#allocation1 + $0x8] sm:$0xff pattern:$0x75316420]
        %1674 = vrot.lane.b32.xlu0 %v1670, 126
        %v1675 = vpop.permute.xlu0 %1674
        %1676 = vrot.lane.b32.xlu0 %v1671, 126
        %v1677 = vpop.permute.xlu0 %1676
        %v1678 = vsel %vm1029, %v1675, %v1677
        %v1679 = vsel %vm1029, %v1677, %v1675
        %v1680 = vmul.f32 %v1678, %v1668
        %v1681 = vmul.f32 %v1679, %v1668
        %v1682 = vmul.f32 %v1680, %v1035
        %v1683 = vmul.f32 %v1681, %v1036
        %v1684 = vadd.f32 %v1662, %v1682
        %v1685 = vadd.f32 %v1663, %v1683
        %s1686 = ssub.f32 %s293, %s342
        %v1687 = vstv %s1686
        %v1688 = vmul.f32 %v1687, %v796
        %v1689 = vstv %s342
        %v1690 = vadd.f32 %v1689, %v1688
        %1691 = vst [vmem:[#allocation1] ss:$2 sm:$0xff] %v1554
        %v1692 = vld.sshfl [vmem:[#allocation1] sm:$0xff pattern:$0x75316420]
        %v1693 = vld.sshfl [vmem:[#allocation1 + $0x8] sm:$0xff pattern:$0x75316420]
        %1696 = vrot.lane.b32.xlu0 %v1692, 125
        %v1697 = vpop.permute.xlu0 %1696
        %1698 = vrot.lane.b32.xlu0 %v1693, 125
        %v1699 = vpop.permute.xlu0 %1698
        %v1700 = vsel %vm1068, %v1697, %v1699
        %v1701 = vsel %vm1068, %v1699, %v1697
        %v1702 = vmul.f32 %v1700, %v1690
        %v1703 = vmul.f32 %v1701, %v1690
        %v1704 = vmul.f32 %v1702, %v1074
        %v1705 = vmul.f32 %v1703, %v1075
        %v1706 = vadd.f32 %v1684, %v1704
        %v1707 = vadd.f32 %v1685, %v1705
        %v1708 = vld [vmem:[#allocation2 + $0x4] sm:$0xff]
        %v1709 = vld [vmem:[#allocation2 + $0xc] sm:$0xf]
        %s1710 = ssub.f32 %s294, %s343
        %v1711 = vstv %s1710
        %v1712 = vmul.f32 %v1711, %v796
        %v1713 = vstv %s343
        %v1714 = vadd.f32 %v1713, %v1712
        %1717 = vst [vmem:[#allocation1] ss:$2 sm:$0xff] %v1708
        %s1718 = scalar_lea.vmem [#allocation1], 16
        %1719 = vst [vmem:[%s1718] ss:$2 sm:$0xff] %v1709
        %v1720 = vld.sshfl [vmem:[#allocation1] sm:$0xff pattern:$0x75316420]
        %v1721 = vld.sshfl [vmem:[#allocation1 + $0x8] sm:$0xff pattern:$0x75316420]
        %v1722 = vld.sshfl [vmem:[#allocation1 + $0x10] sm:$0xff pattern:$0x75316420]
        %1723 = vrot.lane.b32.xlu0 %v1720, 112
        %v1724 = vpop.permute.xlu0 %1723
        %1725 = vrot.lane.b32.xlu0 %v1721, 112
        %v1726 = vpop.permute.xlu0 %1725
        %1727 = vrot.lane.b32.xlu0 %v1722, 112
        %v1728 = vpop.permute.xlu0 %1727
        %vm1729 = vcmask 916480
        %v1730 = vsel %vm1729, %v1724, %v1726
        %v1731 = vsel %vm1729, %v1726, %v1728
        %1734 = vrot.lane.b32.xlu0 %v1730, 3
        %v1735 = vpop.permute.xlu0 %1734
        %1736 = vrot.lane.b32.xlu0 %v1731, 3
        %v1737 = vpop.permute.xlu0 %1736
        %v1738 = vsel %vm840, %v1735, %v1737
        %v1739 = vsel %vm840, %v1737, %v1735
        %v1740 = vmul.f32 %v1739, %v1714
        %v1741 = vmul.f32 %v1738, %v1714
        %v1742 = vmul.f32 %v1740, %v846
        %v1743 = vmul.f32 %v1741, %v847
        %v1744 = vadd.f32 %v1706, %v1742
        %v1745 = vadd.f32 %v1707, %v1743
        %s1746 = ssub.f32 %s295, %s344
        %v1747 = vstv %s1746
        %v1748 = vmul.f32 %v1747, %v796
        %v1749 = vstv %s344
        %v1750 = vadd.f32 %v1749, %v1748
        %1751 = vst [vmem:[#allocation1] ss:$2 sm:$0xff] %v1708
        %s1752 = scalar_lea.vmem [#allocation1], 16
        %1753 = vst [vmem:[%s1752] ss:$2 sm:$0xff] %v1709
        %v1754 = vld.sshfl [vmem:[#allocation1] sm:$0xff pattern:$0x75316420]
        %v1755 = vld.sshfl [vmem:[#allocation1 + $0x8] sm:$0xff pattern:$0x75316420]
        %v1756 = vld.sshfl [vmem:[#allocation1 + $0x10] sm:$0xff pattern:$0x75316420]
        %1757 = vrot.lane.b32.xlu0 %v1754, 112
        %v1758 = vpop.permute.xlu0 %1757
        %1759 = vrot.lane.b32.xlu0 %v1755, 112
        %v1760 = vpop.permute.xlu0 %1759
        %1761 = vrot.lane.b32.xlu0 %v1756, 112
        %v1762 = vpop.permute.xlu0 %1761
        %v1763 = vsel %vm1729, %v1758, %v1760
        %v1764 = vsel %vm1729, %v1760, %v1762
        %1767 = vrot.lane.b32.xlu0 %v1763, 2
        %v1768 = vpop.permute.xlu0 %1767
        %1769 = vrot.lane.b32.xlu0 %v1764, 2
        %v1770 = vpop.permute.xlu0 %1769
        %v1771 = vsel %vm879, %v1768, %v1770
        %v1772 = vsel %vm879, %v1770, %v1768
        %v1773 = vmul.f32 %v1772, %v1750
        %v1774 = vmul.f32 %v1771, %v1750
        %v1775 = vmul.f32 %v1773, %v885
        %v1776 = vmul.f32 %v1774, %v886
        %v1777 = vadd.f32 %v1744, %v1775
        %v1778 = vadd.f32 %v1745, %v1776
        %s1779 = ssub.f32 %s296, %s345
        %v1780 = vstv %s1779
        %v1781 = vmul.f32 %v1780, %v796
        %v1782 = vstv %s345
        %v1783 = vadd.f32 %v1782, %v1781
        %1784 = vst [vmem:[#allocation1] ss:$2 sm:$0xff] %v1708
        %s1785 = scalar_lea.vmem [#allocation1], 16
        %1786 = vst [vmem:[%s1785] ss:$2 sm:$0xff] %v1709
        %v1787 = vld.sshfl [vmem:[#allocation1] sm:$0xff pattern:$0x75316420]
        %v1788 = vld.sshfl [vmem:[#allocation1 + $0x8] sm:$0xff pattern:$0x75316420]
        %v1789 = vld.sshfl [vmem:[#allocation1 + $0x10] sm:$0xff pattern:$0x75316420]
        %1790 = vrot.lane.b32.xlu0 %v1787, 112
        %v1791 = vpop.permute.xlu0 %1790
        %1792 = vrot.lane.b32.xlu0 %v1788, 112
        %v1793 = vpop.permute.xlu0 %1792
        %1794 = vrot.lane.b32.xlu0 %v1789, 112
        %v1795 = vpop.permute.xlu0 %1794
        %v1796 = vsel %vm1729, %v1791, %v1793
        %v1797 = vsel %vm1729, %v1793, %v1795
        %1800 = vrot.lane.b32.xlu0 %v1796, 1
        %v1801 = vpop.permute.xlu0 %1800
        %1802 = vrot.lane.b32.xlu0 %v1797, 1
        %v1803 = vpop.permute.xlu0 %1802
        %v1804 = vsel %vm918, %v1801, %v1803
        %v1805 = vsel %vm918, %v1803, %v1801
        %v1806 = vmul.f32 %v1805, %v1783
        %v1807 = vmul.f32 %v1804, %v1783
        %v1808 = vmul.f32 %v1806, %v924
        %v1809 = vmul.f32 %v1807, %v925
        %v1810 = vadd.f32 %v1777, %v1808
        %v1811 = vadd.f32 %v1778, %v1809
        %s1812 = ssub.f32 %s297, %s346
        %v1813 = vstv %s1812
        %v1814 = vmul.f32 %v1813, %v796
        %v1815 = vstv %s346
        %v1816 = vadd.f32 %v1815, %v1814
        %v1819 = vunpack.c.l.s4 839922192
        %v1820 = vunpack.c.0.s8 %v1819
        %v1821 = vperm.slane %v1816, %v1820
        %v1823 = vmul.f32 %v1708, %v1821
        %v1824 = vmul.f32 %v1709, %v1821
        %1827 = vst [vmem:[#allocation1] ss:$2 sm:$0xff] %v1823
        %s1828 = scalar_lea.vmem [#allocation1], 16
        %1829 = vst [vmem:[%s1828] ss:$2 sm:$0xff] %v1824
        %v1830 = vld.sshfl [vmem:[#allocation1] sm:$0xff pattern:$0x75316420]
        %v1831 = vld.sshfl [vmem:[#allocation1 + $0x8] sm:$0xff pattern:$0x75316420]
        %v1832 = vld.sshfl [vmem:[#allocation1 + $0x10] sm:$0xff pattern:$0x75316420]
        %1833 = vrot.lane.b32.xlu0 %v1830, 112
        %v1834 = vpop.permute.xlu0 %1833
        %1835 = vrot.lane.b32.xlu0 %v1831, 112
        %v1836 = vpop.permute.xlu0 %1835
        %1837 = vrot.lane.b32.xlu0 %v1832, 112
        %v1838 = vpop.permute.xlu0 %1837
        %v1839 = vsel %vm1729, %v1834, %v1836
        %v1840 = vsel %vm1729, %v1836, %v1838
        %v1843 = vadd.f32 %v1810, %v1839
        %v1844 = vadd.f32 %v1811, %v1840
        %s1845 = ssub.f32 %s298, %s347
        %v1846 = vstv %s1845
        %v1847 = vmul.f32 %v1846, %v796
        %v1848 = vstv %s347
        %v1849 = vadd.f32 %v1848, %v1847
        %1850 = vst [vmem:[#allocation1] ss:$2 sm:$0xff] %v1708
        %s1851 = scalar_lea.vmem [#allocation1], 16
        %1852 = vst [vmem:[%s1851] ss:$2 sm:$0xff] %v1709
        %v1853 = vld.sshfl [vmem:[#allocation1] sm:$0xff pattern:$0x75316420]
        %v1854 = vld.sshfl [vmem:[#allocation1 + $0x8] sm:$0xff pattern:$0x75316420]
        %v1855 = vld.sshfl [vmem:[#allocation1 + $0x10] sm:$0xff pattern:$0x75316420]
        %1856 = vrot.lane.b32.xlu0 %v1853, 112
        %v1857 = vpop.permute.xlu0 %1856
        %1858 = vrot.lane.b32.xlu0 %v1854, 112
        %v1859 = vpop.permute.xlu0 %1858
        %1860 = vrot.lane.b32.xlu0 %v1855, 112
        %v1861 = vpop.permute.xlu0 %1860
        %v1862 = vsel %vm1729, %v1857, %v1859
        %v1863 = vsel %vm1729, %v1859, %v1861
        %1866 = vrot.lane.b32.xlu0 %v1862, 127
        %v1867 = vpop.permute.xlu0 %1866
        %1868 = vrot.lane.b32.xlu0 %v1863, 127
        %v1869 = vpop.permute.xlu0 %1868
        %v1870 = vsel %vm990, %v1867, %v1869
        %v1871 = vsel %vm990, %v1869, %v1867
        %v1872 = vmul.f32 %v1870, %v1849
        %v1873 = vmul.f32 %v1871, %v1849
        %v1874 = vmul.f32 %v1872, %v996
        %v1875 = vmul.f32 %v1873, %v997
        %v1876 = vadd.f32 %v1843, %v1874
        %v1877 = vadd.f32 %v1844, %v1875
        %s1878 = ssub.f32 %s299, %s348
        %v1879 = vstv %s1878
        %v1880 = vmul.f32 %v1879, %v796
        %v1881 = vstv %s348
        %v1882 = vadd.f32 %v1881, %v1880
        %1883 = vst [vmem:[#allocation1] ss:$2 sm:$0xff] %v1708
        %s1884 = scalar_lea.vmem [#allocation1], 16
        %1885 = vst [vmem:[%s1884] ss:$2 sm:$0xff] %v1709
        %v1886 = vld.sshfl [vmem:[#allocation1] sm:$0xff pattern:$0x75316420]
        %v1887 = vld.sshfl [vmem:[#allocation1 + $0x8] sm:$0xff pattern:$0x75316420]
        %v1888 = vld.sshfl [vmem:[#allocation1 + $0x10] sm:$0xff pattern:$0x75316420]
        %1889 = vrot.lane.b32.xlu0 %v1886, 112
        %v1890 = vpop.permute.xlu0 %1889
        %1891 = vrot.lane.b32.xlu0 %v1887, 112
        %v1892 = vpop.permute.xlu0 %1891
        %1893 = vrot.lane.b32.xlu0 %v1888, 112
        %v1894 = vpop.permute.xlu0 %1893
        %v1895 = vsel %vm1729, %v1890, %v1892
        %v1896 = vsel %vm1729, %v1892, %v1894
        %1899 = vrot.lane.b32.xlu0 %v1895, 126
        %v1900 = vpop.permute.xlu0 %1899
        %1901 = vrot.lane.b32.xlu0 %v1896, 126
        %v1902 = vpop.permute.xlu0 %1901
        %v1903 = vsel %vm1029, %v1900, %v1902
        %v1904 = vsel %vm1029, %v1902, %v1900
        %v1905 = vmul.f32 %v1903, %v1882
        %v1906 = vmul.f32 %v1904, %v1882
        %v1907 = vmul.f32 %v1905, %v1035
        %v1908 = vmul.f32 %v1906, %v1036
        %v1909 = vadd.f32 %v1876, %v1907
        %v1910 = vadd.f32 %v1877, %v1908
        %s1911 = ssub.f32 %s300, %s349
        %v1912 = vstv %s1911
        %v1913 = vmul.f32 %v1912, %v796
        %v1914 = vstv %s349
        %v1915 = vadd.f32 %v1914, %v1913
        %1916 = vst [vmem:[#allocation1] ss:$2 sm:$0xff] %v1708
        %s1917 = scalar_lea.vmem [#allocation1], 16
        %1918 = vst [vmem:[%s1917] ss:$2 sm:$0xff] %v1709
        %v1919 = vld.sshfl [vmem:[#allocation1] sm:$0xff pattern:$0x75316420]
        %v1920 = vld.sshfl [vmem:[#allocation1 + $0x8] sm:$0xff pattern:$0x75316420]
        %v1921 = vld.sshfl [vmem:[#allocation1 + $0x10] sm:$0xff pattern:$0x75316420]
        %1922 = vrot.lane.b32.xlu0 %v1919, 112
        %v1923 = vpop.permute.xlu0 %1922
        %1924 = vrot.lane.b32.xlu0 %v1920, 112
        %v1925 = vpop.permute.xlu0 %1924
        %1926 = vrot.lane.b32.xlu0 %v1921, 112
        %v1927 = vpop.permute.xlu0 %1926
        %v1928 = vsel %vm1729, %v1923, %v1925
        %v1929 = vsel %vm1729, %v1925, %v1927
        %1932 = vrot.lane.b32.xlu0 %v1928, 125
        %v1933 = vpop.permute.xlu0 %1932
        %1934 = vrot.lane.b32.xlu0 %v1929, 125
        %v1935 = vpop.permute.xlu0 %1934
        %v1936 = vsel %vm1068, %v1933, %v1935
        %v1937 = vsel %vm1068, %v1935, %v1933
        %v1938 = vmul.f32 %v1936, %v1915
        %v1939 = vmul.f32 %v1937, %v1915
        %v1940 = vmul.f32 %v1938, %v1074
        %v1941 = vmul.f32 %v1939, %v1075
        %v1942 = vadd.f32 %v1909, %v1940
        %v1943 = vadd.f32 %v1910, %v1941
        %v1944 = vld [vmem:[#allocation2 + $0x4] sm:$0xff]
        %v1945 = vld [vmem:[#allocation2 + $0xc] sm:$0xf]
        %s1946 = ssub.f32 %s301, %s350
        %v1947 = vstv %s1946
        %v1948 = vmul.f32 %v1947, %v796
        %v1949 = vstv %s350
        %v1950 = vadd.f32 %v1949, %v1948
        %1953 = vst [vmem:[#allocation1] ss:$2 sm:$0xff] %v1944
        %s1954 = scalar_lea.vmem [#allocation1], 16
        %1955 = vst [vmem:[%s1954] ss:$2 sm:$0xff] %v1945
        %v1956 = vld.sshfl [vmem:[#allocation1] sm:$0xff pattern:$0x75316420]
        %v1957 = vld.sshfl [vmem:[#allocation1 + $0x8] sm:$0xff pattern:$0x75316420]
        %v1958 = vld.sshfl [vmem:[#allocation1 + $0x10] sm:$0xff pattern:$0x75316420]
        %1959 = vrot.lane.b32.xlu0 %v1956, 96
        %v1960 = vpop.permute.xlu0 %1959
        %1961 = vrot.lane.b32.xlu0 %v1957, 96
        %v1962 = vpop.permute.xlu0 %1961
        %1963 = vrot.lane.b32.xlu0 %v1958, 96
        %v1964 = vpop.permute.xlu0 %1963
        %vm1965 = vcmask 785408
        %v1966 = vsel %vm1965, %v1960, %v1962
        %v1967 = vsel %vm1965, %v1962, %v1964
        %1970 = vrot.lane.b32.xlu0 %v1966, 3
        %v1971 = vpop.permute.xlu0 %1970
        %1972 = vrot.lane.b32.xlu0 %v1967, 3
        %v1973 = vpop.permute.xlu0 %1972
        %v1974 = vsel %vm840, %v1971, %v1973
        %v1975 = vsel %vm840, %v1973, %v1971
        %v1976 = vmul.f32 %v1975, %v1950
        %v1977 = vmul.f32 %v1974, %v1950
        %v1978 = vmul.f32 %v1976, %v846
        %v1979 = vmul.f32 %v1977, %v847
        %v1980 = vadd.f32 %v1942, %v1978
        %v1981 = vadd.f32 %v1943, %v1979
        %s1982 = ssub.f32 %s302, %s351
        %v1983 = vstv %s1982
        %v1984 = vmul.f32 %v1983, %v796
        %v1985 = vstv %s351
        %v1986 = vadd.f32 %v1985, %v1984
        %1987 = vst [vmem:[#allocation1] ss:$2 sm:$0xff] %v1944
        %s1988 = scalar_lea.vmem [#allocation1], 16
        %1989 = vst [vmem:[%s1988] ss:$2 sm:$0xff] %v1945
        %v1990 = vld.sshfl [vmem:[#allocation1] sm:$0xff pattern:$0x75316420]
        %v1991 = vld.sshfl [vmem:[#allocation1 + $0x8] sm:$0xff pattern:$0x75316420]
        %v1992 = vld.sshfl [vmem:[#allocation1 + $0x10] sm:$0xff pattern:$0x75316420]
        %1993 = vrot.lane.b32.xlu0 %v1990, 96
        %v1994 = vpop.permute.xlu0 %1993
        %1995 = vrot.lane.b32.xlu0 %v1991, 96
        %v1996 = vpop.permute.xlu0 %1995
        %1997 = vrot.lane.b32.xlu0 %v1992, 96
        %v1998 = vpop.permute.xlu0 %1997
        %v1999 = vsel %vm1965, %v1994, %v1996
        %v2000 = vsel %vm1965, %v1996, %v1998
        %2003 = vrot.lane.b32.xlu0 %v1999, 2
        %v2004 = vpop.permute.xlu0 %2003
        %2005 = vrot.lane.b32.xlu0 %v2000, 2
        %v2006 = vpop.permute.xlu0 %2005
        %v2007 = vsel %vm879, %v2004, %v2006
        %v2008 = vsel %vm879, %v2006, %v2004
        %v2009 = vmul.f32 %v2008, %v1986
        %v2010 = vmul.f32 %v2007, %v1986
        %v2011 = vmul.f32 %v2009, %v885
        %v2012 = vmul.f32 %v2010, %v886
        %v2013 = vadd.f32 %v1980, %v2011
        %v2014 = vadd.f32 %v1981, %v2012
        %s2015 = ssub.f32 %s303, %s352
        %v2016 = vstv %s2015
        %v2017 = vmul.f32 %v2016, %v796
        %v2018 = vstv %s352
        %v2019 = vadd.f32 %v2018, %v2017
        %2020 = vst [vmem:[#allocation1] ss:$2 sm:$0xff] %v1944
        %s2021 = scalar_lea.vmem [#allocation1], 16
        %2022 = vst [vmem:[%s2021] ss:$2 sm:$0xff] %v1945
        %v2023 = vld.sshfl [vmem:[#allocation1] sm:$0xff pattern:$0x75316420]
        %v2024 = vld.sshfl [vmem:[#allocation1 + $0x8] sm:$0xff pattern:$0x75316420]
        %v2025 = vld.sshfl [vmem:[#allocation1 + $0x10] sm:$0xff pattern:$0x75316420]
        %2026 = vrot.lane.b32.xlu0 %v2023, 96
        %v2027 = vpop.permute.xlu0 %2026
        %2028 = vrot.lane.b32.xlu0 %v2024, 96
        %v2029 = vpop.permute.xlu0 %2028
        %2030 = vrot.lane.b32.xlu0 %v2025, 96
        %v2031 = vpop.permute.xlu0 %2030
        %v2032 = vsel %vm1965, %v2027, %v2029
        %v2033 = vsel %vm1965, %v2029, %v2031
        %2036 = vrot.lane.b32.xlu0 %v2032, 1
        %v2037 = vpop.permute.xlu0 %2036
        %2038 = vrot.lane.b32.xlu0 %v2033, 1
        %v2039 = vpop.permute.xlu0 %2038
        %v2040 = vsel %vm918, %v2037, %v2039
        %v2041 = vsel %vm918, %v2039, %v2037
        %v2042 = vmul.f32 %v2041, %v2019
        %v2043 = vmul.f32 %v2040, %v2019
        %v2044 = vmul.f32 %v2042, %v924
        %v2045 = vmul.f32 %v2043, %v925
        %v2046 = vadd.f32 %v2013, %v2044
        %v2047 = vadd.f32 %v2014, %v2045
        %s2048 = ssub.f32 %s304, %s353
        %v2049 = vstv %s2048
        %v2050 = vmul.f32 %v2049, %v796
        %v2051 = vstv %s353
        %v2052 = vadd.f32 %v2051, %v2050
        %v2055 = vunpack.c.l.s4 839922192
        %v2056 = vunpack.c.0.s8 %v2055
        %v2057 = vperm.slane %v2052, %v2056
        %v2059 = vmul.f32 %v1944, %v2057
        %v2060 = vmul.f32 %v1945, %v2057
        %2063 = vst [vmem:[#allocation1] ss:$2 sm:$0xff] %v2059
        %s2064 = scalar_lea.vmem [#allocation1], 16
        %2065 = vst [vmem:[%s2064] ss:$2 sm:$0xff] %v2060
        %v2066 = vld.sshfl [vmem:[#allocation1] sm:$0xff pattern:$0x75316420]
        %v2067 = vld.sshfl [vmem:[#allocation1 + $0x8] sm:$0xff pattern:$0x75316420]
        %v2068 = vld.sshfl [vmem:[#allocation1 + $0x10] sm:$0xff pattern:$0x75316420]
        %2069 = vrot.lane.b32.xlu0 %v2066, 96
        %v2070 = vpop.permute.xlu0 %2069
        %2071 = vrot.lane.b32.xlu0 %v2067, 96
        %v2072 = vpop.permute.xlu0 %2071
        %2073 = vrot.lane.b32.xlu0 %v2068, 96
        %v2074 = vpop.permute.xlu0 %2073
        %v2075 = vsel %vm1965, %v2070, %v2072
        %v2076 = vsel %vm1965, %v2072, %v2074
        %v2079 = vadd.f32 %v2046, %v2075
        %v2080 = vadd.f32 %v2047, %v2076
        %s2081 = ssub.f32 %s305, %s354
        %v2082 = vstv %s2081
        %v2083 = vmul.f32 %v2082, %v796
        %v2084 = vstv %s354
        %v2085 = vadd.f32 %v2084, %v2083
        %2086 = vst [vmem:[#allocation1] ss:$2 sm:$0xff] %v1944
        %s2087 = scalar_lea.vmem [#allocation1], 16
        %2088 = vst [vmem:[%s2087] ss:$2 sm:$0xff] %v1945
        %v2089 = vld.sshfl [vmem:[#allocation1] sm:$0xff pattern:$0x75316420]
        %v2090 = vld.sshfl [vmem:[#allocation1 + $0x8] sm:$0xff pattern:$0x75316420]
        %v2091 = vld.sshfl [vmem:[#allocation1 + $0x10] sm:$0xff pattern:$0x75316420]
        %2092 = vrot.lane.b32.xlu0 %v2089, 96
        %v2093 = vpop.permute.xlu0 %2092
        %2094 = vrot.lane.b32.xlu0 %v2090, 96
        %v2095 = vpop.permute.xlu0 %2094
        %2096 = vrot.lane.b32.xlu0 %v2091, 96
        %v2097 = vpop.permute.xlu0 %2096
        %v2098 = vsel %vm1965, %v2093, %v2095
        %v2099 = vsel %vm1965, %v2095, %v2097
        %2102 = vrot.lane.b32.xlu0 %v2098, 127
        %v2103 = vpop.permute.xlu0 %2102
        %2104 = vrot.lane.b32.xlu0 %v2099, 127
        %v2105 = vpop.permute.xlu0 %2104
        %v2106 = vsel %vm990, %v2103, %v2105
        %v2107 = vsel %vm990, %v2105, %v2103
        %v2108 = vmul.f32 %v2106, %v2085
        %v2109 = vmul.f32 %v2107, %v2085
        %v2110 = vmul.f32 %v2108, %v996
        %v2111 = vmul.f32 %v2109, %v997
        %v2112 = vadd.f32 %v2079, %v2110
        %v2113 = vadd.f32 %v2080, %v2111
        %s2114 = ssub.f32 %s306, %s355
        %v2115 = vstv %s2114
        %v2116 = vmul.f32 %v2115, %v796
        %v2117 = vstv %s355
        %v2118 = vadd.f32 %v2117, %v2116
        %2119 = vst [vmem:[#allocation1] ss:$2 sm:$0xff] %v1944
        %s2120 = scalar_lea.vmem [#allocation1], 16
        %2121 = vst [vmem:[%s2120] ss:$2 sm:$0xff] %v1945
        %v2122 = vld.sshfl [vmem:[#allocation1] sm:$0xff pattern:$0x75316420]
        %v2123 = vld.sshfl [vmem:[#allocation1 + $0x8] sm:$0xff pattern:$0x75316420]
        %v2124 = vld.sshfl [vmem:[#allocation1 + $0x10] sm:$0xff pattern:$0x75316420]
        %2125 = vrot.lane.b32.xlu0 %v2122, 96
        %v2126 = vpop.permute.xlu0 %2125
        %2127 = vrot.lane.b32.xlu0 %v2123, 96
        %v2128 = vpop.permute.xlu0 %2127
        %2129 = vrot.lane.b32.xlu0 %v2124, 96
        %v2130 = vpop.permute.xlu0 %2129
        %v2131 = vsel %vm1965, %v2126, %v2128
        %v2132 = vsel %vm1965, %v2128, %v2130
        %2135 = vrot.lane.b32.xlu0 %v2131, 126
        %v2136 = vpop.permute.xlu0 %2135
        %2137 = vrot.lane.b32.xlu0 %v2132, 126
        %v2138 = vpop.permute.xlu0 %2137
        %v2139 = vsel %vm1029, %v2136, %v2138
        %v2140 = vsel %vm1029, %v2138, %v2136
        %v2141 = vmul.f32 %v2139, %v2118
        %v2142 = vmul.f32 %v2140, %v2118
        %v2143 = vmul.f32 %v2141, %v1035
        %v2144 = vmul.f32 %v2142, %v1036
        %v2145 = vadd.f32 %v2112, %v2143
        %v2146 = vadd.f32 %v2113, %v2144
        %s2147 = ssub.f32 %s307, %s356
        %v2148 = vstv %s2147
        %v2149 = vmul.f32 %v2148, %v796
        %v2150 = vstv %s356
        %v2151 = vadd.f32 %v2150, %v2149
        %2152 = vst [vmem:[#allocation1] ss:$2 sm:$0xff] %v1944
        %s2153 = scalar_lea.vmem [#allocation1], 16
        %2154 = vst [vmem:[%s2153] ss:$2 sm:$0xff] %v1945
        %v2155 = vld.sshfl [vmem:[#allocation1] sm:$0xff pattern:$0x75316420]
        %v2156 = vld.sshfl [vmem:[#allocation1 + $0x8] sm:$0xff pattern:$0x75316420]
        %v2157 = vld.sshfl [vmem:[#allocation1 + $0x10] sm:$0xff pattern:$0x75316420]
        %2158 = vrot.lane.b32.xlu0 %v2155, 96
        %v2159 = vpop.permute.xlu0 %2158
        %2160 = vrot.lane.b32.xlu0 %v2156, 96
        %v2161 = vpop.permute.xlu0 %2160
        %2162 = vrot.lane.b32.xlu0 %v2157, 96
        %v2163 = vpop.permute.xlu0 %2162
        %v2164 = vsel %vm1965, %v2159, %v2161
        %v2165 = vsel %vm1965, %v2161, %v2163
        %2168 = vrot.lane.b32.xlu0 %v2164, 125
        %v2169 = vpop.permute.xlu0 %2168
        %2170 = vrot.lane.b32.xlu0 %v2165, 125
        %v2171 = vpop.permute.xlu0 %2170
        %v2172 = vsel %vm1068, %v2169, %v2171
        %v2173 = vsel %vm1068, %v2171, %v2169
        %v2174 = vmul.f32 %v2172, %v2151
        %v2175 = vmul.f32 %v2173, %v2151
        %v2176 = vmul.f32 %v2174, %v1074
        %v2177 = vmul.f32 %v2175, %v1075
        %v2178 = vadd.f32 %v2145, %v2176
        %v2179 = vadd.f32 %v2146, %v2177
        %v2180 = vld [vmem:[#allocation2 + $0x4] sm:$0xff]
        %v2181 = vld [vmem:[#allocation2 + $0xc] sm:$0xf]
        %s2182 = ssub.f32 %s308, %s357
        %v2183 = vstv %s2182
        %v2184 = vmul.f32 %v2183, %v796
        %v2185 = vstv %s357
        %v2186 = vadd.f32 %v2185, %v2184
        %2189 = vst [vmem:[#allocation1] ss:$2 sm:$0xff] %v2180
        %s2190 = scalar_lea.vmem [#allocation1], 16
        %2191 = vst [vmem:[%s2190] ss:$2 sm:$0xff] %v2181
        %v2192 = vld.sshfl [vmem:[#allocation1] sm:$0xff pattern:$0x75316420]
        %v2193 = vld.sshfl [vmem:[#allocation1 + $0x8] sm:$0xff pattern:$0x75316420]
        %v2194 = vld.sshfl [vmem:[#allocation1 + $0x10] sm:$0xff pattern:$0x75316420]
        %2195 = vrot.lane.b32.xlu0 %v2192, 80
        %v2196 = vpop.permute.xlu0 %2195
        %2197 = vrot.lane.b32.xlu0 %v2193, 80
        %v2198 = vpop.permute.xlu0 %2197
        %2199 = vrot.lane.b32.xlu0 %v2194, 80
        %v2200 = vpop.permute.xlu0 %2199
        %vm2201 = vcmask 654336
        %v2202 = vsel %vm2201, %v2196, %v2198
        %v2203 = vsel %vm2201, %v2198, %v2200
        %2206 = vrot.lane.b32.xlu0 %v2202, 3
        %v2207 = vpop.permute.xlu0 %2206
        %2208 = vrot.lane.b32.xlu0 %v2203, 3
        %v2209 = vpop.permute.xlu0 %2208
        %v2210 = vsel %vm840, %v2207, %v2209
        %v2211 = vsel %vm840, %v2209, %v2207
        %v2212 = vmul.f32 %v2211, %v2186
        %v2213 = vmul.f32 %v2210, %v2186
        %v2214 = vmul.f32 %v2212, %v846
        %v2215 = vmul.f32 %v2213, %v847
        %v2216 = vadd.f32 %v2178, %v2214
        %v2217 = vadd.f32 %v2179, %v2215
        %s2218 = ssub.f32 %s309, %s358
        %v2219 = vstv %s2218
        %v2220 = vmul.f32 %v2219, %v796
        %v2221 = vstv %s358
        %v2222 = vadd.f32 %v2221, %v2220
        %2223 = vst [vmem:[#allocation1] ss:$2 sm:$0xff] %v2180
        %s2224 = scalar_lea.vmem [#allocation1], 16
        %2225 = vst [vmem:[%s2224] ss:$2 sm:$0xff] %v2181
        %v2226 = vld.sshfl [vmem:[#allocation1] sm:$0xff pattern:$0x75316420]
        %v2227 = vld.sshfl [vmem:[#allocation1 + $0x8] sm:$0xff pattern:$0x75316420]
        %v2228 = vld.sshfl [vmem:[#allocation1 + $0x10] sm:$0xff pattern:$0x75316420]
        %2229 = vrot.lane.b32.xlu0 %v2226, 80
        %v2230 = vpop.permute.xlu0 %2229
        %2231 = vrot.lane.b32.xlu0 %v2227, 80
        %v2232 = vpop.permute.xlu0 %2231
        %2233 = vrot.lane.b32.xlu0 %v2228, 80
        %v2234 = vpop.permute.xlu0 %2233
        %v2235 = vsel %vm2201, %v2230, %v2232
        %v2236 = vsel %vm2201, %v2232, %v2234
        %2239 = vrot.lane.b32.xlu0 %v2235, 2
        %v2240 = vpop.permute.xlu0 %2239
        %2241 = vrot.lane.b32.xlu0 %v2236, 2
        %v2242 = vpop.permute.xlu0 %2241
        %v2243 = vsel %vm879, %v2240, %v2242
        %v2244 = vsel %vm879, %v2242, %v2240
        %v2245 = vmul.f32 %v2244, %v2222
        %v2246 = vmul.f32 %v2243, %v2222
        %v2247 = vmul.f32 %v2245, %v885
        %v2248 = vmul.f32 %v2246, %v886
        %v2249 = vadd.f32 %v2216, %v2247
        %v2250 = vadd.f32 %v2217, %v2248
        %s2251 = ssub.f32 %s310, %s359
        %v2252 = vstv %s2251
        %v2253 = vmul.f32 %v2252, %v796
        %v2254 = vstv %s359
        %v2255 = vadd.f32 %v2254, %v2253
        %2256 = vst [vmem:[#allocation1] ss:$2 sm:$0xff] %v2180
        %s2257 = scalar_lea.vmem [#allocation1], 16
        %2258 = vst [vmem:[%s2257] ss:$2 sm:$0xff] %v2181
        %v2259 = vld.sshfl [vmem:[#allocation1] sm:$0xff pattern:$0x75316420]
        %v2260 = vld.sshfl [vmem:[#allocation1 + $0x8] sm:$0xff pattern:$0x75316420]
        %v2261 = vld.sshfl [vmem:[#allocation1 + $0x10] sm:$0xff pattern:$0x75316420]
        %2262 = vrot.lane.b32.xlu0 %v2259, 80
        %v2263 = vpop.permute.xlu0 %2262
        %2264 = vrot.lane.b32.xlu0 %v2260, 80
        %v2265 = vpop.permute.xlu0 %2264
        %2266 = vrot.lane.b32.xlu0 %v2261, 80
        %v2267 = vpop.permute.xlu0 %2266
        %v2268 = vsel %vm2201, %v2263, %v2265
        %v2269 = vsel %vm2201, %v2265, %v2267
        %2272 = vrot.lane.b32.xlu0 %v2268, 1
        %v2273 = vpop.permute.xlu0 %2272
        %2274 = vrot.lane.b32.xlu0 %v2269, 1
        %v2275 = vpop.permute.xlu0 %2274
        %v2276 = vsel %vm918, %v2273, %v2275
        %v2277 = vsel %vm918, %v2275, %v2273
        %v2278 = vmul.f32 %v2277, %v2255
        %v2279 = vmul.f32 %v2276, %v2255
        %v2280 = vmul.f32 %v2278, %v924
        %v2281 = vmul.f32 %v2279, %v925
        %v2282 = vadd.f32 %v2249, %v2280
        %v2283 = vadd.f32 %v2250, %v2281
        %s2284 = ssub.f32 %s311, %s360
        %v2285 = vstv %s2284
        %v2286 = vmul.f32 %v2285, %v796
        %v2287 = vstv %s360
        %v2288 = vadd.f32 %v2287, %v2286
        %v2291 = vunpack.c.l.s4 839922192
        %v2292 = vunpack.c.0.s8 %v2291
        %v2293 = vperm.slane %v2288, %v2292
        %v2295 = vmul.f32 %v2180, %v2293
        %v2296 = vmul.f32 %v2181, %v2293
        %2299 = vst [vmem:[#allocation1] ss:$2 sm:$0xff] %v2295
        %s2300 = scalar_lea.vmem [#allocation1], 16
        %2301 = vst [vmem:[%s2300] ss:$2 sm:$0xff] %v2296
        %v2302 = vld.sshfl [vmem:[#allocation1] sm:$0xff pattern:$0x75316420]
        %v2303 = vld.sshfl [vmem:[#allocation1 + $0x8] sm:$0xff pattern:$0x75316420]
        %v2304 = vld.sshfl [vmem:[#allocation1 + $0x10] sm:$0xff pattern:$0x75316420]
        %2305 = vrot.lane.b32.xlu0 %v2302, 80
        %v2306 = vpop.permute.xlu0 %2305
        %2307 = vrot.lane.b32.xlu0 %v2303, 80
        %v2308 = vpop.permute.xlu0 %2307
        %2309 = vrot.lane.b32.xlu0 %v2304, 80
        %v2310 = vpop.permute.xlu0 %2309
        %v2311 = vsel %vm2201, %v2306, %v2308
        %v2312 = vsel %vm2201, %v2308, %v2310
        %v2315 = vadd.f32 %v2282, %v2311
        %v2316 = vadd.f32 %v2283, %v2312
        %s2317 = ssub.f32 %s312, %s361
        %v2318 = vstv %s2317
        %v2319 = vmul.f32 %v2318, %v796
        %v2320 = vstv %s361
        %v2321 = vadd.f32 %v2320, %v2319
        %2322 = vst [vmem:[#allocation1] ss:$2 sm:$0xff] %v2180
        %s2323 = scalar_lea.vmem [#allocation1], 16
        %2324 = vst [vmem:[%s2323] ss:$2 sm:$0xff] %v2181
        %v2325 = vld.sshfl [vmem:[#allocation1] sm:$0xff pattern:$0x75316420]
        %v2326 = vld.sshfl [vmem:[#allocation1 + $0x8] sm:$0xff pattern:$0x75316420]
        %v2327 = vld.sshfl [vmem:[#allocation1 + $0x10] sm:$0xff pattern:$0x75316420]
        %2328 = vrot.lane.b32.xlu0 %v2325, 80
        %v2329 = vpop.permute.xlu0 %2328
        %2330 = vrot.lane.b32.xlu0 %v2326, 80
        %v2331 = vpop.permute.xlu0 %2330
        %2332 = vrot.lane.b32.xlu0 %v2327, 80
        %v2333 = vpop.permute.xlu0 %2332
        %v2334 = vsel %vm2201, %v2329, %v2331
        %v2335 = vsel %vm2201, %v2331, %v2333
        %2338 = vrot.lane.b32.xlu0 %v2334, 127
        %v2339 = vpop.permute.xlu0 %2338
        %2340 = vrot.lane.b32.xlu0 %v2335, 127
        %v2341 = vpop.permute.xlu0 %2340
        %v2342 = vsel %vm990, %v2339, %v2341
        %v2343 = vsel %vm990, %v2341, %v2339
        %v2344 = vmul.f32 %v2342, %v2321
        %v2345 = vmul.f32 %v2343, %v2321
        %v2346 = vmul.f32 %v2344, %v996
        %v2347 = vmul.f32 %v2345, %v997
        %v2348 = vadd.f32 %v2315, %v2346
        %v2349 = vadd.f32 %v2316, %v2347
        %s2350 = ssub.f32 %s313, %s362
        %v2351 = vstv %s2350
        %v2352 = vmul.f32 %v2351, %v796
        %v2353 = vstv %s362
        %v2354 = vadd.f32 %v2353, %v2352
        %2355 = vst [vmem:[#allocation1] ss:$2 sm:$0xff] %v2180
        %s2356 = scalar_lea.vmem [#allocation1], 16
        %2357 = vst [vmem:[%s2356] ss:$2 sm:$0xff] %v2181
        %v2358 = vld.sshfl [vmem:[#allocation1] sm:$0xff pattern:$0x75316420]
        %v2359 = vld.sshfl [vmem:[#allocation1 + $0x8] sm:$0xff pattern:$0x75316420]
        %v2360 = vld.sshfl [vmem:[#allocation1 + $0x10] sm:$0xff pattern:$0x75316420]
        %2361 = vrot.lane.b32.xlu0 %v2358, 80
        %v2362 = vpop.permute.xlu0 %2361
        %2363 = vrot.lane.b32.xlu0 %v2359, 80
        %v2364 = vpop.permute.xlu0 %2363
        %2365 = vrot.lane.b32.xlu0 %v2360, 80
        %v2366 = vpop.permute.xlu0 %2365
        %v2367 = vsel %vm2201, %v2362, %v2364
        %v2368 = vsel %vm2201, %v2364, %v2366
        %2371 = vrot.lane.b32.xlu0 %v2367, 126
        %v2372 = vpop.permute.xlu0 %2371
        %2373 = vrot.lane.b32.xlu0 %v2368, 126
        %v2374 = vpop.permute.xlu0 %2373
        %v2375 = vsel %vm1029, %v2372, %v2374
        %v2376 = vsel %vm1029, %v2374, %v2372
        %v2377 = vmul.f32 %v2375, %v2354
        %v2378 = vmul.f32 %v2376, %v2354
        %v2379 = vmul.f32 %v2377, %v1035
        %v2380 = vmul.f32 %v2378, %v1036
        %v2381 = vadd.f32 %v2348, %v2379
        %v2382 = vadd.f32 %v2349, %v2380
        %s2383 = ssub.f32 %s314, %s363
        %v2384 = vstv %s2383
        %v2385 = vmul.f32 %v2384, %v796
        %v2386 = vstv %s363
        %v2387 = vadd.f32 %v2386, %v2385
        %2388 = vst [vmem:[#allocation1] ss:$2 sm:$0xff] %v2180
        %s2389 = scalar_lea.vmem [#allocation1], 16
        %2390 = vst [vmem:[%s2389] ss:$2 sm:$0xff] %v2181
        %v2391 = vld.sshfl [vmem:[#allocation1] sm:$0xff pattern:$0x75316420]
        %v2392 = vld.sshfl [vmem:[#allocation1 + $0x8] sm:$0xff pattern:$0x75316420]
        %v2393 = vld.sshfl [vmem:[#allocation1 + $0x10] sm:$0xff pattern:$0x75316420]
        %2394 = vrot.lane.b32.xlu0 %v2391, 80
        %v2395 = vpop.permute.xlu0 %2394
        %2396 = vrot.lane.b32.xlu0 %v2392, 80
        %v2397 = vpop.permute.xlu0 %2396
        %2398 = vrot.lane.b32.xlu0 %v2393, 80
        %v2399 = vpop.permute.xlu0 %2398
        %v2400 = vsel %vm2201, %v2395, %v2397
        %v2401 = vsel %vm2201, %v2397, %v2399
        %2404 = vrot.lane.b32.xlu0 %v2400, 125
        %v2405 = vpop.permute.xlu0 %2404
        %2406 = vrot.lane.b32.xlu0 %v2401, 125
        %v2407 = vpop.permute.xlu0 %2406
        %v2408 = vsel %vm1068, %v2405, %v2407
        %v2409 = vsel %vm1068, %v2407, %v2405
        %v2410 = vmul.f32 %v2408, %v2387
        %v2411 = vmul.f32 %v2409, %v2387
        %v2412 = vmul.f32 %v2410, %v1074
        %v2413 = vmul.f32 %v2411, %v1075
        %v2414 = vadd.f32 %v2381, %v2412
        %v2415 = vadd.f32 %v2382, %v2413
        %v2418 = vrot.slane %v2414, 2
        %v2419 = vrot.slane %v2415, 2
        %v2422 = vadd.f32 %v2414, %v2418
        %v2423 = vadd.f32 %v2415, %v2419
        %v2424 = vmul.f32 %v2422, 0.999995
        %v2425 = vmul.f32 %v2423, 0.999995
        %v2426 = vmax.f32 %v2424, 0.0
        %v2427 = vmax.f32 %v2425, 0.0
        %v2428 = vxor.u32 %v2426, 2147483648
        %v2429 = vxor.u32 %v2427, 2147483648
        %v2430 = vmul.f32 %v2428, 1.442695
        %v2431 = vpow.pop %v2430
        %v2432 = vmul.f32 %v2429, 1.442695
        %v2433 = vpow.pop %v2432
        %v2434 = vadd.f32 %v2431, 1.0
        %v2435 = vadd.f32 %v2433, 1.0
        %v2436 = vrcp.pop %v2434
        %v2437 = vmul.f32 %v2434, %v2436
        %v2438 = vsub.f32 1.0, %v2437
        %v2439 = vmul.f32 %v2436, %v2438
        %v2440 = vadd.f32 %v2436, %v2439
        %vm2441 = vweird.f32 %v2434
        %vm2442 = vweird.f32 %v2436
        %vm2443 = vmor %vm2441, %vm2442
        %v2444 = vsel %vm2443, %v2436, %v2440
        %v2445 = vand.u32 2147483647, %v2434
        %vm2446 = vcmp.eq.f32.partialorder %v2445, 8.507059e+37
        %v2447 = vand.u32 %v2434, 2147483648
        %v2448 = vor.u32 1.1754944e-38, %v2447
        %v2449 = vsel %vm2446, %v2448, %v2444
        %v2450 = vmul.f32 1.0, %v2449
        %v2451 = vrcp.pop %v2435
        %v2452 = vmul.f32 %v2435, %v2451
        %v2453 = vsub.f32 1.0, %v2452
        %v2454 = vmul.f32 %v2451, %v2453
        %v2455 = vadd.f32 %v2451, %v2454
        %vm2456 = vweird.f32 %v2435
        %vm2457 = vweird.f32 %v2451
        %vm2458 = vmor %vm2456, %vm2457
        %v2459 = vsel %vm2458, %v2451, %v2455
        %v2460 = vand.u32 2147483647, %v2435
        %vm2461 = vcmp.eq.f32.partialorder %v2460, 8.507059e+37
        %v2462 = vand.u32 %v2435, 2147483648
        %v2463 = vor.u32 1.1754944e-38, %v2462
        %v2464 = vsel %vm2461, %v2463, %v2459
        %v2465 = vmul.f32 1.0, %v2464
        %v2466 = vperm.slane %v2450, 0
        %v2467 = vperm.slane %v2465, 0
        %v2468 = vmul.f32 %v444, %v2466
        %v2469 = vmul.f32 %v444, %v2467
        %v2470 = vadd.f32 %v2468, 1.0
        %v2471 = vadd.f32 %v2469, 1.0
        %v2472 = vperm.slane %v2450, 1
        %v2473 = vperm.slane %v2465, 1
        %v2474 = vmul.f32 %v445, %v2472
        %v2475 = vmul.f32 %v445, %v2473
        %v2476 = vadd.f32 %v2470, %v2474
        %v2477 = vadd.f32 %v2471, %v2475
        %v2478 = vmul.f32 %v261, %v2476
        %v2479 = vmul.f32 %v262, %v2477
        %v2480 = vmax.f32 %v2478, 0.0
        %v2481 = vmax.f32 %v2479, 0.0
        %2482 = vst [vmem:[%s260] sm:$0xff] %v2480
        %2483 = vst [vmem:[%s260 + $0x8] sm:$0xff] %v2481
        %s2484 = sand.u32 %s118, 1
        %s2485 = scalar_lea.sflag [#allocation5], %s2484
        %s2486 = sand.u32 %s118, 1
        %s2487 = smul.addr %s2486, 16
        %s2488 = scalar_lea.vmem [#allocation11], %s2487
        // Predicated region
        $region53: #{tpu_custom_call.1} parent=35 // pred_check
          %p2489 = pneg %p128
        $region54: #{tpu_custom_call.1} parent=35 // pred_check_branch
          %2491 = sbr.rel (%p2489) target = $region56
        $region55: #{tpu_custom_call.1} parent=35 // pred_region
          %2493 = vsyncadd %s2485, 0
          %s2494 = smul.addr %s21, 2
          %s2495 = smul.addr %s2494, 8
          %s2496 = scalar_lea.hbm %s4, %s2495
          %s2498 = sshll.u32 %s2488, 4
          %s2499 = int_to_ptr.vmem [resolvable:$true] %s2498
          %s2500 = sshll.u32 %s2496, 4
          %s2501 = int_to_ptr.hbm [resolvable:$true] %s2500
          %2503 = dma.vmem_to_hbm [thread:$0]  %s2499, 256, %s2501, %s2485
        $region56: #{tpu_custom_call.1} parent=35 // pred_fallthru
          _
      $region36: #{tpu_custom_call.1} parent=5 // pred_fallthru
        _
      %p2504 = scmp.le.s32.totalorder 2, %s16
      // Predicated region
      $region57: #{tpu_custom_call.1} parent=5 // pred_check
        %p2505 = pneg %p2504
      $region58: #{tpu_custom_call.1} parent=5 // pred_check_branch
        %2507 = sbr.rel (%p2505) target = $region60
      $region59: #{tpu_custom_call.1} parent=5 // pred_region
        %s2508 = ssub.s32 %s16, 2
        // Predicated region
        $region61: #{tpu_custom_call.1} parent=59 // pred_check
          %p2509 = pneg %p134
        $region62: #{tpu_custom_call.1} parent=59 // pred_check_branch
          %2511 = sbr.rel (%p2509) target = $region64
        $region63: #{tpu_custom_call.1} parent=59 // pred_region
          %s2512 = sand.u32 %s119, 1
          %s2513 = scalar_lea.sflag [#allocation5], %s2512
          %s2514 = sand.u32 %s119, 1
          %s2515 = smul.addr %s2514, 16
          %s2516 = scalar_lea.vmem [#allocation11], %s2515
          %2518 = dma.done %s2513, 256
        $region64: #{tpu_custom_call.1} parent=59 // pred_fallthru
          _
      $region60: #{tpu_custom_call.1} parent=5 // pred_fallthru
        _
    $region6: #{tpu_custom_call.1} parent=1 // loop_footer
      %s20 = sadd.s32 1, %s16
    $region7: #{tpu_custom_call.1} parent=1 // loop_footer_branch
      %15 = sbr.rel target = $region3
    $region8: #{tpu_custom_call.1} parent=1 // loop_exit
      _
    %2519 = vsyncpa [#allocation4], 1
    %s2520 = scalar_lea.sflag [#allocation4], 1
    %2521 = vsyncpa %s2520, 1
    %2522 = vsyncpa [#allocation9], 1
    %2523 = vsyncpa [#allocation5], 1
    %s2524 = scalar_lea.sflag [#allocation5], 1
    %2525 = vsyncpa %s2524, 1
    %2526 = vsyncpa [#allocation6], 1
    %s2527 = scalar_lea.sflag [#allocation6], 1
    %2528 = vsyncpa %s2527, 1

</llo_original>
